<compile_context>
chip_gen: v5e
topology: v5e:2x2
jax: 0.10.0
libtpu: 0.0.40
codegen_flags: <defaults>
</compile_context>

<pallas_src>
import numpy as np
import jax
import jax.numpy as jnp
from jax.experimental import pallas as pl
from jax.experimental.pallas import tpu as pltpu


SAMPLES_PER_BLOCK = 8        # B: samples per grid step (keeps Gbig ~2MB bf16, well
                             # under default scoped VMEM, and >=2 grid steps for
                             # v7x's two TensorCores at modest batch sizes).


# ------------------------- wrapper-side helpers ------------------------------

def extract_patches(x, kh, kw, stride):
    """im2col for NCHW input. Returns (N*Ho*Wo, C*kh*kw) with K ordered (C, kh, kw)."""
    N, C, H, W = x.shape
    Ho = (H - kh) // stride + 1
    Wo = (W - kw) // stride + 1
    cols = []
    for i in range(kh):
        for j in range(kw):
            cols.append(x[:, :,
                          i:i + stride * (Ho - 1) + 1:stride,
                          j:j + stride * (Wo - 1) + 1:stride])      # (N, C, Ho, Wo)
    p = jnp.stack(cols, axis=2)                                     # (N, C, kh*kw, Ho, Wo)
    p = p.reshape(N, C * kh * kw, Ho, Wo)                           # K = (C, kh, kw)
    p = jnp.transpose(p, (0, 2, 3, 1))                              # (N, Ho, Wo, K)
    return p.reshape(N * Ho * Wo, C * kh * kw), Ho, Wo


def _pool_im2col_matrix(ho_prev, wo_prev, pk, kd, stride, ho, wo):
    """G[k, m_prev, j]: folds prev layer's avg-pool AND this layer's strided im2col
    into one constant matrix, so  conv_patch(k) = y_prev @ G[k]."""
    g = np.zeros((kd * kd, ho_prev * wo_prev, ho * wo), np.float32)
    inv = 1.0 / float(pk * pk)
    for ki in range(kd):
        for kj in range(kd):
            k = ki * kd + kj
            for h2 in range(ho):
                for w2 in range(wo):
                    j = h2 * wo + w2
                    hp = stride * h2 + ki        # pooled-grid coordinates
                    wp = stride * w2 + kj
                    for dh in range(pk):
                        for dw in range(pk):
                            mp = (pk * hp + dh) * wo_prev + (pk * wp + dw)
                            g[k, mp, j] = inv
    return g


def _final_linear_tensor(lw, r_last, ho, wo, pk):
    """Fold the last avg-pool + torch NCHW flatten into the linear weight:
    returns (Ho*Wo, d2, r_last)."""
    d2 = lw.shape[0]
    hp, wp = ho // pk, wo // pk
    lw4 = lw.reshape(d2, r_last, hp, wp)
    out = np.zeros((ho * wo, d2, r_last), np.float32)
    inv = 1.0 / float(pk * pk)
    for h2 in range(hp * pk):                    # positions cropped by floor-pool stay 0
        for w2 in range(wp * pk):
            out[h2 * wo + w2] = lw4[:, :, h2 // pk, w2 // pk] * inv
    return out


def build_fused_operands(params, img_shape, layer_confs, block_b=SAMPLES_PER_BLOCK):
    """Static per-layer dims + all constant kernel operands (host-precomputed, bf16)."""
    C, H, W = img_shape
    assert H == W, "host-side folds assume square inputs"
    dims = []
    in_c, h_in = C, H
    for conf in layer_confs:
        kd, st, pk, r = (conf['patch_dim'], conf['patch_stride'],
                         conf['avg_pooling_kernel_size'], conf['r'])
        ho = (h_in - kd) // st + 1
        hp = ho // pk
        assert ho >= 1 and hp >= 1, "layer config shrinks spatial size below 1"
        dims.append(dict(kd=kd, stride=st, pk=pk, r=r,
                         ho=ho, wo=ho, m=ho * ho, kk=kd * kd, in_c=in_c))
        in_c, h_in = r, hp

    w1 = np.asarray(params['conv_w'][0]).reshape(dims[0]['r'], -1)   # (r1, C*kd1^2)
    eye_b = np.eye(block_b, dtype=np.float32)
    gs, ws = [], []
    for L in range(1, len(layer_confs)):
        prev, cur = dims[L - 1], dims[L]
        g = _pool_im2col_matrix(prev['ho'], prev['wo'], prev['pk'],
                                cur['kd'], cur['stride'], cur['ho'], cur['wo'])
        # Gcat: (m_prev, kk*m) with columns ordered (k, hw); Gbig = Gcat (x) I_B so a
        # single matmul handles pool+im2col for all B samples (sample-minor lanes).
        gcat = np.transpose(g, (1, 0, 2)).reshape(prev['m'], cur['kk'] * cur['m'])
        gbig = np.kron(gcat, eye_b)                                  # (m_prev*B, kk*m*B)
        w = np.asarray(params['conv_w'][L])                          # (r, c, kd, kd)
        w = w.transpose(2, 3, 0, 1).reshape(cur['kk'], cur['r'], prev['r'])
        gs.append(jnp.asarray(gbig, dtype=jnp.bfloat16))
        ws.append(jnp.asarray(w, dtype=jnp.bfloat16))
    last = dims[-1]
    wl = _final_linear_tensor(np.asarray(params['lin_w'][-1]),
                              last['r'], last['ho'], last['wo'], last['pk'])
    b = np.asarray(params['lin_b'][-1]).reshape(-1, 1)               # (d2, 1)
    ops = dict(w1=jnp.asarray(w1, dtype=jnp.bfloat16), gs=gs, ws=ws,
               wl=jnp.asarray(wl, dtype=jnp.bfloat16),
               b=jnp.asarray(b, dtype=jnp.float32))
    return dims, ops


# ------------------------------ Pallas kernel --------------------------------

def _tree_sum(xs):
    """Pairwise (tree) sum -> independent partials, no serial accumulation chain."""
    xs = list(xs)
    while len(xs) > 1:
        nxt = [xs[i] + xs[i + 1] for i in range(0, len(xs) - 1, 2)]
        if len(xs) % 2:
            nxt.append(xs[-1])
        xs = nxt
    return xs[0]


def build_fused_kernel(dims, block_b):
    n_layers = len(dims)
    m_last = dims[-1]['m']
    B = block_b

    def kernel(*refs):
        # refs = (a1t, w1, [gbig_L, w_L]*, wl, b, out)
        a_ref, w1_ref = refs[0], refs[1]
        # Layer 1: ONE lane-dense bf16 MXU matmul for all B samples; ReLU in f32.
        # Activation layout: (r1, M1*B), lane = m*B + b (spatial-major, sample-minor).
        y = jnp.maximum(
            jnp.dot(w1_ref[...], a_ref[0], preferred_element_type=jnp.float32),
            0.0)
        idx = 2
        # Layers >= 2: prev-pool + strided im2col for all B samples via ONE matmul
        # against Gbig = Gcat (x) I_B, then kk independent batched conv matmuls.
        for L in range(1, n_layers):
            g_ref, w_ref = refs[idx], refs[idx + 1]
            idx += 2
            kk, m = dims[L]['kk'], dims[L]['m']
            t = jnp.dot(y.astype(jnp.bfloat16), g_ref[...],
                        preferred_element_type=jnp.float32)          # (r_prev, kk*m*B)
            t_bf = t.astype(jnp.bfloat16)
            parts = [
                jnp.dot(w_ref[k], t_bf[:, k * m * B:(k + 1) * m * B],
                        preferred_element_type=jnp.float32)          # (r, m*B)
                for k in range(kk)]
            y = jnp.maximum(_tree_sum(parts), 0.0)                   # lanes = hw*B + b
        # Final linear: last pool + NCHW flatten folded into wl; m_last independent
        # batched (d2, r)x(r, B) matmuls, tree-summed; bias added in f32.
        wl_ref, b_ref, out_ref = refs[idx], refs[idx + 1], refs[idx + 2]
        y_bf = y.astype(jnp.bfloat16)
        parts = [
            jnp.dot(wl_ref[hw], y_bf[:, hw * B:(hw + 1) * B],
                    preferred_element_type=jnp.float32)              # (d2, B)
            for hw in range(m_last)]
        out_ref[0] = b_ref[...] + _tree_sum(parts)                   # one (d2, B) store
    return kernel


def cnn_forward_fused(dims, ops, x, block_b=SAMPLES_PER_BLOCK):
    """Single pallas_call forward pass over blocks of B samples. x: NCHW float32."""
    N = x.shape[0]
    B = block_b
    nb = -(-N // B)
    n_pad = nb * B
    if n_pad != N:
        x = jnp.concatenate(
            [x, jnp.zeros((n_pad - N,) + x.shape[1:], x.dtype)], axis=0)

    kd1, s1 = dims[0]['kd'], dims[0]['stride']
    a1, Ho1, Wo1 = extract_patches(x, kd1, kd1, s1)                  # (n_pad*M1, K1)
    M1 = Ho1 * Wo1
    K1 = a1.shape[-1]
    # (nb, K1, M1*B) with lane = m*B + b  (lane-dense, sample-minor), bf16 operands.
    a1t = jnp.transpose(a1.reshape(nb, B, M1, K1), (0, 3, 2, 1))
    a1t = a1t.reshape(nb, K1, M1 * B).astype(jnp.bfloat16)
    d2 = ops['b'].shape[0]

    arrays = [a1t, ops['w1']]
    in_specs = [pl.BlockSpec((1, K1, M1 * B), lambda n: (n, 0, 0)),
                pl.BlockSpec(ops['w1'].shape, lambda n: (0, 0))]
    for g, w in zip(ops['gs'], ops['ws']):
        arrays += [g, w]
        in_specs += [pl.BlockSpec(g.shape, lambda n: (0, 0)),
                     pl.BlockSpec(w.shape, lambda n: (0, 0, 0))]
    arrays += [ops['wl'], ops['b']]
    in_specs += [pl.BlockSpec(ops['wl'].shape, lambda n: (0, 0, 0)),
                 pl.BlockSpec(ops['b'].shape, lambda n: (0, 0))]

    out = pl.pallas_call(
        build_fused_kernel(dims, B),
        out_shape=jax.ShapeDtypeStruct((nb, d2, B), jnp.float32),
        grid=(nb,),
        in_specs=in_specs,
        out_specs=pl.BlockSpec((1, d2, B), lambda n: (n, 0, 0)),
        compiler_params=pltpu.CompilerParams(
            dimension_semantics=("parallel",)),
    )(*arrays)
    out = jnp.transpose(out, (0, 2, 1)).reshape(n_pad, d2)
    return out[:N]


# ------------------------------- reference -----------------------------------

def init_params(key, img_shape, layer_confs):
    params = {'conv_w': [], 'lin_w': [], 'lin_b': []}
    in_c, h_in = img_shape[0], img_shape[1]
    assert img_shape[1] == img_shape[2]
    for conf in layer_confs:
        key, k1, k2, k3 = jax.random.split(key, 4)
        kd = conf['patch_dim']
        fan_in = in_c * kd * kd
        w = jax.random.uniform(k1, (conf['r'], in_c, kd, kd),
                               minval=-1.0, maxval=1.0) / jnp.sqrt(float(fan_in))
        params['conv_w'].append(w.astype(jnp.float32))
        h = (h_in - kd) // conf['patch_stride'] + 1
        hp = h // conf['avg_pooling_kernel_size']
        feat = conf['r'] * hp * hp
        lw = jax.random.uniform(k2, (conf['d2'], feat),
                                minval=-1.0, maxval=1.0) / jnp.sqrt(float(feat))
        lb = jax.random.uniform(k3, (conf['d2'],),
                                minval=-1.0, maxval=1.0) / jnp.sqrt(float(feat))
        params['lin_w'].append(lw.astype(jnp.float32))
        params['lin_b'].append(lb.astype(jnp.float32))
        in_c, h_in = conf['r'], hp
    return params


def cnn_forward_ref(params, x, layer_confs):
    """Pure-jnp f32 reference (conv->relu->avgpool per layer, last linear)."""
    for conf, w in zip(layer_confs, params['conv_w']):
        kd, st, pk, r = (conf['patch_dim'], conf['patch_stride'],
                         conf['avg_pooling_kernel_size'], conf['r'])
        N, C, H, W = x.shape
        a, Ho, Wo = extract_patches(x, kd, kd, st)
        y = jnp.maximum(a @ w.reshape(r, C * kd * kd).T, 0.0).reshape(N, Ho, Wo, r)
        Hp, Wp = Ho // pk, Wo // pk
        y = y[:, :Hp * pk, :Wp * pk, :].reshape(N, Hp, pk, Wp, pk, r)
        y = y.mean(axis=(2, 4))
        x = jnp.transpose(y, (0, 3, 1, 2))
    flat = x.reshape(x.shape[0], -1)
    return flat @ params['lin_w'][-1].T + params['lin_b'][-1]


# TODO(synk): CNN.train (DataLoader/Adam/logging) and forward_all are training/utility
# paths, not part of the forward pass, and are not translated.

if __name__ == "__main__":
    img_shape = (4, 16, 16)   # (C, H, W)
    batch = 32                # 4 grid steps of B=8 samples (keeps both v7x TCs busy)
    layer_confs = [
        {'r': 8,  'patch_dim': 3, 'patch_stride': 1, 'avg_pooling_kernel_size': 2, 'd2': 10},
        {'r': 16, 'patch_dim': 3, 'patch_stride': 2, 'avg_pooling_kernel_size': 1, 'd2': 10},
    ]

    key = jax.random.PRNGKey(0)
    key, kx, kp = jax.random.split(key, 3)
    x = jax.random.normal(kx, (batch,) + img_shape, dtype=jnp.float32)   # NCHW input
    params = init_params(kp, img_shape, layer_confs)

    dims, ops = build_fused_operands(params, img_shape, layer_confs,
                                     block_b=SAMPLES_PER_BLOCK)
    out = cnn_forward_fused(dims, ops, x, block_b=SAMPLES_PER_BLOCK)
    out = jax.block_until_ready(out)

    ref = cnn_forward_ref(params, x, layer_confs)
    assert out.shape == (batch, layer_confs[-1]['d2']), out.shape
    err = float(jnp.max(jnp.abs(out - ref)))
    # bf16 MXU operands with f32 accumulation => small elementwise deviation vs f32 ref
    assert err < 5e-2, f"mismatch vs reference: max |err| = {err}"

    print("KERNEL_OK")
</pallas_src>

<mosaic_0001>
module attributes {stable_mosaic.version = 11 : i64} {
  func.func @kernel(%arg0: i32, %arg1: memref<1x36x1568xbf16, #tpu.memory_space<vmem>>, %arg2: memref<8x36xbf16, #tpu.memory_space<vmem>>, %arg3: memref<1568x648xbf16, #tpu.memory_space<vmem>>, %arg4: memref<9x16x8xbf16, #tpu.memory_space<vmem>>, %arg5: memref<9x10x16xbf16, #tpu.memory_space<vmem>>, %arg6: memref<10x1xf32, #tpu.memory_space<vmem>>, %arg7: memref<1x10x8xf32, #tpu.memory_space<vmem>>) attributes {dimension_semantics = [#tpu.dimension_semantics<parallel>], iteration_bounds = array<i64: 4>, scalar_prefetch = 0 : i64, scratch_operands = 0 : i64, tpu.core_type = #tpu.core_type<tc>, window_params = [{transform_indices = @transform_0, window_bounds = array<i64: 1, 36, 1568>}, {pipeline_mode = #tpu.pipeline_mode<synchronous>, transform_indices = @transform_1, window_bounds = array<i64: 8, 36>}, {pipeline_mode = #tpu.pipeline_mode<synchronous>, transform_indices = @transform_2, window_bounds = array<i64: 1568, 648>}, {pipeline_mode = #tpu.pipeline_mode<synchronous>, transform_indices = @transform_3, window_bounds = array<i64: 9, 16, 8>}, {pipeline_mode = #tpu.pipeline_mode<synchronous>, transform_indices = @transform_4, window_bounds = array<i64: 9, 10, 16>}, {pipeline_mode = #tpu.pipeline_mode<synchronous>, transform_indices = @transform_5, window_bounds = array<i64: 10, 1>}, {transform_indices = @transform_6, window_bounds = array<i64: 1, 10, 8>}]} {
    %c0 = arith.constant 0 : index
    %c0_0 = arith.constant 0 : index
    %0 = vector.load %arg2[%c0, %c0_0] : memref<8x36xbf16, #tpu.memory_space<vmem>>, vector<8x36xbf16>
    %c0_1 = arith.constant 0 : index
    %c0_2 = arith.constant 0 : index
    %c0_3 = arith.constant 0 : index
    %1 = vector.load %arg1[%c0_1, %c0_2, %c0_3] : memref<1x36x1568xbf16, #tpu.memory_space<vmem>>, vector<1x36x1568xbf16>
    %2 = vector.shape_cast %1 : vector<1x36x1568xbf16> to vector<36x1568xbf16>
    %cst = arith.constant dense<0.000000e+00> : vector<8x1568xf32>
    %3 = tpu.matmul %0, %2, %cst {dimension_numbers = #tpu.dot_dimension_numbers<[1], [0], [0], [1], [0, 0, 1, 1], [], []>} : vector<8x36xbf16>, vector<36x1568xbf16>, vector<8x1568xf32> -> vector<8x1568xf32>
    %cst_4 = arith.constant 0.000000e+00 : f32
    %4 = vector.broadcast %cst_4 : f32 to vector<8x1568xf32>
    %5 = arith.maximumf %3, %4 : vector<8x1568xf32>
    %6 = arith.truncf %5 : vector<8x1568xf32> to vector<8x1568xbf16>
    %c0_5 = arith.constant 0 : index
    %c0_6 = arith.constant 0 : index
    %7 = vector.load %arg3[%c0_5, %c0_6] : memref<1568x648xbf16, #tpu.memory_space<vmem>>, vector<1568x648xbf16>
    %cst_7 = arith.constant dense<0.000000e+00> : vector<8x648xf32>
    %8 = tpu.matmul %6, %7, %cst_7 {dimension_numbers = #tpu.dot_dimension_numbers<[1], [0], [0], [1], [0, 0, 1, 1], [], []>} : vector<8x1568xbf16>, vector<1568x648xbf16>, vector<8x648xf32> -> vector<8x648xf32>
    %9 = arith.truncf %8 : vector<8x648xf32> to vector<8x648xbf16>
    %c0_8 = arith.constant 0 : index
    %c0_9 = arith.constant 0 : index
    %c0_10 = arith.constant 0 : index
    %10 = vector.load %arg4[%c0_8, %c0_9, %c0_10] : memref<9x16x8xbf16, #tpu.memory_space<vmem>>, vector<1x16x8xbf16>
    %11 = vector.shape_cast %10 : vector<1x16x8xbf16> to vector<16x8xbf16>
    %12 = vector.extract_strided_slice %9 {offsets = [0, 0], sizes = [8, 72], strides = [1, 1]} : vector<8x648xbf16> to vector<8x72xbf16>
    %cst_11 = arith.constant dense<0.000000e+00> : vector<16x72xf32>
    %13 = tpu.matmul %11, %12, %cst_11 {dimension_numbers = #tpu.dot_dimension_numbers<[1], [0], [0], [1], [0, 0, 1, 1], [], []>} : vector<16x8xbf16>, vector<8x72xbf16>, vector<16x72xf32> -> vector<16x72xf32>
    %c1 = arith.constant 1 : index
    %c0_12 = arith.constant 0 : index
    %c0_13 = arith.constant 0 : index
    %14 = vector.load %arg4[%c1, %c0_12, %c0_13] : memref<9x16x8xbf16, #tpu.memory_space<vmem>>, vector<1x16x8xbf16>
    %15 = vector.shape_cast %14 : vector<1x16x8xbf16> to vector<16x8xbf16>
    %16 = vector.extract_strided_slice %9 {offsets = [0, 72], sizes = [8, 72], strides = [1, 1]} : vector<8x648xbf16> to vector<8x72xbf16>
    %cst_14 = arith.constant dense<0.000000e+00> : vector<16x72xf32>
    %17 = tpu.matmul %15, %16, %cst_14 {dimension_numbers = #tpu.dot_dimension_numbers<[1], [0], [0], [1], [0, 0, 1, 1], [], []>} : vector<16x8xbf16>, vector<8x72xbf16>, vector<16x72xf32> -> vector<16x72xf32>
    %c2 = arith.constant 2 : index
    %c0_15 = arith.constant 0 : index
    %c0_16 = arith.constant 0 : index
    %18 = vector.load %arg4[%c2, %c0_15, %c0_16] : memref<9x16x8xbf16, #tpu.memory_space<vmem>>, vector<1x16x8xbf16>
    %19 = vector.shape_cast %18 : vector<1x16x8xbf16> to vector<16x8xbf16>
    %20 = vector.extract_strided_slice %9 {offsets = [0, 144], sizes = [8, 72], strides = [1, 1]} : vector<8x648xbf16> to vector<8x72xbf16>
    %cst_17 = arith.constant dense<0.000000e+00> : vector<16x72xf32>
    %21 = tpu.matmul %19, %20, %cst_17 {dimension_numbers = #tpu.dot_dimension_numbers<[1], [0], [0], [1], [0, 0, 1, 1], [], []>} : vector<16x8xbf16>, vector<8x72xbf16>, vector<16x72xf32> -> vector<16x72xf32>
    %c3 = arith.constant 3 : index
    %c0_18 = arith.constant 0 : index
    %c0_19 = arith.constant 0 : index
    %22 = vector.load %arg4[%c3, %c0_18, %c0_19] : memref<9x16x8xbf16, #tpu.memory_space<vmem>>, vector<1x16x8xbf16>
    %23 = vector.shape_cast %22 : vector<1x16x8xbf16> to vector<16x8xbf16>
    %24 = vector.extract_strided_slice %9 {offsets = [0, 216], sizes = [8, 72], strides = [1, 1]} : vector<8x648xbf16> to vector<8x72xbf16>
    %cst_20 = arith.constant dense<0.000000e+00> : vector<16x72xf32>
    %25 = tpu.matmul %23, %24, %cst_20 {dimension_numbers = #tpu.dot_dimension_numbers<[1], [0], [0], [1], [0, 0, 1, 1], [], []>} : vector<16x8xbf16>, vector<8x72xbf16>, vector<16x72xf32> -> vector<16x72xf32>
    %c4 = arith.constant 4 : index
    %c0_21 = arith.constant 0 : index
    %c0_22 = arith.constant 0 : index
    %26 = vector.load %arg4[%c4, %c0_21, %c0_22] : memref<9x16x8xbf16, #tpu.memory_space<vmem>>, vector<1x16x8xbf16>
    %27 = vector.shape_cast %26 : vector<1x16x8xbf16> to vector<16x8xbf16>
    %28 = vector.extract_strided_slice %9 {offsets = [0, 288], sizes = [8, 72], strides = [1, 1]} : vector<8x648xbf16> to vector<8x72xbf16>
    %cst_23 = arith.constant dense<0.000000e+00> : vector<16x72xf32>
    %29 = tpu.matmul %27, %28, %cst_23 {dimension_numbers = #tpu.dot_dimension_numbers<[1], [0], [0], [1], [0, 0, 1, 1], [], []>} : vector<16x8xbf16>, vector<8x72xbf16>, vector<16x72xf32> -> vector<16x72xf32>
    %c5 = arith.constant 5 : index
    %c0_24 = arith.constant 0 : index
    %c0_25 = arith.constant 0 : index
    %30 = vector.load %arg4[%c5, %c0_24, %c0_25] : memref<9x16x8xbf16, #tpu.memory_space<vmem>>, vector<1x16x8xbf16>
    %31 = vector.shape_cast %30 : vector<1x16x8xbf16> to vector<16x8xbf16>
    %32 = vector.extract_strided_slice %9 {offsets = [0, 360], sizes = [8, 72], strides = [1, 1]} : vector<8x648xbf16> to vector<8x72xbf16>
    %cst_26 = arith.constant dense<0.000000e+00> : vector<16x72xf32>
    %33 = tpu.matmul %31, %32, %cst_26 {dimension_numbers = #tpu.dot_dimension_numbers<[1], [0], [0], [1], [0, 0, 1, 1], [], []>} : vector<16x8xbf16>, vector<8x72xbf16>, vector<16x72xf32> -> vector<16x72xf32>
    %c6 = arith.constant 6 : index
    %c0_27 = arith.constant 0 : index
    %c0_28 = arith.constant 0 : index
    %34 = vector.load %arg4[%c6, %c0_27, %c0_28] : memref<9x16x8xbf16, #tpu.memory_space<vmem>>, vector<1x16x8xbf16>
    %35 = vector.shape_cast %34 : vector<1x16x8xbf16> to vector<16x8xbf16>
    %36 = vector.extract_strided_slice %9 {offsets = [0, 432], sizes = [8, 72], strides = [1, 1]} : vector<8x648xbf16> to vector<8x72xbf16>
    %cst_29 = arith.constant dense<0.000000e+00> : vector<16x72xf32>
    %37 = tpu.matmul %35, %36, %cst_29 {dimension_numbers = #tpu.dot_dimension_numbers<[1], [0], [0], [1], [0, 0, 1, 1], [], []>} : vector<16x8xbf16>, vector<8x72xbf16>, vector<16x72xf32> -> vector<16x72xf32>
    %c7 = arith.constant 7 : index
    %c0_30 = arith.constant 0 : index
    %c0_31 = arith.constant 0 : index
    %38 = vector.load %arg4[%c7, %c0_30, %c0_31] : memref<9x16x8xbf16, #tpu.memory_space<vmem>>, vector<1x16x8xbf16>
    %39 = vector.shape_cast %38 : vector<1x16x8xbf16> to vector<16x8xbf16>
    %40 = vector.extract_strided_slice %9 {offsets = [0, 504], sizes = [8, 72], strides = [1, 1]} : vector<8x648xbf16> to vector<8x72xbf16>
    %cst_32 = arith.constant dense<0.000000e+00> : vector<16x72xf32>
    %41 = tpu.matmul %39, %40, %cst_32 {dimension_numbers = #tpu.dot_dimension_numbers<[1], [0], [0], [1], [0, 0, 1, 1], [], []>} : vector<16x8xbf16>, vector<8x72xbf16>, vector<16x72xf32> -> vector<16x72xf32>
    %c8 = arith.constant 8 : index
    %c0_33 = arith.constant 0 : index
    %c0_34 = arith.constant 0 : index
    %42 = vector.load %arg4[%c8, %c0_33, %c0_34] : memref<9x16x8xbf16, #tpu.memory_space<vmem>>, vector<1x16x8xbf16>
    %43 = vector.shape_cast %42 : vector<1x16x8xbf16> to vector<16x8xbf16>
    %44 = vector.extract_strided_slice %9 {offsets = [0, 576], sizes = [8, 72], strides = [1, 1]} : vector<8x648xbf16> to vector<8x72xbf16>
    %cst_35 = arith.constant dense<0.000000e+00> : vector<16x72xf32>
    %45 = tpu.matmul %43, %44, %cst_35 {dimension_numbers = #tpu.dot_dimension_numbers<[1], [0], [0], [1], [0, 0, 1, 1], [], []>} : vector<16x8xbf16>, vector<8x72xbf16>, vector<16x72xf32> -> vector<16x72xf32>
    %46 = arith.addf %13, %17 : vector<16x72xf32>
    %47 = arith.addf %21, %25 : vector<16x72xf32>
    %48 = arith.addf %29, %33 : vector<16x72xf32>
    %49 = arith.addf %37, %41 : vector<16x72xf32>
    %50 = arith.addf %46, %47 : vector<16x72xf32>
    %51 = arith.addf %48, %49 : vector<16x72xf32>
    %52 = arith.addf %50, %51 : vector<16x72xf32>
    %53 = arith.addf %52, %45 : vector<16x72xf32>
    %cst_36 = arith.constant 0.000000e+00 : f32
    %54 = vector.broadcast %cst_36 : f32 to vector<16x72xf32>
    %55 = arith.maximumf %53, %54 : vector<16x72xf32>
    %56 = arith.truncf %55 : vector<16x72xf32> to vector<16x72xbf16>
    %c0_37 = arith.constant 0 : index
    %c0_38 = arith.constant 0 : index
    %c0_39 = arith.constant 0 : index
    %57 = vector.load %arg5[%c0_37, %c0_38, %c0_39] : memref<9x10x16xbf16, #tpu.memory_space<vmem>>, vector<1x10x16xbf16>
    %58 = vector.shape_cast %57 : vector<1x10x16xbf16> to vector<10x16xbf16>
    %59 = vector.extract_strided_slice %56 {offsets = [0, 0], sizes = [16, 8], strides = [1, 1]} : vector<16x72xbf16> to vector<16x8xbf16>
    %cst_40 = arith.constant dense<0.000000e+00> : vector<10x8xf32>
    %60 = tpu.matmul %58, %59, %cst_40 {dimension_numbers = #tpu.dot_dimension_numbers<[1], [0], [0], [1], [0, 0, 1, 1], [], []>} : vector<10x16xbf16>, vector<16x8xbf16>, vector<10x8xf32> -> vector<10x8xf32>
    %c1_41 = arith.constant 1 : index
    %c0_42 = arith.constant 0 : index
    %c0_43 = arith.constant 0 : index
    %61 = vector.load %arg5[%c1_41, %c0_42, %c0_43] : memref<9x10x16xbf16, #tpu.memory_space<vmem>>, vector<1x10x16xbf16>
    %62 = vector.shape_cast %61 : vector<1x10x16xbf16> to vector<10x16xbf16>
    %63 = vector.extract_strided_slice %56 {offsets = [0, 8], sizes = [16, 8], strides = [1, 1]} : vector<16x72xbf16> to vector<16x8xbf16>
    %cst_44 = arith.constant dense<0.000000e+00> : vector<10x8xf32>
    %64 = tpu.matmul %62, %63, %cst_44 {dimension_numbers = #tpu.dot_dimension_numbers<[1], [0], [0], [1], [0, 0, 1, 1], [], []>} : vector<10x16xbf16>, vector<16x8xbf16>, vector<10x8xf32> -> vector<10x8xf32>
    %c2_45 = arith.constant 2 : index
    %c0_46 = arith.constant 0 : index
    %c0_47 = arith.constant 0 : index
    %65 = vector.load %arg5[%c2_45, %c0_46, %c0_47] : memref<9x10x16xbf16, #tpu.memory_space<vmem>>, vector<1x10x16xbf16>
    %66 = vector.shape_cast %65 : vector<1x10x16xbf16> to vector<10x16xbf16>
    %67 = vector.extract_strided_slice %56 {offsets = [0, 16], sizes = [16, 8], strides = [1, 1]} : vector<16x72xbf16> to vector<16x8xbf16>
    %cst_48 = arith.constant dense<0.000000e+00> : vector<10x8xf32>
    %68 = tpu.matmul %66, %67, %cst_48 {dimension_numbers = #tpu.dot_dimension_numbers<[1], [0], [0], [1], [0, 0, 1, 1], [], []>} : vector<10x16xbf16>, vector<16x8xbf16>, vector<10x8xf32> -> vector<10x8xf32>
    %c3_49 = arith.constant 3 : index
    %c0_50 = arith.constant 0 : index
    %c0_51 = arith.constant 0 : index
    %69 = vector.load %arg5[%c3_49, %c0_50, %c0_51] : memref<9x10x16xbf16, #tpu.memory_space<vmem>>, vector<1x10x16xbf16>
    %70 = vector.shape_cast %69 : vector<1x10x16xbf16> to vector<10x16xbf16>
    %71 = vector.extract_strided_slice %56 {offsets = [0, 24], sizes = [16, 8], strides = [1, 1]} : vector<16x72xbf16> to vector<16x8xbf16>
    %cst_52 = arith.constant dense<0.000000e+00> : vector<10x8xf32>
    %72 = tpu.matmul %70, %71, %cst_52 {dimension_numbers = #tpu.dot_dimension_numbers<[1], [0], [0], [1], [0, 0, 1, 1], [], []>} : vector<10x16xbf16>, vector<16x8xbf16>, vector<10x8xf32> -> vector<10x8xf32>
    %c4_53 = arith.constant 4 : index
    %c0_54 = arith.constant 0 : index
    %c0_55 = arith.constant 0 : index
    %73 = vector.load %arg5[%c4_53, %c0_54, %c0_55] : memref<9x10x16xbf16, #tpu.memory_space<vmem>>, vector<1x10x16xbf16>
    %74 = vector.shape_cast %73 : vector<1x10x16xbf16> to vector<10x16xbf16>
    %75 = vector.extract_strided_slice %56 {offsets = [0, 32], sizes = [16, 8], strides = [1, 1]} : vector<16x72xbf16> to vector<16x8xbf16>
    %cst_56 = arith.constant dense<0.000000e+00> : vector<10x8xf32>
    %76 = tpu.matmul %74, %75, %cst_56 {dimension_numbers = #tpu.dot_dimension_numbers<[1], [0], [0], [1], [0, 0, 1, 1], [], []>} : vector<10x16xbf16>, vector<16x8xbf16>, vector<10x8xf32> -> vector<10x8xf32>
    %c5_57 = arith.constant 5 : index
    %c0_58 = arith.constant 0 : index
    %c0_59 = arith.constant 0 : index
    %77 = vector.load %arg5[%c5_57, %c0_58, %c0_59] : memref<9x10x16xbf16, #tpu.memory_space<vmem>>, vector<1x10x16xbf16>
    %78 = vector.shape_cast %77 : vector<1x10x16xbf16> to vector<10x16xbf16>
    %79 = vector.extract_strided_slice %56 {offsets = [0, 40], sizes = [16, 8], strides = [1, 1]} : vector<16x72xbf16> to vector<16x8xbf16>
    %cst_60 = arith.constant dense<0.000000e+00> : vector<10x8xf32>
    %80 = tpu.matmul %78, %79, %cst_60 {dimension_numbers = #tpu.dot_dimension_numbers<[1], [0], [0], [1], [0, 0, 1, 1], [], []>} : vector<10x16xbf16>, vector<16x8xbf16>, vector<10x8xf32> -> vector<10x8xf32>
    %c6_61 = arith.constant 6 : index
    %c0_62 = arith.constant 0 : index
    %c0_63 = arith.constant 0 : index
    %81 = vector.load %arg5[%c6_61, %c0_62, %c0_63] : memref<9x10x16xbf16, #tpu.memory_space<vmem>>, vector<1x10x16xbf16>
    %82 = vector.shape_cast %81 : vector<1x10x16xbf16> to vector<10x16xbf16>
    %83 = vector.extract_strided_slice %56 {offsets = [0, 48], sizes = [16, 8], strides = [1, 1]} : vector<16x72xbf16> to vector<16x8xbf16>
    %cst_64 = arith.constant dense<0.000000e+00> : vector<10x8xf32>
    %84 = tpu.matmul %82, %83, %cst_64 {dimension_numbers = #tpu.dot_dimension_numbers<[1], [0], [0], [1], [0, 0, 1, 1], [], []>} : vector<10x16xbf16>, vector<16x8xbf16>, vector<10x8xf32> -> vector<10x8xf32>
    %c7_65 = arith.constant 7 : index
    %c0_66 = arith.constant 0 : index
    %c0_67 = arith.constant 0 : index
    %85 = vector.load %arg5[%c7_65, %c0_66, %c0_67] : memref<9x10x16xbf16, #tpu.memory_space<vmem>>, vector<1x10x16xbf16>
    %86 = vector.shape_cast %85 : vector<1x10x16xbf16> to vector<10x16xbf16>
    %87 = vector.extract_strided_slice %56 {offsets = [0, 56], sizes = [16, 8], strides = [1, 1]} : vector<16x72xbf16> to vector<16x8xbf16>
    %cst_68 = arith.constant dense<0.000000e+00> : vector<10x8xf32>
    %88 = tpu.matmul %86, %87, %cst_68 {dimension_numbers = #tpu.dot_dimension_numbers<[1], [0], [0], [1], [0, 0, 1, 1], [], []>} : vector<10x16xbf16>, vector<16x8xbf16>, vector<10x8xf32> -> vector<10x8xf32>
    %c8_69 = arith.constant 8 : index
    %c0_70 = arith.constant 0 : index
    %c0_71 = arith.constant 0 : index
    %89 = vector.load %arg5[%c8_69, %c0_70, %c0_71] : memref<9x10x16xbf16, #tpu.memory_space<vmem>>, vector<1x10x16xbf16>
    %90 = vector.shape_cast %89 : vector<1x10x16xbf16> to vector<10x16xbf16>
    %91 = vector.extract_strided_slice %56 {offsets = [0, 64], sizes = [16, 8], strides = [1, 1]} : vector<16x72xbf16> to vector<16x8xbf16>
    %cst_72 = arith.constant dense<0.000000e+00> : vector<10x8xf32>
    %92 = tpu.matmul %90, %91, %cst_72 {dimension_numbers = #tpu.dot_dimension_numbers<[1], [0], [0], [1], [0, 0, 1, 1], [], []>} : vector<10x16xbf16>, vector<16x8xbf16>, vector<10x8xf32> -> vector<10x8xf32>
    %c0_73 = arith.constant 0 : index
    %c0_74 = arith.constant 0 : index
    %93 = vector.load %arg6[%c0_73, %c0_74] : memref<10x1xf32, #tpu.memory_space<vmem>>, vector<10x1xf32>
    %94 = arith.addf %60, %64 : vector<10x8xf32>
    %95 = arith.addf %68, %72 : vector<10x8xf32>
    %96 = arith.addf %76, %80 : vector<10x8xf32>
    %97 = arith.addf %84, %88 : vector<10x8xf32>
    %98 = arith.addf %94, %95 : vector<10x8xf32>
    %99 = arith.addf %96, %97 : vector<10x8xf32>
    %100 = arith.addf %98, %99 : vector<10x8xf32>
    %101 = arith.addf %100, %92 : vector<10x8xf32>
    %102 = vector.broadcast %93 : vector<10x1xf32> to vector<10x8xf32>
    %103 = arith.addf %102, %101 : vector<10x8xf32>
    %c0_75 = arith.constant 0 : index
    %c0_76 = arith.constant 0 : index
    %c0_77 = arith.constant 0 : index
    %104 = vector.load %arg7[%c0_75, %c0_76, %c0_77] : memref<1x10x8xf32, #tpu.memory_space<vmem>>, vector<1x10x8xf32>
    %105 = vector.shape_cast %104 : vector<1x10x8xf32> to vector<10x8xf32>
    %106 = vector.shape_cast %103 : vector<10x8xf32> to vector<1x10x8xf32>
    tpu.vector_store %arg7[%c0_75, %c0_76, %c0_77], %106 {strides = array<i32>} : memref<1x10x8xf32, #tpu.memory_space<vmem>>, vector<1x10x8xf32>,
    return
  }
  func.func @transform_0(%arg0: i32) -> (i32, i32, i32) {
    %c0_i32 = arith.constant 0 : i32
    %c0_i32_0 = arith.constant 0 : i32
    %c0_i32_1 = arith.constant 0 : i32
    return %arg0, %c0_i32, %c0_i32_0 : i32, i32, i32
  }
  func.func @transform_1(%arg0: i32) -> (i32, i32) {
    %c0_i32 = arith.constant 0 : i32
    %c0_i32_0 = arith.constant 0 : i32
    %c0_i32_1 = arith.constant 0 : i32
    return %c0_i32, %c0_i32_0 : i32, i32
  }
  func.func @transform_2(%arg0: i32) -> (i32, i32) {
    %c0_i32 = arith.constant 0 : i32
    %c0_i32_0 = arith.constant 0 : i32
    %c0_i32_1 = arith.constant 0 : i32
    return %c0_i32, %c0_i32_0 : i32, i32
  }
  func.func @transform_3(%arg0: i32) -> (i32, i32, i32) {
    %c0_i32 = arith.constant 0 : i32
    %c0_i32_0 = arith.constant 0 : i32
    %c0_i32_1 = arith.constant 0 : i32
    %c0_i32_2 = arith.constant 0 : i32
    return %c0_i32, %c0_i32_0, %c0_i32_1 : i32, i32, i32
  }
  func.func @transform_4(%arg0: i32) -> (i32, i32, i32) {
    %c0_i32 = arith.constant 0 : i32
    %c0_i32_0 = arith.constant 0 : i32
    %c0_i32_1 = arith.constant 0 : i32
    %c0_i32_2 = arith.constant 0 : i32
    return %c0_i32, %c0_i32_0, %c0_i32_1 : i32, i32, i32
  }
  func.func @transform_5(%arg0: i32) -> (i32, i32) {
    %c0_i32 = arith.constant 0 : i32
    %c0_i32_0 = arith.constant 0 : i32
    %c0_i32_1 = arith.constant 0 : i32
    return %c0_i32, %c0_i32_0 : i32, i32
  }
  func.func @transform_6(%arg0: i32) -> (i32, i32, i32) {
    %c0_i32 = arith.constant 0 : i32
    %c0_i32_0 = arith.constant 0 : i32
    %c0_i32_1 = arith.constant 0 : i32
    return %arg0, %c0_i32, %c0_i32_0 : i32, i32, i32
  }
}

</mosaic_0001>

<llo_original>
// kernel: tpu_custom_call.1
$region0: #{tpu_custom_call.1}
  #allocation0 [shape = 'u32[]', space=smem, size = 0x4, offset = 0x4, fixed_abs, tag = 'smem constant byte address 0x4 - core index']
  #allocation1 [shape = 'u32[72,128]{1,0:T(1,128)}', space=vmem, size = 0x9000, scoped, tag = 'internal scratch']
  %s0 = inlined_call_operand.vmem [shape: bf16[4,36,1568], index: 0, kind: input, shape index: {}]
  %s1 = inlined_call_operand.vmem [shape: bf16[8,36], index: 1, kind: input, shape index: {}]
  %s2 = inlined_call_operand.vmem [shape: bf16[1568,648], index: 2, kind: input, shape index: {}]
  %s3 = inlined_call_operand.vmem [shape: bf16[9,16,8], index: 3, kind: input, shape index: {}]
  %s4 = inlined_call_operand.vmem [shape: bf16[9,10,16], index: 4, kind: input, shape index: {}]
  %s5 = inlined_call_operand.vmem [shape: f32[10,1], index: 5, kind: input, shape index: {}]
  %s6 = inlined_call_operand.vmem [shape: f32[4,10,8], index: 6, kind: output, shape index: {}]
  %s7 = sld [smem:[#allocation0]]
  $region57: #{tpu_custom_call.1} parent=0
    _
  %s9 = ssub.s32 1, %s7
  %s10 = scalar_select 0, %s9, %s7
  loop: start=0, step=1, limit=6
  $region2: #{tpu_custom_call.1} parent=0 // loop_pre_header
    _
  $region3: #{tpu_custom_call.1} parent=0 // loop_header
    %s12 = sphi 0, %s16
    %p13 = scmp.ge.s32.totalorder %s12, 6
    %s22 = sphi 0, %s24
    %s25 = sphi 0, %s22
    %s26 = sphi 0, %s25
    %s42 = sphi 0, %s26
    %s46 = sphi 0, %s46
    %s48 = sphi 0, %s46
    %s49 = sphi 0, %s48
    %s63 = sphi 0, %s49
    %s67 = sphi 0, %s67
    %s69 = sphi 0, %s67
    %s70 = sphi 0, %s69
    %s84 = sphi 0, %s70
    %s88 = sphi 0, %s88
    %s90 = sphi 0, %s88
    %s91 = sphi 0, %s90
    %s105 = sphi 0, %s91
    %s109 = sphi 0, %s109
    %s111 = sphi 0, %s109
    %s112 = sphi 0, %s111
    %s126 = sphi 0, %s112
    %s130 = sphi 0, %s130
    %s132 = sphi 0, %s130
    %s133 = sphi 0, %s132
    %s147 = sphi 0, %s133
    %s153 = sphi 0, %s155
    %s156 = sphi 0, %s153
    %s157 = sphi 0, %s156
    %s173 = sphi 0, %s157
  $region4: #{tpu_custom_call.1} parent=0 // loop_header_branch
    %15 = sbr.rel (%p13) target = $region8
  $region5: #{tpu_custom_call.1} parent=0 // loop_body
    %s17 = ssub.s32 %s12, 1
    %s18 = ssub.s32 %s12, 2
    %s19 = sadd.s32 %s12, 1
    %s20 = ssub.s32 %s12, %s19
    %p21 = scmp.eq.s32.totalorder %s20, 0
    %s23 = sadd.s32 %s22, 1
    %s24 = scalar_select %p21, %s22, %s23
    %p27 = pneg %p21
    %p28 = scmp.eq.s32.totalorder %s12, 3
    %p29 = por %p27, %p28
    %p30 = scmp.ne.s32.totalorder %s22, %s25
    %p31 = scmp.eq.s32.totalorder %s12, 0
    %p32 = por %p30, %p31
    %p33 = scmp.ne.s32.totalorder %s22, %s25
    %p34 = scmp.eq.s32.totalorder %s17, 3
    %p35 = por %p33, %p34
    %p36 = scmp.ne.s32.totalorder %s25, %s26
    %p37 = scmp.eq.s32.totalorder %s17, 0
    %p38 = por %p36, %p37
    %p39 = scmp.ne.s32.totalorder %s25, %s26
    %p40 = scmp.eq.s32.totalorder %s18, 3
    %p41 = por %p39, %p40
    %p43 = scmp.ne.s32.totalorder %s26, %s42
    %p44 = scmp.eq.s32.totalorder %s18, 0
    %p45 = por %p43, %p44
    %s47 = sadd.s32 %s46, 1
    %p50 = scmp.eq.s32.totalorder %s12, 3
    %p51 = scmp.ne.s32.totalorder %s46, %s48
    %p52 = scmp.eq.s32.totalorder %s12, 0
    %p53 = por %p51, %p52
    %p54 = scmp.ne.s32.totalorder %s46, %s48
    %p55 = scmp.eq.s32.totalorder %s17, 3
    %p56 = por %p54, %p55
    %p57 = scmp.ne.s32.totalorder %s48, %s49
    %p58 = scmp.eq.s32.totalorder %s17, 0
    %p59 = por %p57, %p58
    %p60 = scmp.ne.s32.totalorder %s48, %s49
    %p61 = scmp.eq.s32.totalorder %s18, 3
    %p62 = por %p60, %p61
    %p64 = scmp.ne.s32.totalorder %s49, %s63
    %p65 = scmp.eq.s32.totalorder %s18, 0
    %p66 = por %p64, %p65
    %s68 = sadd.s32 %s67, 1
    %p71 = scmp.eq.s32.totalorder %s12, 3
    %p72 = scmp.ne.s32.totalorder %s67, %s69
    %p73 = scmp.eq.s32.totalorder %s12, 0
    %p74 = por %p72, %p73
    %p75 = scmp.ne.s32.totalorder %s67, %s69
    %p76 = scmp.eq.s32.totalorder %s17, 3
    %p77 = por %p75, %p76
    %p78 = scmp.ne.s32.totalorder %s69, %s70
    %p79 = scmp.eq.s32.totalorder %s17, 0
    %p80 = por %p78, %p79
    %p81 = scmp.ne.s32.totalorder %s69, %s70
    %p82 = scmp.eq.s32.totalorder %s18, 3
    %p83 = por %p81, %p82
    %p85 = scmp.ne.s32.totalorder %s70, %s84
    %p86 = scmp.eq.s32.totalorder %s18, 0
    %p87 = por %p85, %p86
    %s89 = sadd.s32 %s88, 1
    %p92 = scmp.eq.s32.totalorder %s12, 3
    %p93 = scmp.ne.s32.totalorder %s88, %s90
    %p94 = scmp.eq.s32.totalorder %s12, 0
    %p95 = por %p93, %p94
    %p96 = scmp.ne.s32.totalorder %s88, %s90
    %p97 = scmp.eq.s32.totalorder %s17, 3
    %p98 = por %p96, %p97
    %p99 = scmp.ne.s32.totalorder %s90, %s91
    %p100 = scmp.eq.s32.totalorder %s17, 0
    %p101 = por %p99, %p100
    %p102 = scmp.ne.s32.totalorder %s90, %s91
    %p103 = scmp.eq.s32.totalorder %s18, 3
    %p104 = por %p102, %p103
    %p106 = scmp.ne.s32.totalorder %s91, %s105
    %p107 = scmp.eq.s32.totalorder %s18, 0
    %p108 = por %p106, %p107
    %s110 = sadd.s32 %s109, 1
    %p113 = scmp.eq.s32.totalorder %s12, 3
    %p114 = scmp.ne.s32.totalorder %s109, %s111
    %p115 = scmp.eq.s32.totalorder %s12, 0
    %p116 = por %p114, %p115
    %p117 = scmp.ne.s32.totalorder %s109, %s111
    %p118 = scmp.eq.s32.totalorder %s17, 3
    %p119 = por %p117, %p118
    %p120 = scmp.ne.s32.totalorder %s111, %s112
    %p121 = scmp.eq.s32.totalorder %s17, 0
    %p122 = por %p120, %p121
    %p123 = scmp.ne.s32.totalorder %s111, %s112
    %p124 = scmp.eq.s32.totalorder %s18, 3
    %p125 = por %p123, %p124
    %p127 = scmp.ne.s32.totalorder %s112, %s126
    %p128 = scmp.eq.s32.totalorder %s18, 0
    %p129 = por %p127, %p128
    %s131 = sadd.s32 %s130, 1
    %p134 = scmp.eq.s32.totalorder %s12, 3
    %p135 = scmp.ne.s32.totalorder %s130, %s132
    %p136 = scmp.eq.s32.totalorder %s12, 0
    %p137 = por %p135, %p136
    %p138 = scmp.ne.s32.totalorder %s130, %s132
    %p139 = scmp.eq.s32.totalorder %s17, 3
    %p140 = por %p138, %p139
    %p141 = scmp.ne.s32.totalorder %s132, %s133
    %p142 = scmp.eq.s32.totalorder %s17, 0
    %p143 = por %p141, %p142
    %p144 = scmp.ne.s32.totalorder %s132, %s133
    %p145 = scmp.eq.s32.totalorder %s18, 3
    %p146 = por %p144, %p145
    %p148 = scmp.ne.s32.totalorder %s133, %s147
    %p149 = scmp.eq.s32.totalorder %s18, 0
    %p150 = por %p148, %p149
    %s151 = ssub.s32 %s12, %s19
    %p152 = scmp.eq.s32.totalorder %s151, 0
    %s154 = sadd.s32 %s153, 1
    %s155 = scalar_select %p152, %s153, %s154
    %p158 = pneg %p152
    %p159 = scmp.eq.s32.totalorder %s12, 3
    %p160 = por %p158, %p159
    %p161 = scmp.ne.s32.totalorder %s153, %s156
    %p162 = scmp.eq.s32.totalorder %s12, 0
    %p163 = por %p161, %p162
    %p164 = scmp.ne.s32.totalorder %s153, %s156
    %p165 = scmp.eq.s32.totalorder %s17, 3
    %p166 = por %p164, %p165
    %p167 = scmp.ne.s32.totalorder %s156, %s157
    %p168 = scmp.eq.s32.totalorder %s17, 0
    %p169 = por %p167, %p168
    %p170 = scmp.ne.s32.totalorder %s156, %s157
    %p171 = scmp.eq.s32.totalorder %s18, 3
    %p172 = por %p170, %p171
    %p174 = scmp.ne.s32.totalorder %s157, %s173
    %p175 = scmp.eq.s32.totalorder %s18, 0
    %p176 = por %p174, %p175
    %p177 = scmp.le.s32.totalorder 1, %s12
    %p178 = scmp.lt.s32.totalorder %s12, 5
    %p179 = pnand %p177, %p178
    %p180 = pneg %p179
    // Predicated region
    $region9: #{tpu_custom_call.1} parent=5 // pred_check
      _
    $region10: #{tpu_custom_call.1} parent=5 // pred_check_branch
      %182 = sbr.rel (%p179) target = $region12
    $region11: #{tpu_custom_call.1} parent=5 // pred_region
      %s183 = ssub.s32 %s12, 1
      // Predicated region
      $region13: #{tpu_custom_call.1} parent=11 // pred_check
        %p184 = pneg %p59
      $region14: #{tpu_custom_call.1} parent=11 // pred_check_branch
        %186 = sbr.rel (%p184) target = $region16
      $region15: #{tpu_custom_call.1} parent=11 // pred_region
        _
      $region16: #{tpu_custom_call.1} parent=11 // pred_fallthru
        _
      // Predicated region
      $region17: #{tpu_custom_call.1} parent=11 // pred_check
        %p187 = pneg %p80
      $region18: #{tpu_custom_call.1} parent=11 // pred_check_branch
        %189 = sbr.rel (%p187) target = $region20
      $region19: #{tpu_custom_call.1} parent=11 // pred_region
        _
      $region20: #{tpu_custom_call.1} parent=11 // pred_fallthru
        _
      // Predicated region
      $region21: #{tpu_custom_call.1} parent=11 // pred_check
        %p190 = pneg %p101
      $region22: #{tpu_custom_call.1} parent=11 // pred_check_branch
        %192 = sbr.rel (%p190) target = $region24
      $region23: #{tpu_custom_call.1} parent=11 // pred_region
        _
      $region24: #{tpu_custom_call.1} parent=11 // pred_fallthru
        _
      // Predicated region
      $region25: #{tpu_custom_call.1} parent=11 // pred_check
        %p193 = pneg %p122
      $region26: #{tpu_custom_call.1} parent=11 // pred_check_branch
        %195 = sbr.rel (%p193) target = $region28
      $region27: #{tpu_custom_call.1} parent=11 // pred_region
        _
      $region28: #{tpu_custom_call.1} parent=11 // pred_fallthru
        _
      // Predicated region
      $region29: #{tpu_custom_call.1} parent=11 // pred_check
        %p196 = pneg %p143
      $region30: #{tpu_custom_call.1} parent=11 // pred_check_branch
        %198 = sbr.rel (%p196) target = $region32
      $region31: #{tpu_custom_call.1} parent=11 // pred_region
        _
      $region32: #{tpu_custom_call.1} parent=11 // pred_fallthru
        _
    $region12: #{tpu_custom_call.1} parent=5 // pred_fallthru
      _
    %p199 = scmp.lt.s32.totalorder %s12, 4
    // Predicated region
    $region33: #{tpu_custom_call.1} parent=5 // pred_check
      %p200 = pneg %p199
    $region34: #{tpu_custom_call.1} parent=5 // pred_check_branch
      %202 = sbr.rel (%p200) target = $region36
    $region35: #{tpu_custom_call.1} parent=5 // pred_region
      // Predicated region
      $region37: #{tpu_custom_call.1} parent=35 // pred_check
        %p203 = pneg %p32
      $region38: #{tpu_custom_call.1} parent=35 // pred_check_branch
        %205 = sbr.rel (%p203) target = $region40
      $region39: #{tpu_custom_call.1} parent=35 // pred_region
        %p206 = scmp.lt.s32.totalorder %s12, 3
        %s207 = scalar_select %p206, %s12, 3
        %s208 = smul.addr %s207, 65
        %s209 = smul.addr %s208, 4
        %s210 = scalar_lea.vmem %s0, %s209
      $region40: #{tpu_custom_call.1} parent=35 // pred_fallthru
        _
    $region36: #{tpu_custom_call.1} parent=5 // pred_fallthru
      _
    %p211 = scmp.le.s32.totalorder 1, %s12
    %p212 = scmp.lt.s32.totalorder %s12, 5
    %p213 = pnand %p211, %p212
    %p214 = pneg %p213
    // Predicated region
    $region41: #{tpu_custom_call.1} parent=5 // pred_check
      _
    $region42: #{tpu_custom_call.1} parent=5 // pred_check_branch
      %216 = sbr.rel (%p213) target = $region44
    $region43: #{tpu_custom_call.1} parent=5 // pred_region
      %s217 = ssub.s32 %s12, 1
      %p218 = scmp.lt.s32.totalorder %s17, 3
      %s219 = scalar_select %p218, %s17, 3
      %s220 = smul.addr %s219, 65
      %s221 = smul.addr %s220, 4
      %s222 = scalar_lea.vmem %s0, %s221
      %p223 = pneg %p38
      %p224 = pneg %p35
      %p225 = pneg %p59
      %p226 = pneg %p56
      %p227 = pneg %p80
      %p228 = pneg %p77
      %p229 = pneg %p101
      %p230 = pneg %p98
      %p231 = pneg %p122
      %p232 = pneg %p119
      %p233 = pneg %p143
      %p234 = pneg %p140
      %p235 = pneg %p169
      %p236 = pneg %p166
      %p237 = scmp.lt.s32.totalorder %s17, 3
      %s238 = scalar_select %p237, %s17, 3
      %s239 = smul.addr %s238, 2
      %s240 = smul.addr %s239, 8
      %s241 = scalar_lea.vmem %s6, %s240
      %p242 = scmp.lt.s32.totalorder %s17, 3
      %s243 = scalar_select %p242, %s17, 3
      %s244 = smul.addr %s243, 65
      %s245 = smul.addr %s244, 4
      %s246 = scalar_lea.vmem %s0, %s245
      %p247 = scmp.lt.s32.totalorder %s17, 3
      %s248 = scalar_select %p247, %s17, 3
      %s249 = smul.addr %s248, 2
      %s250 = smul.addr %s249, 8
      %s251 = scalar_lea.vmem %s6, %s250
      %v253 = vld [vmem:[%s1] sm:$0xf]
      %v254 = vld [vmem:[%s246] sm:$0xff]
      %v255 = vld [vmem:[%s246 + $0x8] sm:$0xff]
      %v256 = vld [vmem:[%s246 + $0x10] sm:$0xff]
      %v257 = vld [vmem:[%s246 + $0x18] sm:$0xff]
      %v258 = vld [vmem:[%s246 + $0x20] sm:$0xff]
      %v259 = vld [vmem:[%s246 + $0x28] sm:$0xff]
      %v260 = vld [vmem:[%s246 + $0x30] sm:$0xf]
      %v261 = vld [vmem:[%s246 + $0x34] sm:$0xff]
      %v262 = vld [vmem:[%s246 + $0x3c] sm:$0xff]
      %v263 = vld [vmem:[%s246 + $0x44] sm:$0xff]
      %v264 = vld [vmem:[%s246 + $0x4c] sm:$0xff]
      %v265 = vld [vmem:[%s246 + $0x54] sm:$0xff]
      %v266 = vld [vmem:[%s246 + $0x5c] sm:$0xff]
      %v267 = vld [vmem:[%s246 + $0x64] sm:$0xf]
      %v268 = vld [vmem:[%s246 + $0x68] sm:$0xff]
      %v269 = vld [vmem:[%s246 + $0x70] sm:$0xff]
      %v270 = vld [vmem:[%s246 + $0x78] sm:$0xff]
      %v271 = vld [vmem:[%s246 + $0x80] sm:$0xff]
      %v272 = vld [vmem:[%s246 + $0x88] sm:$0xff]
      %v273 = vld [vmem:[%s246 + $0x90] sm:$0xff]
      %v274 = vld [vmem:[%s246 + $0x98] sm:$0xf]
      %v275 = vld [vmem:[%s246 + $0x9c] sm:$0xff]
      %v276 = vld [vmem:[%s246 + $0xa4] sm:$0xff]
      %v277 = vld [vmem:[%s246 + $0xac] sm:$0xff]
      %v278 = vld [vmem:[%s246 + $0xb4] sm:$0xff]
      %v279 = vld [vmem:[%s246 + $0xbc] sm:$0xff]
      %v280 = vld [vmem:[%s246 + $0xc4] sm:$0xff]
      %v281 = vld [vmem:[%s246 + $0xcc] sm:$0xf]
      %v282 = vld [vmem:[%s246 + $0xd0] sm:$0x33]
      %v283 = vld [vmem:[%s246 + $0xd8] sm:$0x33]
      %v284 = vld [vmem:[%s246 + $0xe0] sm:$0x33]
      %v285 = vld [vmem:[%s246 + $0xe8] sm:$0x33]
      %v286 = vld [vmem:[%s246 + $0xf0] sm:$0x33]
      %v287 = vld [vmem:[%s246 + $0xf8] sm:$0x33]
      %v288 = vld [vmem:[%s246 + $0x100] sm:$0x3]
      %v324 = vunpack.c.l.b16 %v254
      %v325 = vunpack.c.h.b16 %v254
      %v326 = vunpack.c.l.b16 %v255
      %v327 = vunpack.c.h.b16 %v255
      %v328 = vunpack.c.l.b16 %v256
      %v329 = vunpack.c.h.b16 %v256
      %v330 = vunpack.c.l.b16 %v257
      %v331 = vunpack.c.h.b16 %v257
      %v332 = vunpack.c.l.b16 %v258
      %v333 = vunpack.c.h.b16 %v258
      %v334 = vunpack.c.l.b16 %v259
      %v335 = vunpack.c.h.b16 %v259
      %v336 = vunpack.c.l.b16 %v260
      %v337 = vunpack.c.l.b16 %v261
      %v338 = vunpack.c.h.b16 %v261
      %v339 = vunpack.c.l.b16 %v262
      %v340 = vunpack.c.h.b16 %v262
      %v341 = vunpack.c.l.b16 %v263
      %v342 = vunpack.c.h.b16 %v263
      %v343 = vunpack.c.l.b16 %v264
      %v344 = vunpack.c.h.b16 %v264
      %v345 = vunpack.c.l.b16 %v265
      %v346 = vunpack.c.h.b16 %v265
      %v347 = vunpack.c.l.b16 %v266
      %v348 = vunpack.c.h.b16 %v266
      %v349 = vunpack.c.l.b16 %v267
      %v350 = vunpack.c.l.b16 %v268
      %v351 = vunpack.c.h.b16 %v268
      %v352 = vunpack.c.l.b16 %v269
      %v353 = vunpack.c.h.b16 %v269
      %v354 = vunpack.c.l.b16 %v270
      %v355 = vunpack.c.h.b16 %v270
      %v356 = vunpack.c.l.b16 %v271
      %v357 = vunpack.c.h.b16 %v271
      %v358 = vunpack.c.l.b16 %v272
      %v359 = vunpack.c.h.b16 %v272
      %v360 = vunpack.c.l.b16 %v273
      %v361 = vunpack.c.h.b16 %v273
      %v362 = vunpack.c.l.b16 %v274
      %v363 = vunpack.c.l.b16 %v275
      %v364 = vunpack.c.h.b16 %v275
      %v365 = vunpack.c.l.b16 %v276
      %v366 = vunpack.c.h.b16 %v276
      %v367 = vunpack.c.l.b16 %v277
      %v368 = vunpack.c.h.b16 %v277
      %v369 = vunpack.c.l.b16 %v278
      %v370 = vunpack.c.h.b16 %v278
      %v371 = vunpack.c.l.b16 %v279
      %v372 = vunpack.c.h.b16 %v279
      %v373 = vunpack.c.l.b16 %v280
      %v374 = vunpack.c.h.b16 %v280
      %v375 = vunpack.c.l.b16 %v281
      %v376 = vunpack.c.l.b16 %v282
      %v377 = vunpack.c.h.b16 %v282
      %v378 = vunpack.c.l.b16 %v283
      %v379 = vunpack.c.h.b16 %v283
      %v380 = vunpack.c.l.b16 %v284
      %v381 = vunpack.c.h.b16 %v284
      %v382 = vunpack.c.l.b16 %v285
      %v383 = vunpack.c.h.b16 %v285
      %v384 = vunpack.c.l.b16 %v286
      %v385 = vunpack.c.h.b16 %v286
      %v386 = vunpack.c.l.b16 %v287
      %v387 = vunpack.c.h.b16 %v287
      %v388 = vunpack.c.l.b16 %v288
      %v389 = vpack.c.b16 %v337, %v324
      %v390 = vpack.c.b16 %v338, %v325
      %v391 = vpack.c.b16 %v339, %v326
      %v392 = vpack.c.b16 %v340, %v327
      %v393 = vpack.c.b16 %v341, %v328
      %v394 = vpack.c.b16 %v342, %v329
      %v395 = vpack.c.b16 %v343, %v330
      %v396 = vpack.c.b16 %v344, %v331
      %v397 = vpack.c.b16 %v345, %v332
      %v398 = vpack.c.b16 %v346, %v333
      %v399 = vpack.c.b16 %v347, %v334
      %v400 = vpack.c.b16 %v348, %v335
      %v401 = vpack.c.b16 %v349, %v336
      %v402 = vpack.c.b16 %v363, %v350
      %v403 = vpack.c.b16 %v364, %v351
      %v404 = vpack.c.b16 %v365, %v352
      %v405 = vpack.c.b16 %v366, %v353
      %v406 = vpack.c.b16 %v367, %v354
      %v407 = vpack.c.b16 %v368, %v355
      %v408 = vpack.c.b16 %v369, %v356
      %v409 = vpack.c.b16 %v370, %v357
      %v410 = vpack.c.b16 %v371, %v358
      %v411 = vpack.c.b16 %v372, %v359
      %v412 = vpack.c.b16 %v373, %v360
      %v413 = vpack.c.b16 %v374, %v361
      %v414 = vpack.c.b16 %v375, %v362
      %v415 = vpack.c.b16 %v376, %v376
      %v416 = vpack.c.b16 %v377, %v377
      %v417 = vpack.c.b16 %v378, %v378
      %v418 = vpack.c.b16 %v379, %v379
      %v419 = vpack.c.b16 %v380, %v380
      %v420 = vpack.c.b16 %v381, %v381
      %v421 = vpack.c.b16 %v382, %v382
      %v422 = vpack.c.b16 %v383, %v383
      %v423 = vpack.c.b16 %v384, %v384
      %v424 = vpack.c.b16 %v385, %v385
      %v425 = vpack.c.b16 %v386, %v386
      %v426 = vpack.c.b16 %v387, %v387
      %v427 = vpack.c.b16 %v388, %v388
      %vm454 = vcmask 293888
      %v456 = vsel %vm454, %v253, 0
      %vm458 = vcmask 1041408
      %v460 = vsel %vm458, %v415, 0
      %v463 = vsel %vm458, %v416, 0
      %v466 = vsel %vm458, %v417, 0
      %v469 = vsel %vm458, %v418, 0
      %v472 = vsel %vm458, %v419, 0
      %v475 = vsel %vm458, %v420, 0
      %v478 = vsel %vm458, %v421, 0
      %v481 = vsel %vm458, %v422, 0
      %v484 = vsel %vm458, %v423, 0
      %v487 = vsel %vm458, %v424, 0
      %v490 = vsel %vm458, %v425, 0
      %v493 = vsel %vm458, %v426, 0
      %v496 = vsel %vm458, %v427, 0
      %498 = vmatpush.bf16.msra.mxu0 0
      %499 = vmatpush.bf16.msra.mxu0 0
      %500 = vmatpush.bf16.msra.mxu0 0
      %501 = vmatpush.bf16.msra.mxu0 0
      %502 = vmatpush.bf16.msra.mxu0 0
      %503 = vmatpush.bf16.msra.mxu0 %v460
      %504 = vmatpush.bf16.msra.mxu0 %v402
      %505 = vmatpush.bf16.msra.mxu0 %v389
      %506 = vmatmul.bf16.gmra.mxu0 %v456
      %v507 = vpop.f32.mrf.mxu0
      %v508 = vadd.f32 0.0, %v507
      %v509 = vpop.f32.mrf.mxu0
      %510 = vdwg.mxu0
      %511 = vmatpush.bf16.msra.mxu0 0
      %512 = vmatpush.bf16.msra.mxu0 0
      %513 = vmatpush.bf16.msra.mxu0 0
      %514 = vmatpush.bf16.msra.mxu0 0
      %515 = vmatpush.bf16.msra.mxu0 0
      %516 = vmatpush.bf16.msra.mxu0 %v463
      %517 = vmatpush.bf16.msra.mxu0 %v403
      %518 = vmatpush.bf16.msra.mxu0 %v390
      %519 = vmatmul.bf16.gmra.mxu0 %v456
      %v520 = vpop.f32.mrf.mxu0
      %v521 = vadd.f32 0.0, %v520
      %v522 = vpop.f32.mrf.mxu0
      %523 = vdwg.mxu0
      %524 = vmatpush.bf16.msra.mxu0 0
      %525 = vmatpush.bf16.msra.mxu0 0
      %526 = vmatpush.bf16.msra.mxu0 0
      %527 = vmatpush.bf16.msra.mxu0 0
      %528 = vmatpush.bf16.msra.mxu0 0
      %529 = vmatpush.bf16.msra.mxu0 %v466
      %530 = vmatpush.bf16.msra.mxu0 %v404
      %531 = vmatpush.bf16.msra.mxu0 %v391
      %532 = vmatmul.bf16.gmra.mxu0 %v456
      %v533 = vpop.f32.mrf.mxu0
      %v534 = vadd.f32 0.0, %v533
      %v535 = vpop.f32.mrf.mxu0
      %536 = vdwg.mxu0
      %537 = vmatpush.bf16.msra.mxu0 0
      %538 = vmatpush.bf16.msra.mxu0 0
      %539 = vmatpush.bf16.msra.mxu0 0
      %540 = vmatpush.bf16.msra.mxu0 0
      %541 = vmatpush.bf16.msra.mxu0 0
      %542 = vmatpush.bf16.msra.mxu0 %v469
      %543 = vmatpush.bf16.msra.mxu0 %v405
      %544 = vmatpush.bf16.msra.mxu0 %v392
      %545 = vmatmul.bf16.gmra.mxu0 %v456
      %v546 = vpop.f32.mrf.mxu0
      %v547 = vadd.f32 0.0, %v546
      %v548 = vpop.f32.mrf.mxu0
      %549 = vdwg.mxu0
      %550 = vmatpush.bf16.msra.mxu0 0
      %551 = vmatpush.bf16.msra.mxu0 0
      %552 = vmatpush.bf16.msra.mxu0 0
      %553 = vmatpush.bf16.msra.mxu0 0
      %554 = vmatpush.bf16.msra.mxu0 0
      %555 = vmatpush.bf16.msra.mxu0 %v472
      %556 = vmatpush.bf16.msra.mxu0 %v406
      %557 = vmatpush.bf16.msra.mxu0 %v393
      %558 = vmatmul.bf16.gmra.mxu0 %v456
      %v559 = vpop.f32.mrf.mxu0
      %v560 = vadd.f32 0.0, %v559
      %v561 = vpop.f32.mrf.mxu0
      %562 = vdwg.mxu0
      %563 = vmatpush.bf16.msra.mxu0 0
      %564 = vmatpush.bf16.msra.mxu0 0
      %565 = vmatpush.bf16.msra.mxu0 0
      %566 = vmatpush.bf16.msra.mxu0 0
      %567 = vmatpush.bf16.msra.mxu0 0
      %568 = vmatpush.bf16.msra.mxu0 %v475
      %569 = vmatpush.bf16.msra.mxu0 %v407
      %570 = vmatpush.bf16.msra.mxu0 %v394
      %571 = vmatmul.bf16.gmra.mxu0 %v456
      %v572 = vpop.f32.mrf.mxu0
      %v573 = vadd.f32 0.0, %v572
      %v574 = vpop.f32.mrf.mxu0
      %575 = vdwg.mxu0
      %576 = vmatpush.bf16.msra.mxu0 0
      %577 = vmatpush.bf16.msra.mxu0 0
      %578 = vmatpush.bf16.msra.mxu0 0
      %579 = vmatpush.bf16.msra.mxu0 0
      %580 = vmatpush.bf16.msra.mxu0 0
      %581 = vmatpush.bf16.msra.mxu0 %v478
      %582 = vmatpush.bf16.msra.mxu0 %v408
      %583 = vmatpush.bf16.msra.mxu0 %v395
      %584 = vmatmul.bf16.gmra.mxu0 %v456
      %v585 = vpop.f32.mrf.mxu0
      %v586 = vadd.f32 0.0, %v585
      %v587 = vpop.f32.mrf.mxu0
      %588 = vdwg.mxu0
      %589 = vmatpush.bf16.msra.mxu0 0
      %590 = vmatpush.bf16.msra.mxu0 0
      %591 = vmatpush.bf16.msra.mxu0 0
      %592 = vmatpush.bf16.msra.mxu0 0
      %593 = vmatpush.bf16.msra.mxu0 0
      %594 = vmatpush.bf16.msra.mxu0 %v481
      %595 = vmatpush.bf16.msra.mxu0 %v409
      %596 = vmatpush.bf16.msra.mxu0 %v396
      %597 = vmatmul.bf16.gmra.mxu0 %v456
      %v598 = vpop.f32.mrf.mxu0
      %v599 = vadd.f32 0.0, %v598
      %v600 = vpop.f32.mrf.mxu0
      %601 = vdwg.mxu0
      %602 = vmatpush.bf16.msra.mxu0 0
      %603 = vmatpush.bf16.msra.mxu0 0
      %604 = vmatpush.bf16.msra.mxu0 0
      %605 = vmatpush.bf16.msra.mxu0 0
      %606 = vmatpush.bf16.msra.mxu0 0
      %607 = vmatpush.bf16.msra.mxu0 %v484
      %608 = vmatpush.bf16.msra.mxu0 %v410
      %609 = vmatpush.bf16.msra.mxu0 %v397
      %610 = vmatmul.bf16.gmra.mxu0 %v456
      %v611 = vpop.f32.mrf.mxu0
      %v612 = vadd.f32 0.0, %v611
      %v613 = vpop.f32.mrf.mxu0
      %614 = vdwg.mxu0
      %615 = vmatpush.bf16.msra.mxu0 0
      %616 = vmatpush.bf16.msra.mxu0 0
      %617 = vmatpush.bf16.msra.mxu0 0
      %618 = vmatpush.bf16.msra.mxu0 0
      %619 = vmatpush.bf16.msra.mxu0 0
      %620 = vmatpush.bf16.msra.mxu0 %v487
      %621 = vmatpush.bf16.msra.mxu0 %v411
      %622 = vmatpush.bf16.msra.mxu0 %v398
      %623 = vmatmul.bf16.gmra.mxu0 %v456
      %v624 = vpop.f32.mrf.mxu0
      %v625 = vadd.f32 0.0, %v624
      %v626 = vpop.f32.mrf.mxu0
      %627 = vdwg.mxu0
      %628 = vmatpush.bf16.msra.mxu0 0
      %629 = vmatpush.bf16.msra.mxu0 0
      %630 = vmatpush.bf16.msra.mxu0 0
      %631 = vmatpush.bf16.msra.mxu0 0
      %632 = vmatpush.bf16.msra.mxu0 0
      %633 = vmatpush.bf16.msra.mxu0 %v490
      %634 = vmatpush.bf16.msra.mxu0 %v412
      %635 = vmatpush.bf16.msra.mxu0 %v399
      %636 = vmatmul.bf16.gmra.mxu0 %v456
      %v637 = vpop.f32.mrf.mxu0
      %v638 = vadd.f32 0.0, %v637
      %v639 = vpop.f32.mrf.mxu0
      %640 = vdwg.mxu0
      %641 = vmatpush.bf16.msra.mxu0 0
      %642 = vmatpush.bf16.msra.mxu0 0
      %643 = vmatpush.bf16.msra.mxu0 0
      %644 = vmatpush.bf16.msra.mxu0 0
      %645 = vmatpush.bf16.msra.mxu0 0
      %646 = vmatpush.bf16.msra.mxu0 %v493
      %647 = vmatpush.bf16.msra.mxu0 %v413
      %648 = vmatpush.bf16.msra.mxu0 %v400
      %649 = vmatmul.bf16.gmra.mxu0 %v456
      %v650 = vpop.f32.mrf.mxu0
      %v651 = vadd.f32 0.0, %v650
      %v652 = vpop.f32.mrf.mxu0
      %653 = vdwg.mxu0
      %654 = vmatpush.bf16.msra.mxu0 0
      %655 = vmatpush.bf16.msra.mxu0 0
      %656 = vmatpush.bf16.msra.mxu0 0
      %657 = vmatpush.bf16.msra.mxu0 0
      %658 = vmatpush.bf16.msra.mxu0 0
      %659 = vmatpush.bf16.msra.mxu0 %v496
      %660 = vmatpush.bf16.msra.mxu0 %v414
      %661 = vmatpush.bf16.msra.mxu0 %v401
      %662 = vmatmul.bf16.gmra.mxu0 %v456
      %v663 = vpop.f32.mrf.mxu0
      %v664 = vadd.f32 0.0, %v663
      %v665 = vpop.f32.mrf.mxu0
      %666 = vdwg.mxu0
      %v667 = vmax.f32 %v508, 0.0
      %v668 = vmax.f32 %v521, 0.0
      %v669 = vmax.f32 %v534, 0.0
      %v670 = vmax.f32 %v547, 0.0
      %v671 = vmax.f32 %v560, 0.0
      %v672 = vmax.f32 %v573, 0.0
      %v673 = vmax.f32 %v586, 0.0
      %v674 = vmax.f32 %v599, 0.0
      %v675 = vmax.f32 %v612, 0.0
      %v676 = vmax.f32 %v625, 0.0
      %v677 = vmax.f32 %v638, 0.0
      %v678 = vmax.f32 %v651, 0.0
      %v679 = vmax.f32 %v664, 0.0
      %v680 = vpack.c.bf16 %v667, %v667
      %v681 = vpack.c.bf16 %v668, %v668
      %v682 = vpack.c.bf16 %v669, %v669
      %v683 = vpack.c.bf16 %v670, %v670
      %v684 = vpack.c.bf16 %v671, %v671
      %v685 = vpack.c.bf16 %v672, %v672
      %v686 = vpack.c.bf16 %v673, %v673
      %v687 = vpack.c.bf16 %v674, %v674
      %v688 = vpack.c.bf16 %v675, %v675
      %v689 = vpack.c.bf16 %v676, %v676
      %v690 = vpack.c.bf16 %v677, %v677
      %v691 = vpack.c.bf16 %v678, %v678
      %v692 = vpack.c.bf16 %v679, %v679
      %v693 = vld [vmem:[%s2] sm:$0xff]
      %v694 = vld [vmem:[%s2 + $0x8] sm:$0xff]
      %v695 = vld [vmem:[%s2 + $0x10] sm:$0xff]
      %v696 = vld [vmem:[%s2 + $0x18] sm:$0xff]
      %v697 = vld [vmem:[%s2 + $0x20] sm:$0xff]
      %v698 = vld [vmem:[%s2 + $0x28] sm:$0xff]
      %v699 = vld [vmem:[%s2 + $0x30] sm:$0xff]
      %v700 = vld [vmem:[%s2 + $0x38] sm:$0xff]
      %v701 = vld [vmem:[%s2 + $0x40] sm:$0xff]
      %v702 = vld [vmem:[%s2 + $0x48] sm:$0xff]
      %v703 = vld [vmem:[%s2 + $0x50] sm:$0xff]
      %v704 = vld [vmem:[%s2 + $0x58] sm:$0xff]
      %v705 = vld [vmem:[%s2 + $0x60] sm:$0xff]
      %v706 = vld [vmem:[%s2 + $0x68] sm:$0xff]
      %v707 = vld [vmem:[%s2 + $0x70] sm:$0xff]
      %v708 = vld [vmem:[%s2 + $0x78] sm:$0xff]
      %v709 = vld [vmem:[%s2 + $0x80] sm:$0xff]
      %v710 = vld [vmem:[%s2 + $0x88] sm:$0xff]
      %v711 = vld [vmem:[%s2 + $0x90] sm:$0xff]
      %v712 = vld [vmem:[%s2 + $0x98] sm:$0xff]
      %v713 = vld [vmem:[%s2 + $0xa0] sm:$0xff]
      %v714 = vld [vmem:[%s2 + $0xa8] sm:$0xff]
      %v715 = vld [vmem:[%s2 + $0xb0] sm:$0xff]
      %v716 = vld [vmem:[%s2 + $0xb8] sm:$0xff]
      %v717 = vld [vmem:[%s2 + $0xc0] sm:$0xff]
      %v718 = vld [vmem:[%s2 + $0xc8] sm:$0xff]
      %v719 = vld [vmem:[%s2 + $0xd0] sm:$0xff]
      %v720 = vld [vmem:[%s2 + $0xd8] sm:$0xff]
      %v721 = vld [vmem:[%s2 + $0xe0] sm:$0xff]
      %v722 = vld [vmem:[%s2 + $0xe8] sm:$0xff]
      %v723 = vld [vmem:[%s2 + $0xf0] sm:$0xff]
      %v724 = vld [vmem:[%s2 + $0xf8] sm:$0xff]
      %v725 = vld [vmem:[%s2 + $0x100] sm:$0xff]
      %v726 = vld [vmem:[%s2 + $0x108] sm:$0xff]
      %v727 = vld [vmem:[%s2 + $0x110] sm:$0xff]
      %v728 = vld [vmem:[%s2 + $0x118] sm:$0xff]
      %v729 = vld [vmem:[%s2 + $0x120] sm:$0xff]
      %v730 = vld [vmem:[%s2 + $0x128] sm:$0xff]
      %v731 = vld [vmem:[%s2 + $0x130] sm:$0xff]
      %v732 = vld [vmem:[%s2 + $0x138] sm:$0xff]
      %v733 = vld [vmem:[%s2 + $0x140] sm:$0xff]
      %v734 = vld [vmem:[%s2 + $0x148] sm:$0xff]
      %v735 = vld [vmem:[%s2 + $0x150] sm:$0xff]
      %v736 = vld [vmem:[%s2 + $0x158] sm:$0xff]
      %v737 = vld [vmem:[%s2 + $0x160] sm:$0xff]
      %v738 = vld [vmem:[%s2 + $0x168] sm:$0xff]
      %v739 = vld [vmem:[%s2 + $0x170] sm:$0xff]
      %v740 = vld [vmem:[%s2 + $0x178] sm:$0xff]
      %v741 = vld [vmem:[%s2 + $0x180] sm:$0xff]
      %v742 = vld [vmem:[%s2 + $0x188] sm:$0xff]
      %v743 = vld [vmem:[%s2 + $0x190] sm:$0xff]
      %v744 = vld [vmem:[%s2 + $0x198] sm:$0xff]
      %v745 = vld [vmem:[%s2 + $0x1a0] sm:$0xff]
      %v746 = vld [vmem:[%s2 + $0x1a8] sm:$0xff]
      %v747 = vld [vmem:[%s2 + $0x1b0] sm:$0xff]
      %v748 = vld [vmem:[%s2 + $0x1b8] sm:$0xff]
      %v749 = vld [vmem:[%s2 + $0x1c0] sm:$0xff]
      %v750 = vld [vmem:[%s2 + $0x1c8] sm:$0xff]
      %v751 = vld [vmem:[%s2 + $0x1d0] sm:$0xff]
      %v752 = vld [vmem:[%s2 + $0x1d8] sm:$0xff]
      %v753 = vld [vmem:[%s2 + $0x1e0] sm:$0xff]
      %v754 = vld [vmem:[%s2 + $0x1e8] sm:$0xff]
      %v755 = vld [vmem:[%s2 + $0x1f0] sm:$0xff]
      %v756 = vld [vmem:[%s2 + $0x1f8] sm:$0xff]
      %v757 = vld [vmem:[%s2 + $0x200] sm:$0xff]
      %v758 = vld [vmem:[%s2 + $0x208] sm:$0xff]
      %v759 = vld [vmem:[%s2 + $0x210] sm:$0xff]
      %v760 = vld [vmem:[%s2 + $0x218] sm:$0xff]
      %v761 = vld [vmem:[%s2 + $0x220] sm:$0xff]
      %v762 = vld [vmem:[%s2 + $0x228] sm:$0xff]
      %v763 = vld [vmem:[%s2 + $0x230] sm:$0xff]
      %v764 = vld [vmem:[%s2 + $0x238] sm:$0xff]
      %v765 = vld [vmem:[%s2 + $0x240] sm:$0xff]
      %v766 = vld [vmem:[%s2 + $0x248] sm:$0xff]
      %v767 = vld [vmem:[%s2 + $0x250] sm:$0xff]
      %v768 = vld [vmem:[%s2 + $0x258] sm:$0xff]
      %v769 = vld [vmem:[%s2 + $0x260] sm:$0xff]
      %v770 = vld [vmem:[%s2 + $0x268] sm:$0xff]
      %v771 = vld [vmem:[%s2 + $0x270] sm:$0xff]
      %v772 = vld [vmem:[%s2 + $0x278] sm:$0xff]
      %v773 = vld [vmem:[%s2 + $0x280] sm:$0xff]
      %v774 = vld [vmem:[%s2 + $0x288] sm:$0xff]
      %v775 = vld [vmem:[%s2 + $0x290] sm:$0xff]
      %v776 = vld [vmem:[%s2 + $0x298] sm:$0xff]
      %v777 = vld [vmem:[%s2 + $0x2a0] sm:$0xff]
      %v778 = vld [vmem:[%s2 + $0x2a8] sm:$0xff]
      %v779 = vld [vmem:[%s2 + $0x2b0] sm:$0xff]
      %v780 = vld [vmem:[%s2 + $0x2b8] sm:$0xff]
      %v781 = vld [vmem:[%s2 + $0x2c0] sm:$0xff]
      %v782 = vld [vmem:[%s2 + $0x2c8] sm:$0xff]
      %v783 = vld [vmem:[%s2 + $0x2d0] sm:$0xff]
      %v784 = vld [vmem:[%s2 + $0x2d8] sm:$0xff]
      %v785 = vld [vmem:[%s2 + $0x2e0] sm:$0xff]
      %v786 = vld [vmem:[%s2 + $0x2e8] sm:$0xff]
      %v787 = vld [vmem:[%s2 + $0x2f0] sm:$0xff]
      %v788 = vld [vmem:[%s2 + $0x2f8] sm:$0xff]
      %v789 = vld [vmem:[%s2 + $0x300] sm:$0xff]
      %v790 = vld [vmem:[%s2 + $0x308] sm:$0xff]
      %v791 = vld [vmem:[%s2 + $0x310] sm:$0xff]
      %v792 = vld [vmem:[%s2 + $0x318] sm:$0xff]
      %v793 = vld [vmem:[%s2 + $0x320] sm:$0xff]
      %v794 = vld [vmem:[%s2 + $0x328] sm:$0xff]
      %v795 = vld [vmem:[%s2 + $0x330] sm:$0xff]
      %v796 = vld [vmem:[%s2 + $0x338] sm:$0xff]
      %v797 = vld [vmem:[%s2 + $0x340] sm:$0xff]
      %v798 = vld [vmem:[%s2 + $0x348] sm:$0xff]
      %v799 = vld [vmem:[%s2 + $0x350] sm:$0xff]
      %v800 = vld [vmem:[%s2 + $0x358] sm:$0xff]
      %v801 = vld [vmem:[%s2 + $0x360] sm:$0xff]
      %v802 = vld [vmem:[%s2 + $0x368] sm:$0xff]
      %v803 = vld [vmem:[%s2 + $0x370] sm:$0xff]
      %v804 = vld [vmem:[%s2 + $0x378] sm:$0xff]
      %v805 = vld [vmem:[%s2 + $0x380] sm:$0xff]
      %v806 = vld [vmem:[%s2 + $0x388] sm:$0xff]
      %v807 = vld [vmem:[%s2 + $0x390] sm:$0xff]
      %v808 = vld [vmem:[%s2 + $0x398] sm:$0xff]
      %v809 = vld [vmem:[%s2 + $0x3a0] sm:$0xff]
      %v810 = vld [vmem:[%s2 + $0x3a8] sm:$0xff]
      %v811 = vld [vmem:[%s2 + $0x3b0] sm:$0xff]
      %v812 = vld [vmem:[%s2 + $0x3b8] sm:$0xff]
      %v813 = vld [vmem:[%s2 + $0x3c0] sm:$0xff]
      %v814 = vld [vmem:[%s2 + $0x3c8] sm:$0xff]
      %v815 = vld [vmem:[%s2 + $0x3d0] sm:$0xff]
      %v816 = vld [vmem:[%s2 + $0x3d8] sm:$0xff]
      %v817 = vld [vmem:[%s2 + $0x3e0] sm:$0xff]
      %v818 = vld [vmem:[%s2 + $0x3e8] sm:$0xff]
      %v819 = vld [vmem:[%s2 + $0x3f0] sm:$0xff]
      %v820 = vld [vmem:[%s2 + $0x3f8] sm:$0xff]
      %v821 = vld [vmem:[%s2 + $0x400] sm:$0xff]
      %v822 = vld [vmem:[%s2 + $0x408] sm:$0xff]
      %v823 = vld [vmem:[%s2 + $0x410] sm:$0xff]
      %v824 = vld [vmem:[%s2 + $0x418] sm:$0xff]
      %v825 = vld [vmem:[%s2 + $0x420] sm:$0xff]
      %v826 = vld [vmem:[%s2 + $0x428] sm:$0xff]
      %v827 = vld [vmem:[%s2 + $0x430] sm:$0xff]
      %v828 = vld [vmem:[%s2 + $0x438] sm:$0xff]
      %v829 = vld [vmem:[%s2 + $0x440] sm:$0xff]
      %v830 = vld [vmem:[%s2 + $0x448] sm:$0xff]
      %v831 = vld [vmem:[%s2 + $0x450] sm:$0xff]
      %v832 = vld [vmem:[%s2 + $0x458] sm:$0xff]
      %v833 = vld [vmem:[%s2 + $0x460] sm:$0xff]
      %v834 = vld [vmem:[%s2 + $0x468] sm:$0xff]
      %v835 = vld [vmem:[%s2 + $0x470] sm:$0xff]
      %v836 = vld [vmem:[%s2 + $0x478] sm:$0xff]
      %v837 = vld [vmem:[%s2 + $0x480] sm:$0xff]
      %v838 = vld [vmem:[%s2 + $0x488] sm:$0xff]
      %v839 = vld [vmem:[%s2 + $0x490] sm:$0xff]
      %v840 = vld [vmem:[%s2 + $0x498] sm:$0xff]
      %v841 = vld [vmem:[%s2 + $0x4a0] sm:$0xff]
      %v842 = vld [vmem:[%s2 + $0x4a8] sm:$0xff]
      %v843 = vld [vmem:[%s2 + $0x4b0] sm:$0xff]
      %v844 = vld [vmem:[%s2 + $0x4b8] sm:$0xff]
      %v845 = vld [vmem:[%s2 + $0x4c0] sm:$0xff]
      %v846 = vld [vmem:[%s2 + $0x4c8] sm:$0xff]
      %v847 = vld [vmem:[%s2 + $0x4d0] sm:$0xff]
      %v848 = vld [vmem:[%s2 + $0x4d8] sm:$0xff]
      %v849 = vld [vmem:[%s2 + $0x4e0] sm:$0xff]
      %v850 = vld [vmem:[%s2 + $0x4e8] sm:$0xff]
      %v851 = vld [vmem:[%s2 + $0x4f0] sm:$0xff]
      %v852 = vld [vmem:[%s2 + $0x4f8] sm:$0xff]
      %v853 = vld [vmem:[%s2 + $0x500] sm:$0xff]
      %v854 = vld [vmem:[%s2 + $0x508] sm:$0xff]
      %v855 = vld [vmem:[%s2 + $0x510] sm:$0xff]
      %v856 = vld [vmem:[%s2 + $0x518] sm:$0xff]
      %v857 = vld [vmem:[%s2 + $0x520] sm:$0xff]
      %v858 = vld [vmem:[%s2 + $0x528] sm:$0xff]
      %v859 = vld [vmem:[%s2 + $0x530] sm:$0xff]
      %v860 = vld [vmem:[%s2 + $0x538] sm:$0xff]
      %v861 = vld [vmem:[%s2 + $0x540] sm:$0xff]
      %v862 = vld [vmem:[%s2 + $0x548] sm:$0xff]
      %v863 = vld [vmem:[%s2 + $0x550] sm:$0xff]
      %v864 = vld [vmem:[%s2 + $0x558] sm:$0xff]
      %v865 = vld [vmem:[%s2 + $0x560] sm:$0xff]
      %v866 = vld [vmem:[%s2 + $0x568] sm:$0xff]
      %v867 = vld [vmem:[%s2 + $0x570] sm:$0xff]
      %v868 = vld [vmem:[%s2 + $0x578] sm:$0xff]
      %v869 = vld [vmem:[%s2 + $0x580] sm:$0xff]
      %v870 = vld [vmem:[%s2 + $0x588] sm:$0xff]
      %v871 = vld [vmem:[%s2 + $0x590] sm:$0xff]
      %v872 = vld [vmem:[%s2 + $0x598] sm:$0xff]
      %v873 = vld [vmem:[%s2 + $0x5a0] sm:$0xff]
      %v874 = vld [vmem:[%s2 + $0x5a8] sm:$0xff]
      %v875 = vld [vmem:[%s2 + $0x5b0] sm:$0xff]
      %v876 = vld [vmem:[%s2 + $0x5b8] sm:$0xff]
      %v877 = vld [vmem:[%s2 + $0x5c0] sm:$0xff]
      %v878 = vld [vmem:[%s2 + $0x5c8] sm:$0xff]
      %v879 = vld [vmem:[%s2 + $0x5d0] sm:$0xff]
      %v880 = vld [vmem:[%s2 + $0x5d8] sm:$0xff]
      %v881 = vld [vmem:[%s2 + $0x5e0] sm:$0xff]
      %v882 = vld [vmem:[%s2 + $0x5e8] sm:$0xff]
      %v883 = vld [vmem:[%s2 + $0x5f0] sm:$0xff]
      %v884 = vld [vmem:[%s2 + $0x5f8] sm:$0xff]
      %v885 = vld [vmem:[%s2 + $0x600] sm:$0xff]
      %v886 = vld [vmem:[%s2 + $0x608] sm:$0xff]
      %v887 = vld [vmem:[%s2 + $0x610] sm:$0xff]
      %v888 = vld [vmem:[%s2 + $0x618] sm:$0xff]
      %v889 = vld [vmem:[%s2 + $0x620] sm:$0xff]
      %v890 = vld [vmem:[%s2 + $0x628] sm:$0xff]
      %v891 = vld [vmem:[%s2 + $0x630] sm:$0xff]
      %v892 = vld [vmem:[%s2 + $0x638] sm:$0xff]
      %v893 = vld [vmem:[%s2 + $0x640] sm:$0xff]
      %v894 = vld [vmem:[%s2 + $0x648] sm:$0xff]
      %v895 = vld [vmem:[%s2 + $0x650] sm:$0xff]
      %v896 = vld [vmem:[%s2 + $0x658] sm:$0xff]
      %v897 = vld [vmem:[%s2 + $0x660] sm:$0xff]
      %v898 = vld [vmem:[%s2 + $0x668] sm:$0xff]
      %v899 = vld [vmem:[%s2 + $0x670] sm:$0xff]
      %v900 = vld [vmem:[%s2 + $0x678] sm:$0xff]
      %v901 = vld [vmem:[%s2 + $0x680] sm:$0xff]
      %v902 = vld [vmem:[%s2 + $0x688] sm:$0xff]
      %v903 = vld [vmem:[%s2 + $0x690] sm:$0xff]
      %v904 = vld [vmem:[%s2 + $0x698] sm:$0xff]
      %v905 = vld [vmem:[%s2 + $0x6a0] sm:$0xff]
      %v906 = vld [vmem:[%s2 + $0x6a8] sm:$0xff]
      %v907 = vld [vmem:[%s2 + $0x6b0] sm:$0xff]
      %v908 = vld [vmem:[%s2 + $0x6b8] sm:$0xff]
      %v909 = vld [vmem:[%s2 + $0x6c0] sm:$0xff]
      %v910 = vld [vmem:[%s2 + $0x6c8] sm:$0xff]
      %v911 = vld [vmem:[%s2 + $0x6d0] sm:$0xff]
      %v912 = vld [vmem:[%s2 + $0x6d8] sm:$0xff]
      %v913 = vld [vmem:[%s2 + $0x6e0] sm:$0xff]
      %v914 = vld [vmem:[%s2 + $0x6e8] sm:$0xff]
      %v915 = vld [vmem:[%s2 + $0x6f0] sm:$0xff]
      %v916 = vld [vmem:[%s2 + $0x6f8] sm:$0xff]
      %v917 = vld [vmem:[%s2 + $0x700] sm:$0xff]
      %v918 = vld [vmem:[%s2 + $0x708] sm:$0xff]
      %v919 = vld [vmem:[%s2 + $0x710] sm:$0xff]
      %v920 = vld [vmem:[%s2 + $0x718] sm:$0xff]
      %v921 = vld [vmem:[%s2 + $0x720] sm:$0xff]
      %v922 = vld [vmem:[%s2 + $0x728] sm:$0xff]
      %v923 = vld [vmem:[%s2 + $0x730] sm:$0xff]
      %v924 = vld [vmem:[%s2 + $0x738] sm:$0xff]
      %v925 = vld [vmem:[%s2 + $0x740] sm:$0xff]
      %v926 = vld [vmem:[%s2 + $0x748] sm:$0xff]
      %v927 = vld [vmem:[%s2 + $0x750] sm:$0xff]
      %v928 = vld [vmem:[%s2 + $0x758] sm:$0xff]
      %v929 = vld [vmem:[%s2 + $0x760] sm:$0xff]
      %v930 = vld [vmem:[%s2 + $0x768] sm:$0xff]
      %v931 = vld [vmem:[%s2 + $0x770] sm:$0xff]
      %v932 = vld [vmem:[%s2 + $0x778] sm:$0xff]
      %v933 = vld [vmem:[%s2 + $0x780] sm:$0xff]
      %v934 = vld [vmem:[%s2 + $0x788] sm:$0xff]
      %v935 = vld [vmem:[%s2 + $0x790] sm:$0xff]
      %v936 = vld [vmem:[%s2 + $0x798] sm:$0xff]
      %v937 = vld [vmem:[%s2 + $0x7a0] sm:$0xff]
      %v938 = vld [vmem:[%s2 + $0x7a8] sm:$0xff]
      %v939 = vld [vmem:[%s2 + $0x7b0] sm:$0xff]
      %v940 = vld [vmem:[%s2 + $0x7b8] sm:$0xff]
      %v941 = vld [vmem:[%s2 + $0x7c0] sm:$0xff]
      %v942 = vld [vmem:[%s2 + $0x7c8] sm:$0xff]
      %v943 = vld [vmem:[%s2 + $0x7d0] sm:$0xff]
      %v944 = vld [vmem:[%s2 + $0x7d8] sm:$0xff]
      %v945 = vld [vmem:[%s2 + $0x7e0] sm:$0xff]
      %v946 = vld [vmem:[%s2 + $0x7e8] sm:$0xff]
      %v947 = vld [vmem:[%s2 + $0x7f0] sm:$0xff]
      %v948 = vld [vmem:[%s2 + $0x7f8] sm:$0xff]
      %v949 = vld [vmem:[%s2 + $0x800] sm:$0xff]
      %v950 = vld [vmem:[%s2 + $0x808] sm:$0xff]
      %v951 = vld [vmem:[%s2 + $0x810] sm:$0xff]
      %v952 = vld [vmem:[%s2 + $0x818] sm:$0xff]
      %v953 = vld [vmem:[%s2 + $0x820] sm:$0xff]
      %v954 = vld [vmem:[%s2 + $0x828] sm:$0xff]
      %v955 = vld [vmem:[%s2 + $0x830] sm:$0xff]
      %v956 = vld [vmem:[%s2 + $0x838] sm:$0xff]
      %v957 = vld [vmem:[%s2 + $0x840] sm:$0xff]
      %v958 = vld [vmem:[%s2 + $0x848] sm:$0xff]
      %v959 = vld [vmem:[%s2 + $0x850] sm:$0xff]
      %v960 = vld [vmem:[%s2 + $0x858] sm:$0xff]
      %v961 = vld [vmem:[%s2 + $0x860] sm:$0xff]
      %v962 = vld [vmem:[%s2 + $0x868] sm:$0xff]
      %v963 = vld [vmem:[%s2 + $0x870] sm:$0xff]
      %v964 = vld [vmem:[%s2 + $0x878] sm:$0xff]
      %v965 = vld [vmem:[%s2 + $0x880] sm:$0xff]
      %v966 = vld [vmem:[%s2 + $0x888] sm:$0xff]
      %v967 = vld [vmem:[%s2 + $0x890] sm:$0xff]
      %v968 = vld [vmem:[%s2 + $0x898] sm:$0xff]
      %v969 = vld [vmem:[%s2 + $0x8a0] sm:$0xff]
      %v970 = vld [vmem:[%s2 + $0x8a8] sm:$0xff]
      %v971 = vld [vmem:[%s2 + $0x8b0] sm:$0xff]
      %v972 = vld [vmem:[%s2 + $0x8b8] sm:$0xff]
      %v973 = vld [vmem:[%s2 + $0x8c0] sm:$0xff]
      %v974 = vld [vmem:[%s2 + $0x8c8] sm:$0xff]
      %v975 = vld [vmem:[%s2 + $0x8d0] sm:$0xff]
      %v976 = vld [vmem:[%s2 + $0x8d8] sm:$0xff]
      %v977 = vld [vmem:[%s2 + $0x8e0] sm:$0xff]
      %v978 = vld [vmem:[%s2 + $0x8e8] sm:$0xff]
      %v979 = vld [vmem:[%s2 + $0x8f0] sm:$0xff]
      %v980 = vld [vmem:[%s2 + $0x8f8] sm:$0xff]
      %v981 = vld [vmem:[%s2 + $0x900] sm:$0xff]
      %v982 = vld [vmem:[%s2 + $0x908] sm:$0xff]
      %v983 = vld [vmem:[%s2 + $0x910] sm:$0xff]
      %v984 = vld [vmem:[%s2 + $0x918] sm:$0xff]
      %v985 = vld [vmem:[%s2 + $0x920] sm:$0xff]
      %v986 = vld [vmem:[%s2 + $0x928] sm:$0xff]
      %v987 = vld [vmem:[%s2 + $0x930] sm:$0xff]
      %v988 = vld [vmem:[%s2 + $0x938] sm:$0xff]
      %v989 = vld [vmem:[%s2 + $0x940] sm:$0xff]
      %v990 = vld [vmem:[%s2 + $0x948] sm:$0xff]
      %v991 = vld [vmem:[%s2 + $0x950] sm:$0xff]
      %v992 = vld [vmem:[%s2 + $0x958] sm:$0xff]
      %v993 = vld [vmem:[%s2 + $0x960] sm:$0xff]
      %v994 = vld [vmem:[%s2 + $0x968] sm:$0xff]
      %v995 = vld [vmem:[%s2 + $0x970] sm:$0xff]
      %v996 = vld [vmem:[%s2 + $0x978] sm:$0xff]
      %v997 = vld [vmem:[%s2 + $0x980] sm:$0xff]
      %v998 = vld [vmem:[%s2 + $0x988] sm:$0xff]
      %v999 = vld [vmem:[%s2 + $0x990] sm:$0xff]
      %v1000 = vld [vmem:[%s2 + $0x998] sm:$0xff]
      %v1001 = vld [vmem:[%s2 + $0x9a0] sm:$0xff]
      %v1002 = vld [vmem:[%s2 + $0x9a8] sm:$0xff]
      %v1003 = vld [vmem:[%s2 + $0x9b0] sm:$0xff]
      %v1004 = vld [vmem:[%s2 + $0x9b8] sm:$0xff]
      %v1005 = vld [vmem:[%s2 + $0x9c0] sm:$0xff]
      %v1006 = vld [vmem:[%s2 + $0x9c8] sm:$0xff]
      %v1007 = vld [vmem:[%s2 + $0x9d0] sm:$0xff]
      %v1008 = vld [vmem:[%s2 + $0x9d8] sm:$0xff]
      %v1009 = vld [vmem:[%s2 + $0x9e0] sm:$0xff]
      %v1010 = vld [vmem:[%s2 + $0x9e8] sm:$0xff]
      %v1011 = vld [vmem:[%s2 + $0x9f0] sm:$0xff]
      %v1012 = vld [vmem:[%s2 + $0x9f8] sm:$0xff]
      %v1013 = vld [vmem:[%s2 + $0xa00] sm:$0xff]
      %v1014 = vld [vmem:[%s2 + $0xa08] sm:$0xff]
      %v1015 = vld [vmem:[%s2 + $0xa10] sm:$0xff]
      %v1016 = vld [vmem:[%s2 + $0xa18] sm:$0xff]
      %v1017 = vld [vmem:[%s2 + $0xa20] sm:$0xff]
      %v1018 = vld [vmem:[%s2 + $0xa28] sm:$0xff]
      %v1019 = vld [vmem:[%s2 + $0xa30] sm:$0xff]
      %v1020 = vld [vmem:[%s2 + $0xa38] sm:$0xff]
      %v1021 = vld [vmem:[%s2 + $0xa40] sm:$0xff]
      %v1022 = vld [vmem:[%s2 + $0xa48] sm:$0xff]
      %v1023 = vld [vmem:[%s2 + $0xa50] sm:$0xff]
      %v1024 = vld [vmem:[%s2 + $0xa58] sm:$0xff]
      %v1025 = vld [vmem:[%s2 + $0xa60] sm:$0xff]
      %v1026 = vld [vmem:[%s2 + $0xa68] sm:$0xff]
      %v1027 = vld [vmem:[%s2 + $0xa70] sm:$0xff]
      %v1028 = vld [vmem:[%s2 + $0xa78] sm:$0xff]
      %v1029 = vld [vmem:[%s2 + $0xa80] sm:$0xff]
      %v1030 = vld [vmem:[%s2 + $0xa88] sm:$0xff]
      %v1031 = vld [vmem:[%s2 + $0xa90] sm:$0xff]
      %v1032 = vld [vmem:[%s2 + $0xa98] sm:$0xff]
      %v1033 = vld [vmem:[%s2 + $0xaa0] sm:$0xff]
      %v1034 = vld [vmem:[%s2 + $0xaa8] sm:$0xff]
      %v1035 = vld [vmem:[%s2 + $0xab0] sm:$0xff]
      %v1036 = vld [vmem:[%s2 + $0xab8] sm:$0xff]
      %v1037 = vld [vmem:[%s2 + $0xac0] sm:$0xff]
      %v1038 = vld [vmem:[%s2 + $0xac8] sm:$0xff]
      %v1039 = vld [vmem:[%s2 + $0xad0] sm:$0xff]
      %v1040 = vld [vmem:[%s2 + $0xad8] sm:$0xff]
      %v1041 = vld [vmem:[%s2 + $0xae0] sm:$0xff]
      %v1042 = vld [vmem:[%s2 + $0xae8] sm:$0xff]
      %v1043 = vld [vmem:[%s2 + $0xaf0] sm:$0xff]
      %v1044 = vld [vmem:[%s2 + $0xaf8] sm:$0xff]
      %v1045 = vld [vmem:[%s2 + $0xb00] sm:$0xff]
      %v1046 = vld [vmem:[%s2 + $0xb08] sm:$0xff]
      %v1047 = vld [vmem:[%s2 + $0xb10] sm:$0xff]
      %v1048 = vld [vmem:[%s2 + $0xb18] sm:$0xff]
      %v1049 = vld [vmem:[%s2 + $0xb20] sm:$0xff]
      %v1050 = vld [vmem:[%s2 + $0xb28] sm:$0xff]
      %v1051 = vld [vmem:[%s2 + $0xb30] sm:$0xff]
      %v1052 = vld [vmem:[%s2 + $0xb38] sm:$0xff]
      %v1053 = vld [vmem:[%s2 + $0xb40] sm:$0xff]
      %v1054 = vld [vmem:[%s2 + $0xb48] sm:$0xff]
      %v1055 = vld [vmem:[%s2 + $0xb50] sm:$0xff]
      %v1056 = vld [vmem:[%s2 + $0xb58] sm:$0xff]
      %v1057 = vld [vmem:[%s2 + $0xb60] sm:$0xff]
      %v1058 = vld [vmem:[%s2 + $0xb68] sm:$0xff]
      %v1059 = vld [vmem:[%s2 + $0xb70] sm:$0xff]
      %v1060 = vld [vmem:[%s2 + $0xb78] sm:$0xff]
      %v1061 = vld [vmem:[%s2 + $0xb80] sm:$0xff]
      %v1062 = vld [vmem:[%s2 + $0xb88] sm:$0xff]
      %v1063 = vld [vmem:[%s2 + $0xb90] sm:$0xff]
      %v1064 = vld [vmem:[%s2 + $0xb98] sm:$0xff]
      %v1065 = vld [vmem:[%s2 + $0xba0] sm:$0xff]
      %v1066 = vld [vmem:[%s2 + $0xba8] sm:$0xff]
      %v1067 = vld [vmem:[%s2 + $0xbb0] sm:$0xff]
      %v1068 = vld [vmem:[%s2 + $0xbb8] sm:$0xff]
      %v1069 = vld [vmem:[%s2 + $0xbc0] sm:$0xff]
      %v1070 = vld [vmem:[%s2 + $0xbc8] sm:$0xff]
      %v1071 = vld [vmem:[%s2 + $0xbd0] sm:$0xff]
      %v1072 = vld [vmem:[%s2 + $0xbd8] sm:$0xff]
      %v1073 = vld [vmem:[%s2 + $0xbe0] sm:$0xff]
      %v1074 = vld [vmem:[%s2 + $0xbe8] sm:$0xff]
      %v1075 = vld [vmem:[%s2 + $0xbf0] sm:$0xff]
      %v1076 = vld [vmem:[%s2 + $0xbf8] sm:$0xff]
      %v1077 = vld [vmem:[%s2 + $0xc00] sm:$0xff]
      %v1078 = vld [vmem:[%s2 + $0xc08] sm:$0xff]
      %v1079 = vld [vmem:[%s2 + $0xc10] sm:$0xff]
      %v1080 = vld [vmem:[%s2 + $0xc18] sm:$0xff]
      %v1081 = vld [vmem:[%s2 + $0xc20] sm:$0xff]
      %v1082 = vld [vmem:[%s2 + $0xc28] sm:$0xff]
      %v1083 = vld [vmem:[%s2 + $0xc30] sm:$0xff]
      %v1084 = vld [vmem:[%s2 + $0xc38] sm:$0xff]
      %v1085 = vld [vmem:[%s2 + $0xc40] sm:$0xff]
      %v1086 = vld [vmem:[%s2 + $0xc48] sm:$0xff]
      %v1087 = vld [vmem:[%s2 + $0xc50] sm:$0xff]
      %v1088 = vld [vmem:[%s2 + $0xc58] sm:$0xff]
      %v1089 = vld [vmem:[%s2 + $0xc60] sm:$0xff]
      %v1090 = vld [vmem:[%s2 + $0xc68] sm:$0xff]
      %v1091 = vld [vmem:[%s2 + $0xc70] sm:$0xff]
      %v1092 = vld [vmem:[%s2 + $0xc78] sm:$0xff]
      %v1093 = vld [vmem:[%s2 + $0xc80] sm:$0xff]
      %v1094 = vld [vmem:[%s2 + $0xc88] sm:$0xff]
      %v1095 = vld [vmem:[%s2 + $0xc90] sm:$0xff]
      %v1096 = vld [vmem:[%s2 + $0xc98] sm:$0xff]
      %v1097 = vld [vmem:[%s2 + $0xca0] sm:$0xff]
      %v1098 = vld [vmem:[%s2 + $0xca8] sm:$0xff]
      %v1099 = vld [vmem:[%s2 + $0xcb0] sm:$0xff]
      %v1100 = vld [vmem:[%s2 + $0xcb8] sm:$0xff]
      %v1101 = vld [vmem:[%s2 + $0xcc0] sm:$0xff]
      %v1102 = vld [vmem:[%s2 + $0xcc8] sm:$0xff]
      %v1103 = vld [vmem:[%s2 + $0xcd0] sm:$0xff]
      %v1104 = vld [vmem:[%s2 + $0xcd8] sm:$0xff]
      %v1105 = vld [vmem:[%s2 + $0xce0] sm:$0xff]
      %v1106 = vld [vmem:[%s2 + $0xce8] sm:$0xff]
      %v1107 = vld [vmem:[%s2 + $0xcf0] sm:$0xff]
      %v1108 = vld [vmem:[%s2 + $0xcf8] sm:$0xff]
      %v1109 = vld [vmem:[%s2 + $0xd00] sm:$0xff]
      %v1110 = vld [vmem:[%s2 + $0xd08] sm:$0xff]
      %v1111 = vld [vmem:[%s2 + $0xd10] sm:$0xff]
      %v1112 = vld [vmem:[%s2 + $0xd18] sm:$0xff]
      %v1113 = vld [vmem:[%s2 + $0xd20] sm:$0xff]
      %v1114 = vld [vmem:[%s2 + $0xd28] sm:$0xff]
      %v1115 = vld [vmem:[%s2 + $0xd30] sm:$0xff]
      %v1116 = vld [vmem:[%s2 + $0xd38] sm:$0xff]
      %v1117 = vld [vmem:[%s2 + $0xd40] sm:$0xff]
      %v1118 = vld [vmem:[%s2 + $0xd48] sm:$0xff]
      %v1119 = vld [vmem:[%s2 + $0xd50] sm:$0xff]
      %v1120 = vld [vmem:[%s2 + $0xd58] sm:$0xff]
      %v1121 = vld [vmem:[%s2 + $0xd60] sm:$0xff]
      %v1122 = vld [vmem:[%s2 + $0xd68] sm:$0xff]
      %v1123 = vld [vmem:[%s2 + $0xd70] sm:$0xff]
      %v1124 = vld [vmem:[%s2 + $0xd78] sm:$0xff]
      %v1125 = vld [vmem:[%s2 + $0xd80] sm:$0xff]
      %v1126 = vld [vmem:[%s2 + $0xd88] sm:$0xff]
      %v1127 = vld [vmem:[%s2 + $0xd90] sm:$0xff]
      %v1128 = vld [vmem:[%s2 + $0xd98] sm:$0xff]
      %v1129 = vld [vmem:[%s2 + $0xda0] sm:$0xff]
      %v1130 = vld [vmem:[%s2 + $0xda8] sm:$0xff]
      %v1131 = vld [vmem:[%s2 + $0xdb0] sm:$0xff]
      %v1132 = vld [vmem:[%s2 + $0xdb8] sm:$0xff]
      %v1133 = vld [vmem:[%s2 + $0xdc0] sm:$0xff]
      %v1134 = vld [vmem:[%s2 + $0xdc8] sm:$0xff]
      %v1135 = vld [vmem:[%s2 + $0xdd0] sm:$0xff]
      %v1136 = vld [vmem:[%s2 + $0xdd8] sm:$0xff]
      %v1137 = vld [vmem:[%s2 + $0xde0] sm:$0xff]
      %v1138 = vld [vmem:[%s2 + $0xde8] sm:$0xff]
      %v1139 = vld [vmem:[%s2 + $0xdf0] sm:$0xff]
      %v1140 = vld [vmem:[%s2 + $0xdf8] sm:$0xff]
      %v1141 = vld [vmem:[%s2 + $0xe00] sm:$0xff]
      %v1142 = vld [vmem:[%s2 + $0xe08] sm:$0xff]
      %v1143 = vld [vmem:[%s2 + $0xe10] sm:$0xff]
      %v1144 = vld [vmem:[%s2 + $0xe18] sm:$0xff]
      %v1145 = vld [vmem:[%s2 + $0xe20] sm:$0xff]
      %v1146 = vld [vmem:[%s2 + $0xe28] sm:$0xff]
      %v1147 = vld [vmem:[%s2 + $0xe30] sm:$0xff]
      %v1148 = vld [vmem:[%s2 + $0xe38] sm:$0xff]
      %v1149 = vld [vmem:[%s2 + $0xe40] sm:$0xff]
      %v1150 = vld [vmem:[%s2 + $0xe48] sm:$0xff]
      %v1151 = vld [vmem:[%s2 + $0xe50] sm:$0xff]
      %v1152 = vld [vmem:[%s2 + $0xe58] sm:$0xff]
      %v1153 = vld [vmem:[%s2 + $0xe60] sm:$0xff]
      %v1154 = vld [vmem:[%s2 + $0xe68] sm:$0xff]
      %v1155 = vld [vmem:[%s2 + $0xe70] sm:$0xff]
      %v1156 = vld [vmem:[%s2 + $0xe78] sm:$0xff]
      %v1157 = vld [vmem:[%s2 + $0xe80] sm:$0xff]
      %v1158 = vld [vmem:[%s2 + $0xe88] sm:$0xff]
      %v1159 = vld [vmem:[%s2 + $0xe90] sm:$0xff]
      %v1160 = vld [vmem:[%s2 + $0xe98] sm:$0xff]
      %v1161 = vld [vmem:[%s2 + $0xea0] sm:$0xff]
      %v1162 = vld [vmem:[%s2 + $0xea8] sm:$0xff]
      %v1163 = vld [vmem:[%s2 + $0xeb0] sm:$0xff]
      %v1164 = vld [vmem:[%s2 + $0xeb8] sm:$0xff]
      %v1165 = vld [vmem:[%s2 + $0xec0] sm:$0xff]
      %v1166 = vld [vmem:[%s2 + $0xec8] sm:$0xff]
      %v1167 = vld [vmem:[%s2 + $0xed0] sm:$0xff]
      %v1168 = vld [vmem:[%s2 + $0xed8] sm:$0xff]
      %v1169 = vld [vmem:[%s2 + $0xee0] sm:$0xff]
      %v1170 = vld [vmem:[%s2 + $0xee8] sm:$0xff]
      %v1171 = vld [vmem:[%s2 + $0xef0] sm:$0xff]
      %v1172 = vld [vmem:[%s2 + $0xef8] sm:$0xff]
      %v1173 = vld [vmem:[%s2 + $0xf00] sm:$0xff]
      %v1174 = vld [vmem:[%s2 + $0xf08] sm:$0xff]
      %v1175 = vld [vmem:[%s2 + $0xf10] sm:$0xff]
      %v1176 = vld [vmem:[%s2 + $0xf18] sm:$0xff]
      %v1177 = vld [vmem:[%s2 + $0xf20] sm:$0xff]
      %v1178 = vld [vmem:[%s2 + $0xf28] sm:$0xff]
      %v1179 = vld [vmem:[%s2 + $0xf30] sm:$0xff]
      %v1180 = vld [vmem:[%s2 + $0xf38] sm:$0xff]
      %v1181 = vld [vmem:[%s2 + $0xf40] sm:$0xff]
      %v1182 = vld [vmem:[%s2 + $0xf48] sm:$0xff]
      %v1183 = vld [vmem:[%s2 + $0xf50] sm:$0xff]
      %v1184 = vld [vmem:[%s2 + $0xf58] sm:$0xff]
      %v1185 = vld [vmem:[%s2 + $0xf60] sm:$0xff]
      %v1186 = vld [vmem:[%s2 + $0xf68] sm:$0xff]
      %v1187 = vld [vmem:[%s2 + $0xf70] sm:$0xff]
      %v1188 = vld [vmem:[%s2 + $0xf78] sm:$0xff]
      %v1189 = vld [vmem:[%s2 + $0xf80] sm:$0xff]
      %v1190 = vld [vmem:[%s2 + $0xf88] sm:$0xff]
      %v1191 = vld [vmem:[%s2 + $0xf90] sm:$0xff]
      %v1192 = vld [vmem:[%s2 + $0xf98] sm:$0xff]
      %v1193 = vld [vmem:[%s2 + $0xfa0] sm:$0xff]
      %v1194 = vld [vmem:[%s2 + $0xfa8] sm:$0xff]
      %v1195 = vld [vmem:[%s2 + $0xfb0] sm:$0xff]
      %v1196 = vld [vmem:[%s2 + $0xfb8] sm:$0xff]
      %v1197 = vld [vmem:[%s2 + $0xfc0] sm:$0xff]
      %v1198 = vld [vmem:[%s2 + $0xfc8] sm:$0xff]
      %v1199 = vld [vmem:[%s2 + $0xfd0] sm:$0xff]
      %v1200 = vld [vmem:[%s2 + $0xfd8] sm:$0xff]
      %v1201 = vld [vmem:[%s2 + $0xfe0] sm:$0xff]
      %v1202 = vld [vmem:[%s2 + $0xfe8] sm:$0xff]
      %v1203 = vld [vmem:[%s2 + $0xff0] sm:$0xff]
      %v1204 = vld [vmem:[%s2 + $0xff8] sm:$0xff]
      %v1205 = vld [vmem:[%s2 + $0x1000] sm:$0xff]
      %v1206 = vld [vmem:[%s2 + $0x1008] sm:$0xff]
      %v1207 = vld [vmem:[%s2 + $0x1010] sm:$0xff]
      %v1208 = vld [vmem:[%s2 + $0x1018] sm:$0xff]
      %v1209 = vld [vmem:[%s2 + $0x1020] sm:$0xff]
      %v1210 = vld [vmem:[%s2 + $0x1028] sm:$0xff]
      %v1211 = vld [vmem:[%s2 + $0x1030] sm:$0xff]
      %v1212 = vld [vmem:[%s2 + $0x1038] sm:$0xff]
      %v1213 = vld [vmem:[%s2 + $0x1040] sm:$0xff]
      %v1214 = vld [vmem:[%s2 + $0x1048] sm:$0xff]
      %v1215 = vld [vmem:[%s2 + $0x1050] sm:$0xff]
      %v1216 = vld [vmem:[%s2 + $0x1058] sm:$0xff]
      %v1217 = vld [vmem:[%s2 + $0x1060] sm:$0xff]
      %v1218 = vld [vmem:[%s2 + $0x1068] sm:$0xff]
      %v1219 = vld [vmem:[%s2 + $0x1070] sm:$0xff]
      %v1220 = vld [vmem:[%s2 + $0x1078] sm:$0xff]
      %v1221 = vld [vmem:[%s2 + $0x1080] sm:$0xff]
      %v1222 = vld [vmem:[%s2 + $0x1088] sm:$0xff]
      %v1223 = vld [vmem:[%s2 + $0x1090] sm:$0xff]
      %v1224 = vld [vmem:[%s2 + $0x1098] sm:$0xff]
      %v1225 = vld [vmem:[%s2 + $0x10a0] sm:$0xff]
      %v1226 = vld [vmem:[%s2 + $0x10a8] sm:$0xff]
      %v1227 = vld [vmem:[%s2 + $0x10b0] sm:$0xff]
      %v1228 = vld [vmem:[%s2 + $0x10b8] sm:$0xff]
      %v1229 = vld [vmem:[%s2 + $0x10c0] sm:$0xff]
      %v1230 = vld [vmem:[%s2 + $0x10c8] sm:$0xff]
      %v1231 = vld [vmem:[%s2 + $0x10d0] sm:$0xff]
      %v1232 = vld [vmem:[%s2 + $0x10d8] sm:$0xff]
      %v1233 = vld [vmem:[%s2 + $0x10e0] sm:$0xff]
      %v1234 = vld [vmem:[%s2 + $0x10e8] sm:$0xff]
      %v1235 = vld [vmem:[%s2 + $0x10f0] sm:$0xff]
      %v1236 = vld [vmem:[%s2 + $0x10f8] sm:$0xff]
      %v1237 = vld [vmem:[%s2 + $0x1100] sm:$0xff]
      %v1238 = vld [vmem:[%s2 + $0x1108] sm:$0xff]
      %v1239 = vld [vmem:[%s2 + $0x1110] sm:$0xff]
      %v1240 = vld [vmem:[%s2 + $0x1118] sm:$0xff]
      %v1241 = vld [vmem:[%s2 + $0x1120] sm:$0xff]
      %v1242 = vld [vmem:[%s2 + $0x1128] sm:$0xff]
      %v1243 = vld [vmem:[%s2 + $0x1130] sm:$0xff]
      %v1244 = vld [vmem:[%s2 + $0x1138] sm:$0xff]
      %v1245 = vld [vmem:[%s2 + $0x1140] sm:$0xff]
      %v1246 = vld [vmem:[%s2 + $0x1148] sm:$0xff]
      %v1247 = vld [vmem:[%s2 + $0x1150] sm:$0xff]
      %v1248 = vld [vmem:[%s2 + $0x1158] sm:$0xff]
      %v1249 = vld [vmem:[%s2 + $0x1160] sm:$0xff]
      %v1250 = vld [vmem:[%s2 + $0x1168] sm:$0xff]
      %v1251 = vld [vmem:[%s2 + $0x1170] sm:$0xff]
      %v1252 = vld [vmem:[%s2 + $0x1178] sm:$0xff]
      %v1253 = vld [vmem:[%s2 + $0x1180] sm:$0xff]
      %v1254 = vld [vmem:[%s2 + $0x1188] sm:$0xff]
      %v1255 = vld [vmem:[%s2 + $0x1190] sm:$0xff]
      %v1256 = vld [vmem:[%s2 + $0x1198] sm:$0xff]
      %v1257 = vld [vmem:[%s2 + $0x11a0] sm:$0xff]
      %v1258 = vld [vmem:[%s2 + $0x11a8] sm:$0xff]
      %v1259 = vld [vmem:[%s2 + $0x11b0] sm:$0xff]
      %v1260 = vld [vmem:[%s2 + $0x11b8] sm:$0xff]
      %v1261 = vld [vmem:[%s2 + $0x11c0] sm:$0xff]
      %v1262 = vld [vmem:[%s2 + $0x11c8] sm:$0xff]
      %v1263 = vld [vmem:[%s2 + $0x11d0] sm:$0xff]
      %v1264 = vld [vmem:[%s2 + $0x11d8] sm:$0xff]
      %v1265 = vld [vmem:[%s2 + $0x11e0] sm:$0xff]
      %v1266 = vld [vmem:[%s2 + $0x11e8] sm:$0xff]
      %v1267 = vld [vmem:[%s2 + $0x11f0] sm:$0xff]
      %v1268 = vld [vmem:[%s2 + $0x11f8] sm:$0xff]
      %v1269 = vld [vmem:[%s2 + $0x1200] sm:$0xff]
      %v1270 = vld [vmem:[%s2 + $0x1208] sm:$0xff]
      %v1271 = vld [vmem:[%s2 + $0x1210] sm:$0xff]
      %v1272 = vld [vmem:[%s2 + $0x1218] sm:$0xff]
      %v1273 = vld [vmem:[%s2 + $0x1220] sm:$0xff]
      %v1274 = vld [vmem:[%s2 + $0x1228] sm:$0xff]
      %v1275 = vld [vmem:[%s2 + $0x1230] sm:$0xff]
      %v1276 = vld [vmem:[%s2 + $0x1238] sm:$0xff]
      %v1277 = vld [vmem:[%s2 + $0x1240] sm:$0xff]
      %v1278 = vld [vmem:[%s2 + $0x1248] sm:$0xff]
      %v1279 = vld [vmem:[%s2 + $0x1250] sm:$0xff]
      %v1280 = vld [vmem:[%s2 + $0x1258] sm:$0xff]
      %v1869 = vunpack.c.l.b16 %v693
      %v1870 = vunpack.c.h.b16 %v693
      %v1871 = vunpack.c.l.b16 %v694
      %v1872 = vunpack.c.h.b16 %v694
      %v1873 = vunpack.c.l.b16 %v695
      %v1874 = vunpack.c.h.b16 %v695
      %v1875 = vunpack.c.l.b16 %v696
      %v1876 = vunpack.c.h.b16 %v696
      %v1877 = vunpack.c.l.b16 %v697
      %v1878 = vunpack.c.h.b16 %v697
      %v1879 = vunpack.c.l.b16 %v698
      %v1880 = vunpack.c.h.b16 %v698
      %v1881 = vunpack.c.l.b16 %v699
      %v1882 = vunpack.c.h.b16 %v699
      %v1883 = vunpack.c.l.b16 %v700
      %v1884 = vunpack.c.h.b16 %v700
      %v1885 = vunpack.c.l.b16 %v701
      %v1886 = vunpack.c.h.b16 %v701
      %v1887 = vunpack.c.l.b16 %v702
      %v1888 = vunpack.c.h.b16 %v702
      %v1889 = vunpack.c.l.b16 %v703
      %v1890 = vunpack.c.h.b16 %v703
      %v1891 = vunpack.c.l.b16 %v704
      %v1892 = vunpack.c.h.b16 %v704
      %v1893 = vunpack.c.l.b16 %v705
      %v1894 = vunpack.c.h.b16 %v705
      %v1895 = vunpack.c.l.b16 %v706
      %v1896 = vunpack.c.h.b16 %v706
      %v1897 = vunpack.c.l.b16 %v707
      %v1898 = vunpack.c.h.b16 %v707
      %v1899 = vunpack.c.l.b16 %v708
      %v1900 = vunpack.c.h.b16 %v708
      %v1901 = vunpack.c.l.b16 %v709
      %v1902 = vunpack.c.h.b16 %v709
      %v1903 = vunpack.c.l.b16 %v710
      %v1904 = vunpack.c.h.b16 %v710
      %v1905 = vunpack.c.l.b16 %v711
      %v1906 = vunpack.c.h.b16 %v711
      %v1907 = vunpack.c.l.b16 %v712
      %v1908 = vunpack.c.h.b16 %v712
      %v1909 = vunpack.c.l.b16 %v713
      %v1910 = vunpack.c.h.b16 %v713
      %v1911 = vunpack.c.l.b16 %v714
      %v1912 = vunpack.c.h.b16 %v714
      %v1913 = vunpack.c.l.b16 %v715
      %v1914 = vunpack.c.h.b16 %v715
      %v1915 = vunpack.c.l.b16 %v716
      %v1916 = vunpack.c.h.b16 %v716
      %v1917 = vunpack.c.l.b16 %v717
      %v1918 = vunpack.c.h.b16 %v717
      %v1919 = vunpack.c.l.b16 %v718
      %v1920 = vunpack.c.h.b16 %v718
      %v1921 = vunpack.c.l.b16 %v719
      %v1922 = vunpack.c.h.b16 %v719
      %v1923 = vunpack.c.l.b16 %v720
      %v1924 = vunpack.c.h.b16 %v720
      %v1925 = vunpack.c.l.b16 %v721
      %v1926 = vunpack.c.h.b16 %v721
      %v1927 = vunpack.c.l.b16 %v722
      %v1928 = vunpack.c.h.b16 %v722
      %v1929 = vunpack.c.l.b16 %v723
      %v1930 = vunpack.c.h.b16 %v723
      %v1931 = vunpack.c.l.b16 %v724
      %v1932 = vunpack.c.h.b16 %v724
      %v1933 = vunpack.c.l.b16 %v725
      %v1934 = vunpack.c.h.b16 %v725
      %v1935 = vunpack.c.l.b16 %v726
      %v1936 = vunpack.c.h.b16 %v726
      %v1937 = vunpack.c.l.b16 %v727
      %v1938 = vunpack.c.h.b16 %v727
      %v1939 = vunpack.c.l.b16 %v728
      %v1940 = vunpack.c.h.b16 %v728
      %v1941 = vunpack.c.l.b16 %v729
      %v1942 = vunpack.c.h.b16 %v729
      %v1943 = vunpack.c.l.b16 %v730
      %v1944 = vunpack.c.h.b16 %v730
      %v1945 = vunpack.c.l.b16 %v731
      %v1946 = vunpack.c.h.b16 %v731
      %v1947 = vunpack.c.l.b16 %v732
      %v1948 = vunpack.c.h.b16 %v732
      %v1949 = vunpack.c.l.b16 %v733
      %v1950 = vunpack.c.h.b16 %v733
      %v1951 = vunpack.c.l.b16 %v734
      %v1952 = vunpack.c.h.b16 %v734
      %v1953 = vunpack.c.l.b16 %v735
      %v1954 = vunpack.c.h.b16 %v735
      %v1955 = vunpack.c.l.b16 %v736
      %v1956 = vunpack.c.h.b16 %v736
      %v1957 = vunpack.c.l.b16 %v737
      %v1958 = vunpack.c.h.b16 %v737
      %v1959 = vunpack.c.l.b16 %v738
      %v1960 = vunpack.c.h.b16 %v738
      %v1961 = vunpack.c.l.b16 %v739
      %v1962 = vunpack.c.h.b16 %v739
      %v1963 = vunpack.c.l.b16 %v740
      %v1964 = vunpack.c.h.b16 %v740
      %v1965 = vunpack.c.l.b16 %v741
      %v1966 = vunpack.c.h.b16 %v741
      %v1967 = vunpack.c.l.b16 %v742
      %v1968 = vunpack.c.h.b16 %v742
      %v1969 = vunpack.c.l.b16 %v743
      %v1970 = vunpack.c.h.b16 %v743
      %v1971 = vunpack.c.l.b16 %v744
      %v1972 = vunpack.c.h.b16 %v744
      %v1973 = vunpack.c.l.b16 %v745
      %v1974 = vunpack.c.h.b16 %v745
      %v1975 = vunpack.c.l.b16 %v746
      %v1976 = vunpack.c.h.b16 %v746
      %v1977 = vunpack.c.l.b16 %v747
      %v1978 = vunpack.c.h.b16 %v747
      %v1979 = vunpack.c.l.b16 %v748
      %v1980 = vunpack.c.h.b16 %v748
      %v1981 = vunpack.c.l.b16 %v749
      %v1982 = vunpack.c.h.b16 %v749
      %v1983 = vunpack.c.l.b16 %v750
      %v1984 = vunpack.c.h.b16 %v750
      %v1985 = vunpack.c.l.b16 %v751
      %v1986 = vunpack.c.h.b16 %v751
      %v1987 = vunpack.c.l.b16 %v752
      %v1988 = vunpack.c.h.b16 %v752
      %v1989 = vunpack.c.l.b16 %v753
      %v1990 = vunpack.c.h.b16 %v753
      %v1991 = vunpack.c.l.b16 %v754
      %v1992 = vunpack.c.h.b16 %v754
      %v1993 = vunpack.c.l.b16 %v755
      %v1994 = vunpack.c.h.b16 %v755
      %v1995 = vunpack.c.l.b16 %v756
      %v1996 = vunpack.c.h.b16 %v756
      %v1997 = vunpack.c.l.b16 %v757
      %v1998 = vunpack.c.h.b16 %v757
      %v1999 = vunpack.c.l.b16 %v758
      %v2000 = vunpack.c.h.b16 %v758
      %v2001 = vunpack.c.l.b16 %v759
      %v2002 = vunpack.c.h.b16 %v759
      %v2003 = vunpack.c.l.b16 %v760
      %v2004 = vunpack.c.h.b16 %v760
      %v2005 = vunpack.c.l.b16 %v761
      %v2006 = vunpack.c.h.b16 %v761
      %v2007 = vunpack.c.l.b16 %v762
      %v2008 = vunpack.c.h.b16 %v762
      %v2009 = vunpack.c.l.b16 %v763
      %v2010 = vunpack.c.h.b16 %v763
      %v2011 = vunpack.c.l.b16 %v764
      %v2012 = vunpack.c.h.b16 %v764
      %v2013 = vunpack.c.l.b16 %v765
      %v2014 = vunpack.c.h.b16 %v765
      %v2015 = vunpack.c.l.b16 %v766
      %v2016 = vunpack.c.h.b16 %v766
      %v2017 = vunpack.c.l.b16 %v767
      %v2018 = vunpack.c.h.b16 %v767
      %v2019 = vunpack.c.l.b16 %v768
      %v2020 = vunpack.c.h.b16 %v768
      %v2021 = vunpack.c.l.b16 %v769
      %v2022 = vunpack.c.h.b16 %v769
      %v2023 = vunpack.c.l.b16 %v770
      %v2024 = vunpack.c.h.b16 %v770
      %v2025 = vunpack.c.l.b16 %v771
      %v2026 = vunpack.c.h.b16 %v771
      %v2027 = vunpack.c.l.b16 %v772
      %v2028 = vunpack.c.h.b16 %v772
      %v2029 = vunpack.c.l.b16 %v773
      %v2030 = vunpack.c.h.b16 %v773
      %v2031 = vunpack.c.l.b16 %v774
      %v2032 = vunpack.c.h.b16 %v774
      %v2033 = vunpack.c.l.b16 %v775
      %v2034 = vunpack.c.h.b16 %v775
      %v2035 = vunpack.c.l.b16 %v776
      %v2036 = vunpack.c.h.b16 %v776
      %v2037 = vunpack.c.l.b16 %v777
      %v2038 = vunpack.c.h.b16 %v777
      %v2039 = vunpack.c.l.b16 %v778
      %v2040 = vunpack.c.h.b16 %v778
      %v2041 = vunpack.c.l.b16 %v779
      %v2042 = vunpack.c.h.b16 %v779
      %v2043 = vunpack.c.l.b16 %v780
      %v2044 = vunpack.c.h.b16 %v780
      %v2045 = vunpack.c.l.b16 %v781
      %v2046 = vunpack.c.h.b16 %v781
      %v2047 = vunpack.c.l.b16 %v782
      %v2048 = vunpack.c.h.b16 %v782
      %v2049 = vunpack.c.l.b16 %v783
      %v2050 = vunpack.c.h.b16 %v783
      %v2051 = vunpack.c.l.b16 %v784
      %v2052 = vunpack.c.h.b16 %v784
      %v2053 = vunpack.c.l.b16 %v785
      %v2054 = vunpack.c.h.b16 %v785
      %v2055 = vunpack.c.l.b16 %v786
      %v2056 = vunpack.c.h.b16 %v786
      %v2057 = vunpack.c.l.b16 %v787
      %v2058 = vunpack.c.h.b16 %v787
      %v2059 = vunpack.c.l.b16 %v788
      %v2060 = vunpack.c.h.b16 %v788
      %v2061 = vunpack.c.l.b16 %v789
      %v2062 = vunpack.c.h.b16 %v789
      %v2063 = vunpack.c.l.b16 %v790
      %v2064 = vunpack.c.h.b16 %v790
      %v2065 = vunpack.c.l.b16 %v791
      %v2066 = vunpack.c.h.b16 %v791
      %v2067 = vunpack.c.l.b16 %v792
      %v2068 = vunpack.c.h.b16 %v792
      %v2069 = vunpack.c.l.b16 %v793
      %v2070 = vunpack.c.h.b16 %v793
      %v2071 = vunpack.c.l.b16 %v794
      %v2072 = vunpack.c.h.b16 %v794
      %v2073 = vunpack.c.l.b16 %v795
      %v2074 = vunpack.c.h.b16 %v795
      %v2075 = vunpack.c.l.b16 %v796
      %v2076 = vunpack.c.h.b16 %v796
      %v2077 = vunpack.c.l.b16 %v797
      %v2078 = vunpack.c.h.b16 %v797
      %v2079 = vunpack.c.l.b16 %v798
      %v2080 = vunpack.c.h.b16 %v798
      %v2081 = vunpack.c.l.b16 %v799
      %v2082 = vunpack.c.h.b16 %v799
      %v2083 = vunpack.c.l.b16 %v800
      %v2084 = vunpack.c.h.b16 %v800
      %v2085 = vunpack.c.l.b16 %v801
      %v2086 = vunpack.c.h.b16 %v801
      %v2087 = vunpack.c.l.b16 %v802
      %v2088 = vunpack.c.h.b16 %v802
      %v2089 = vunpack.c.l.b16 %v803
      %v2090 = vunpack.c.h.b16 %v803
      %v2091 = vunpack.c.l.b16 %v804
      %v2092 = vunpack.c.h.b16 %v804
      %v2093 = vunpack.c.l.b16 %v805
      %v2094 = vunpack.c.h.b16 %v805
      %v2095 = vunpack.c.l.b16 %v806
      %v2096 = vunpack.c.h.b16 %v806
      %v2097 = vunpack.c.l.b16 %v807
      %v2098 = vunpack.c.h.b16 %v807
      %v2099 = vunpack.c.l.b16 %v808
      %v2100 = vunpack.c.h.b16 %v808
      %v2101 = vunpack.c.l.b16 %v809
      %v2102 = vunpack.c.h.b16 %v809
      %v2103 = vunpack.c.l.b16 %v810
      %v2104 = vunpack.c.h.b16 %v810
      %v2105 = vunpack.c.l.b16 %v811
      %v2106 = vunpack.c.h.b16 %v811
      %v2107 = vunpack.c.l.b16 %v812
      %v2108 = vunpack.c.h.b16 %v812
      %v2109 = vunpack.c.l.b16 %v813
      %v2110 = vunpack.c.h.b16 %v813
      %v2111 = vunpack.c.l.b16 %v814
      %v2112 = vunpack.c.h.b16 %v814
      %v2113 = vunpack.c.l.b16 %v815
      %v2114 = vunpack.c.h.b16 %v815
      %v2115 = vunpack.c.l.b16 %v816
      %v2116 = vunpack.c.h.b16 %v816
      %v2117 = vunpack.c.l.b16 %v817
      %v2118 = vunpack.c.h.b16 %v817
      %v2119 = vunpack.c.l.b16 %v818
      %v2120 = vunpack.c.h.b16 %v818
      %v2121 = vunpack.c.l.b16 %v819
      %v2122 = vunpack.c.h.b16 %v819
      %v2123 = vunpack.c.l.b16 %v820
      %v2124 = vunpack.c.h.b16 %v820
      %v2125 = vunpack.c.l.b16 %v821
      %v2126 = vunpack.c.h.b16 %v821
      %v2127 = vunpack.c.l.b16 %v822
      %v2128 = vunpack.c.h.b16 %v822
      %v2129 = vunpack.c.l.b16 %v823
      %v2130 = vunpack.c.h.b16 %v823
      %v2131 = vunpack.c.l.b16 %v824
      %v2132 = vunpack.c.h.b16 %v824
      %v2133 = vunpack.c.l.b16 %v825
      %v2134 = vunpack.c.h.b16 %v825
      %v2135 = vunpack.c.l.b16 %v826
      %v2136 = vunpack.c.h.b16 %v826
      %v2137 = vunpack.c.l.b16 %v827
      %v2138 = vunpack.c.h.b16 %v827
      %v2139 = vunpack.c.l.b16 %v828
      %v2140 = vunpack.c.h.b16 %v828
      %v2141 = vunpack.c.l.b16 %v829
      %v2142 = vunpack.c.h.b16 %v829
      %v2143 = vunpack.c.l.b16 %v830
      %v2144 = vunpack.c.h.b16 %v830
      %v2145 = vunpack.c.l.b16 %v831
      %v2146 = vunpack.c.h.b16 %v831
      %v2147 = vunpack.c.l.b16 %v832
      %v2148 = vunpack.c.h.b16 %v832
      %v2149 = vunpack.c.l.b16 %v833
      %v2150 = vunpack.c.h.b16 %v833
      %v2151 = vunpack.c.l.b16 %v834
      %v2152 = vunpack.c.h.b16 %v834
      %v2153 = vunpack.c.l.b16 %v835
      %v2154 = vunpack.c.h.b16 %v835
      %v2155 = vunpack.c.l.b16 %v836
      %v2156 = vunpack.c.h.b16 %v836
      %v2157 = vunpack.c.l.b16 %v837
      %v2158 = vunpack.c.h.b16 %v837
      %v2159 = vunpack.c.l.b16 %v838
      %v2160 = vunpack.c.h.b16 %v838
      %v2161 = vunpack.c.l.b16 %v839
      %v2162 = vunpack.c.h.b16 %v839
      %v2163 = vunpack.c.l.b16 %v840
      %v2164 = vunpack.c.h.b16 %v840
      %v2165 = vunpack.c.l.b16 %v841
      %v2166 = vunpack.c.h.b16 %v841
      %v2167 = vunpack.c.l.b16 %v842
      %v2168 = vunpack.c.h.b16 %v842
      %v2169 = vunpack.c.l.b16 %v843
      %v2170 = vunpack.c.h.b16 %v843
      %v2171 = vunpack.c.l.b16 %v844
      %v2172 = vunpack.c.h.b16 %v844
      %v2173 = vunpack.c.l.b16 %v845
      %v2174 = vunpack.c.h.b16 %v845
      %v2175 = vunpack.c.l.b16 %v846
      %v2176 = vunpack.c.h.b16 %v846
      %v2177 = vunpack.c.l.b16 %v847
      %v2178 = vunpack.c.h.b16 %v847
      %v2179 = vunpack.c.l.b16 %v848
      %v2180 = vunpack.c.h.b16 %v848
      %v2181 = vunpack.c.l.b16 %v849
      %v2182 = vunpack.c.h.b16 %v849
      %v2183 = vunpack.c.l.b16 %v850
      %v2184 = vunpack.c.h.b16 %v850
      %v2185 = vunpack.c.l.b16 %v851
      %v2186 = vunpack.c.h.b16 %v851
      %v2187 = vunpack.c.l.b16 %v852
      %v2188 = vunpack.c.h.b16 %v852
      %v2189 = vunpack.c.l.b16 %v853
      %v2190 = vunpack.c.h.b16 %v853
      %v2191 = vunpack.c.l.b16 %v854
      %v2192 = vunpack.c.h.b16 %v854
      %v2193 = vunpack.c.l.b16 %v855
      %v2194 = vunpack.c.h.b16 %v855
      %v2195 = vunpack.c.l.b16 %v856
      %v2196 = vunpack.c.h.b16 %v856
      %v2197 = vunpack.c.l.b16 %v857
      %v2198 = vunpack.c.h.b16 %v857
      %v2199 = vunpack.c.l.b16 %v858
      %v2200 = vunpack.c.h.b16 %v858
      %v2201 = vunpack.c.l.b16 %v859
      %v2202 = vunpack.c.h.b16 %v859
      %v2203 = vunpack.c.l.b16 %v860
      %v2204 = vunpack.c.h.b16 %v860
      %v2205 = vunpack.c.l.b16 %v861
      %v2206 = vunpack.c.h.b16 %v861
      %v2207 = vunpack.c.l.b16 %v862
      %v2208 = vunpack.c.h.b16 %v862
      %v2209 = vunpack.c.l.b16 %v863
      %v2210 = vunpack.c.h.b16 %v863
      %v2211 = vunpack.c.l.b16 %v864
      %v2212 = vunpack.c.h.b16 %v864
      %v2213 = vunpack.c.l.b16 %v865
      %v2214 = vunpack.c.h.b16 %v865
      %v2215 = vunpack.c.l.b16 %v866
      %v2216 = vunpack.c.h.b16 %v866
      %v2217 = vunpack.c.l.b16 %v867
      %v2218 = vunpack.c.h.b16 %v867
      %v2219 = vunpack.c.l.b16 %v868
      %v2220 = vunpack.c.h.b16 %v868
      %v2221 = vunpack.c.l.b16 %v869
      %v2222 = vunpack.c.h.b16 %v869
      %v2223 = vunpack.c.l.b16 %v870
      %v2224 = vunpack.c.h.b16 %v870
      %v2225 = vunpack.c.l.b16 %v871
      %v2226 = vunpack.c.h.b16 %v871
      %v2227 = vunpack.c.l.b16 %v872
      %v2228 = vunpack.c.h.b16 %v872
      %v2229 = vunpack.c.l.b16 %v873
      %v2230 = vunpack.c.h.b16 %v873
      %v2231 = vunpack.c.l.b16 %v874
      %v2232 = vunpack.c.h.b16 %v874
      %v2233 = vunpack.c.l.b16 %v875
      %v2234 = vunpack.c.h.b16 %v875
      %v2235 = vunpack.c.l.b16 %v876
      %v2236 = vunpack.c.h.b16 %v876
      %v2237 = vunpack.c.l.b16 %v877
      %v2238 = vunpack.c.h.b16 %v877
      %v2239 = vunpack.c.l.b16 %v878
      %v2240 = vunpack.c.h.b16 %v878
      %v2241 = vunpack.c.l.b16 %v879
      %v2242 = vunpack.c.h.b16 %v879
      %v2243 = vunpack.c.l.b16 %v880
      %v2244 = vunpack.c.h.b16 %v880
      %v2245 = vunpack.c.l.b16 %v881
      %v2246 = vunpack.c.h.b16 %v881
      %v2247 = vunpack.c.l.b16 %v882
      %v2248 = vunpack.c.h.b16 %v882
      %v2249 = vunpack.c.l.b16 %v883
      %v2250 = vunpack.c.h.b16 %v883
      %v2251 = vunpack.c.l.b16 %v884
      %v2252 = vunpack.c.h.b16 %v884
      %v2253 = vunpack.c.l.b16 %v885
      %v2254 = vunpack.c.h.b16 %v885
      %v2255 = vunpack.c.l.b16 %v886
      %v2256 = vunpack.c.h.b16 %v886
      %v2257 = vunpack.c.l.b16 %v887
      %v2258 = vunpack.c.h.b16 %v887
      %v2259 = vunpack.c.l.b16 %v888
      %v2260 = vunpack.c.h.b16 %v888
      %v2261 = vunpack.c.l.b16 %v889
      %v2262 = vunpack.c.h.b16 %v889
      %v2263 = vunpack.c.l.b16 %v890
      %v2264 = vunpack.c.h.b16 %v890
      %v2265 = vunpack.c.l.b16 %v891
      %v2266 = vunpack.c.h.b16 %v891
      %v2267 = vunpack.c.l.b16 %v892
      %v2268 = vunpack.c.h.b16 %v892
      %v2269 = vunpack.c.l.b16 %v893
      %v2270 = vunpack.c.h.b16 %v893
      %v2271 = vunpack.c.l.b16 %v894
      %v2272 = vunpack.c.h.b16 %v894
      %v2273 = vunpack.c.l.b16 %v895
      %v2274 = vunpack.c.h.b16 %v895
      %v2275 = vunpack.c.l.b16 %v896
      %v2276 = vunpack.c.h.b16 %v896
      %v2277 = vunpack.c.l.b16 %v897
      %v2278 = vunpack.c.h.b16 %v897
      %v2279 = vunpack.c.l.b16 %v898
      %v2280 = vunpack.c.h.b16 %v898
      %v2281 = vunpack.c.l.b16 %v899
      %v2282 = vunpack.c.h.b16 %v899
      %v2283 = vunpack.c.l.b16 %v900
      %v2284 = vunpack.c.h.b16 %v900
      %v2285 = vunpack.c.l.b16 %v901
      %v2286 = vunpack.c.h.b16 %v901
      %v2287 = vunpack.c.l.b16 %v902
      %v2288 = vunpack.c.h.b16 %v902
      %v2289 = vunpack.c.l.b16 %v903
      %v2290 = vunpack.c.h.b16 %v903
      %v2291 = vunpack.c.l.b16 %v904
      %v2292 = vunpack.c.h.b16 %v904
      %v2293 = vunpack.c.l.b16 %v905
      %v2294 = vunpack.c.h.b16 %v905
      %v2295 = vunpack.c.l.b16 %v906
      %v2296 = vunpack.c.h.b16 %v906
      %v2297 = vunpack.c.l.b16 %v907
      %v2298 = vunpack.c.h.b16 %v907
      %v2299 = vunpack.c.l.b16 %v908
      %v2300 = vunpack.c.h.b16 %v908
      %v2301 = vunpack.c.l.b16 %v909
      %v2302 = vunpack.c.h.b16 %v909
      %v2303 = vunpack.c.l.b16 %v910
      %v2304 = vunpack.c.h.b16 %v910
      %v2305 = vunpack.c.l.b16 %v911
      %v2306 = vunpack.c.h.b16 %v911
      %v2307 = vunpack.c.l.b16 %v912
      %v2308 = vunpack.c.h.b16 %v912
      %v2309 = vunpack.c.l.b16 %v913
      %v2310 = vunpack.c.h.b16 %v913
      %v2311 = vunpack.c.l.b16 %v914
      %v2312 = vunpack.c.h.b16 %v914
      %v2313 = vunpack.c.l.b16 %v915
      %v2314 = vunpack.c.h.b16 %v915
      %v2315 = vunpack.c.l.b16 %v916
      %v2316 = vunpack.c.h.b16 %v916
      %v2317 = vunpack.c.l.b16 %v917
      %v2318 = vunpack.c.h.b16 %v917
      %v2319 = vunpack.c.l.b16 %v918
      %v2320 = vunpack.c.h.b16 %v918
      %v2321 = vunpack.c.l.b16 %v919
      %v2322 = vunpack.c.h.b16 %v919
      %v2323 = vunpack.c.l.b16 %v920
      %v2324 = vunpack.c.h.b16 %v920
      %v2325 = vunpack.c.l.b16 %v921
      %v2326 = vunpack.c.h.b16 %v921
      %v2327 = vunpack.c.l.b16 %v922
      %v2328 = vunpack.c.h.b16 %v922
      %v2329 = vunpack.c.l.b16 %v923
      %v2330 = vunpack.c.h.b16 %v923
      %v2331 = vunpack.c.l.b16 %v924
      %v2332 = vunpack.c.h.b16 %v924
      %v2333 = vunpack.c.l.b16 %v925
      %v2334 = vunpack.c.h.b16 %v925
      %v2335 = vunpack.c.l.b16 %v926
      %v2336 = vunpack.c.h.b16 %v926
      %v2337 = vunpack.c.l.b16 %v927
      %v2338 = vunpack.c.h.b16 %v927
      %v2339 = vunpack.c.l.b16 %v928
      %v2340 = vunpack.c.h.b16 %v928
      %v2341 = vunpack.c.l.b16 %v929
      %v2342 = vunpack.c.h.b16 %v929
      %v2343 = vunpack.c.l.b16 %v930
      %v2344 = vunpack.c.h.b16 %v930
      %v2345 = vunpack.c.l.b16 %v931
      %v2346 = vunpack.c.h.b16 %v931
      %v2347 = vunpack.c.l.b16 %v932
      %v2348 = vunpack.c.h.b16 %v932
      %v2349 = vunpack.c.l.b16 %v933
      %v2350 = vunpack.c.h.b16 %v933
      %v2351 = vunpack.c.l.b16 %v934
      %v2352 = vunpack.c.h.b16 %v934
      %v2353 = vunpack.c.l.b16 %v935
      %v2354 = vunpack.c.h.b16 %v935
      %v2355 = vunpack.c.l.b16 %v936
      %v2356 = vunpack.c.h.b16 %v936
      %v2357 = vunpack.c.l.b16 %v937
      %v2358 = vunpack.c.h.b16 %v937
      %v2359 = vunpack.c.l.b16 %v938
      %v2360 = vunpack.c.h.b16 %v938
      %v2361 = vunpack.c.l.b16 %v939
      %v2362 = vunpack.c.h.b16 %v939
      %v2363 = vunpack.c.l.b16 %v940
      %v2364 = vunpack.c.h.b16 %v940
      %v2365 = vunpack.c.l.b16 %v941
      %v2366 = vunpack.c.h.b16 %v941
      %v2367 = vunpack.c.l.b16 %v942
      %v2368 = vunpack.c.h.b16 %v942
      %v2369 = vunpack.c.l.b16 %v943
      %v2370 = vunpack.c.h.b16 %v943
      %v2371 = vunpack.c.l.b16 %v944
      %v2372 = vunpack.c.h.b16 %v944
      %v2373 = vunpack.c.l.b16 %v945
      %v2374 = vunpack.c.h.b16 %v945
      %v2375 = vunpack.c.l.b16 %v946
      %v2376 = vunpack.c.h.b16 %v946
      %v2377 = vunpack.c.l.b16 %v947
      %v2378 = vunpack.c.h.b16 %v947
      %v2379 = vunpack.c.l.b16 %v948
      %v2380 = vunpack.c.h.b16 %v948
      %v2381 = vunpack.c.l.b16 %v949
      %v2382 = vunpack.c.h.b16 %v949
      %v2383 = vunpack.c.l.b16 %v950
      %v2384 = vunpack.c.h.b16 %v950
      %v2385 = vunpack.c.l.b16 %v951
      %v2386 = vunpack.c.h.b16 %v951
      %v2387 = vunpack.c.l.b16 %v952
      %v2388 = vunpack.c.h.b16 %v952
      %v2389 = vunpack.c.l.b16 %v953
      %v2390 = vunpack.c.h.b16 %v953
      %v2391 = vunpack.c.l.b16 %v954
      %v2392 = vunpack.c.h.b16 %v954
      %v2393 = vunpack.c.l.b16 %v955
      %v2394 = vunpack.c.h.b16 %v955
      %v2395 = vunpack.c.l.b16 %v956
      %v2396 = vunpack.c.h.b16 %v956
      %v2397 = vunpack.c.l.b16 %v957
      %v2398 = vunpack.c.h.b16 %v957
      %v2399 = vunpack.c.l.b16 %v958
      %v2400 = vunpack.c.h.b16 %v958
      %v2401 = vunpack.c.l.b16 %v959
      %v2402 = vunpack.c.h.b16 %v959
      %v2403 = vunpack.c.l.b16 %v960
      %v2404 = vunpack.c.h.b16 %v960
      %v2405 = vunpack.c.l.b16 %v961
      %v2406 = vunpack.c.h.b16 %v961
      %v2407 = vunpack.c.l.b16 %v962
      %v2408 = vunpack.c.h.b16 %v962
      %v2409 = vunpack.c.l.b16 %v963
      %v2410 = vunpack.c.h.b16 %v963
      %v2411 = vunpack.c.l.b16 %v964
      %v2412 = vunpack.c.h.b16 %v964
      %v2413 = vunpack.c.l.b16 %v965
      %v2414 = vunpack.c.h.b16 %v965
      %v2415 = vunpack.c.l.b16 %v966
      %v2416 = vunpack.c.h.b16 %v966
      %v2417 = vunpack.c.l.b16 %v967
      %v2418 = vunpack.c.h.b16 %v967
      %v2419 = vunpack.c.l.b16 %v968
      %v2420 = vunpack.c.h.b16 %v968
      %v2421 = vunpack.c.l.b16 %v969
      %v2422 = vunpack.c.h.b16 %v969
      %v2423 = vunpack.c.l.b16 %v970
      %v2424 = vunpack.c.h.b16 %v970
      %v2425 = vunpack.c.l.b16 %v971
      %v2426 = vunpack.c.h.b16 %v971
      %v2427 = vunpack.c.l.b16 %v972
      %v2428 = vunpack.c.h.b16 %v972
      %v2429 = vunpack.c.l.b16 %v973
      %v2430 = vunpack.c.h.b16 %v973
      %v2431 = vunpack.c.l.b16 %v974
      %v2432 = vunpack.c.h.b16 %v974
      %v2433 = vunpack.c.l.b16 %v975
      %v2434 = vunpack.c.h.b16 %v975
      %v2435 = vunpack.c.l.b16 %v976
      %v2436 = vunpack.c.h.b16 %v976
      %v2437 = vunpack.c.l.b16 %v977
      %v2438 = vunpack.c.h.b16 %v977
      %v2439 = vunpack.c.l.b16 %v978
      %v2440 = vunpack.c.h.b16 %v978
      %v2441 = vunpack.c.l.b16 %v979
      %v2442 = vunpack.c.h.b16 %v979
      %v2443 = vunpack.c.l.b16 %v980
      %v2444 = vunpack.c.h.b16 %v980
      %v2445 = vunpack.c.l.b16 %v981
      %v2446 = vunpack.c.h.b16 %v981
      %v2447 = vunpack.c.l.b16 %v982
      %v2448 = vunpack.c.h.b16 %v982
      %v2449 = vunpack.c.l.b16 %v983
      %v2450 = vunpack.c.h.b16 %v983
      %v2451 = vunpack.c.l.b16 %v984
      %v2452 = vunpack.c.h.b16 %v984
      %v2453 = vunpack.c.l.b16 %v985
      %v2454 = vunpack.c.h.b16 %v985
      %v2455 = vunpack.c.l.b16 %v986
      %v2456 = vunpack.c.h.b16 %v986
      %v2457 = vunpack.c.l.b16 %v987
      %v2458 = vunpack.c.h.b16 %v987
      %v2459 = vunpack.c.l.b16 %v988
      %v2460 = vunpack.c.h.b16 %v988
      %v2461 = vunpack.c.l.b16 %v989
      %v2462 = vunpack.c.h.b16 %v989
      %v2463 = vunpack.c.l.b16 %v990
      %v2464 = vunpack.c.h.b16 %v990
      %v2465 = vunpack.c.l.b16 %v991
      %v2466 = vunpack.c.h.b16 %v991
      %v2467 = vunpack.c.l.b16 %v992
      %v2468 = vunpack.c.h.b16 %v992
      %v2469 = vunpack.c.l.b16 %v993
      %v2470 = vunpack.c.h.b16 %v993
      %v2471 = vunpack.c.l.b16 %v994
      %v2472 = vunpack.c.h.b16 %v994
      %v2473 = vunpack.c.l.b16 %v995
      %v2474 = vunpack.c.h.b16 %v995
      %v2475 = vunpack.c.l.b16 %v996
      %v2476 = vunpack.c.h.b16 %v996
      %v2477 = vunpack.c.l.b16 %v997
      %v2478 = vunpack.c.h.b16 %v997
      %v2479 = vunpack.c.l.b16 %v998
      %v2480 = vunpack.c.h.b16 %v998
      %v2481 = vunpack.c.l.b16 %v999
      %v2482 = vunpack.c.h.b16 %v999
      %v2483 = vunpack.c.l.b16 %v1000
      %v2484 = vunpack.c.h.b16 %v1000
      %v2485 = vunpack.c.l.b16 %v1001
      %v2486 = vunpack.c.h.b16 %v1001
      %v2487 = vunpack.c.l.b16 %v1002
      %v2488 = vunpack.c.h.b16 %v1002
      %v2489 = vunpack.c.l.b16 %v1003
      %v2490 = vunpack.c.h.b16 %v1003
      %v2491 = vunpack.c.l.b16 %v1004
      %v2492 = vunpack.c.h.b16 %v1004
      %v2493 = vunpack.c.l.b16 %v1005
      %v2494 = vunpack.c.h.b16 %v1005
      %v2495 = vunpack.c.l.b16 %v1006
      %v2496 = vunpack.c.h.b16 %v1006
      %v2497 = vunpack.c.l.b16 %v1007
      %v2498 = vunpack.c.h.b16 %v1007
      %v2499 = vunpack.c.l.b16 %v1008
      %v2500 = vunpack.c.h.b16 %v1008
      %v2501 = vunpack.c.l.b16 %v1009
      %v2502 = vunpack.c.h.b16 %v1009
      %v2503 = vunpack.c.l.b16 %v1010
      %v2504 = vunpack.c.h.b16 %v1010
      %v2505 = vunpack.c.l.b16 %v1011
      %v2506 = vunpack.c.h.b16 %v1011
      %v2507 = vunpack.c.l.b16 %v1012
      %v2508 = vunpack.c.h.b16 %v1012
      %v2509 = vunpack.c.l.b16 %v1013
      %v2510 = vunpack.c.h.b16 %v1013
      %v2511 = vunpack.c.l.b16 %v1014
      %v2512 = vunpack.c.h.b16 %v1014
      %v2513 = vunpack.c.l.b16 %v1015
      %v2514 = vunpack.c.h.b16 %v1015
      %v2515 = vunpack.c.l.b16 %v1016
      %v2516 = vunpack.c.h.b16 %v1016
      %v2517 = vunpack.c.l.b16 %v1017
      %v2518 = vunpack.c.h.b16 %v1017
      %v2519 = vunpack.c.l.b16 %v1018
      %v2520 = vunpack.c.h.b16 %v1018
      %v2521 = vunpack.c.l.b16 %v1019
      %v2522 = vunpack.c.h.b16 %v1019
      %v2523 = vunpack.c.l.b16 %v1020
      %v2524 = vunpack.c.h.b16 %v1020
      %v2525 = vunpack.c.l.b16 %v1021
      %v2526 = vunpack.c.h.b16 %v1021
      %v2527 = vunpack.c.l.b16 %v1022
      %v2528 = vunpack.c.h.b16 %v1022
      %v2529 = vunpack.c.l.b16 %v1023
      %v2530 = vunpack.c.h.b16 %v1023
      %v2531 = vunpack.c.l.b16 %v1024
      %v2532 = vunpack.c.h.b16 %v1024
      %v2533 = vunpack.c.l.b16 %v1025
      %v2534 = vunpack.c.h.b16 %v1025
      %v2535 = vunpack.c.l.b16 %v1026
      %v2536 = vunpack.c.h.b16 %v1026
      %v2537 = vunpack.c.l.b16 %v1027
      %v2538 = vunpack.c.h.b16 %v1027
      %v2539 = vunpack.c.l.b16 %v1028
      %v2540 = vunpack.c.h.b16 %v1028
      %v2541 = vunpack.c.l.b16 %v1029
      %v2542 = vunpack.c.h.b16 %v1029
      %v2543 = vunpack.c.l.b16 %v1030
      %v2544 = vunpack.c.h.b16 %v1030
      %v2545 = vunpack.c.l.b16 %v1031
      %v2546 = vunpack.c.h.b16 %v1031
      %v2547 = vunpack.c.l.b16 %v1032
      %v2548 = vunpack.c.h.b16 %v1032
      %v2549 = vunpack.c.l.b16 %v1033
      %v2550 = vunpack.c.h.b16 %v1033
      %v2551 = vunpack.c.l.b16 %v1034
      %v2552 = vunpack.c.h.b16 %v1034
      %v2553 = vunpack.c.l.b16 %v1035
      %v2554 = vunpack.c.h.b16 %v1035
      %v2555 = vunpack.c.l.b16 %v1036
      %v2556 = vunpack.c.h.b16 %v1036
      %v2557 = vunpack.c.l.b16 %v1037
      %v2558 = vunpack.c.h.b16 %v1037
      %v2559 = vunpack.c.l.b16 %v1038
      %v2560 = vunpack.c.h.b16 %v1038
      %v2561 = vunpack.c.l.b16 %v1039
      %v2562 = vunpack.c.h.b16 %v1039
      %v2563 = vunpack.c.l.b16 %v1040
      %v2564 = vunpack.c.h.b16 %v1040
      %v2565 = vunpack.c.l.b16 %v1041
      %v2566 = vunpack.c.h.b16 %v1041
      %v2567 = vunpack.c.l.b16 %v1042
      %v2568 = vunpack.c.h.b16 %v1042
      %v2569 = vunpack.c.l.b16 %v1043
      %v2570 = vunpack.c.h.b16 %v1043
      %v2571 = vunpack.c.l.b16 %v1044
      %v2572 = vunpack.c.h.b16 %v1044
      %v2573 = vunpack.c.l.b16 %v1045
      %v2574 = vunpack.c.h.b16 %v1045
      %v2575 = vunpack.c.l.b16 %v1046
      %v2576 = vunpack.c.h.b16 %v1046
      %v2577 = vunpack.c.l.b16 %v1047
      %v2578 = vunpack.c.h.b16 %v1047
      %v2579 = vunpack.c.l.b16 %v1048
      %v2580 = vunpack.c.h.b16 %v1048
      %v2581 = vunpack.c.l.b16 %v1049
      %v2582 = vunpack.c.h.b16 %v1049
      %v2583 = vunpack.c.l.b16 %v1050
      %v2584 = vunpack.c.h.b16 %v1050
      %v2585 = vunpack.c.l.b16 %v1051
      %v2586 = vunpack.c.h.b16 %v1051
      %v2587 = vunpack.c.l.b16 %v1052
      %v2588 = vunpack.c.h.b16 %v1052
      %v2589 = vunpack.c.l.b16 %v1053
      %v2590 = vunpack.c.h.b16 %v1053
      %v2591 = vunpack.c.l.b16 %v1054
      %v2592 = vunpack.c.h.b16 %v1054
      %v2593 = vunpack.c.l.b16 %v1055
      %v2594 = vunpack.c.h.b16 %v1055
      %v2595 = vunpack.c.l.b16 %v1056
      %v2596 = vunpack.c.h.b16 %v1056
      %v2597 = vunpack.c.l.b16 %v1057
      %v2598 = vunpack.c.h.b16 %v1057
      %v2599 = vunpack.c.l.b16 %v1058
      %v2600 = vunpack.c.h.b16 %v1058
      %v2601 = vunpack.c.l.b16 %v1059
      %v2602 = vunpack.c.h.b16 %v1059
      %v2603 = vunpack.c.l.b16 %v1060
      %v2604 = vunpack.c.h.b16 %v1060
      %v2605 = vunpack.c.l.b16 %v1061
      %v2606 = vunpack.c.h.b16 %v1061
      %v2607 = vunpack.c.l.b16 %v1062
      %v2608 = vunpack.c.h.b16 %v1062
      %v2609 = vunpack.c.l.b16 %v1063
      %v2610 = vunpack.c.h.b16 %v1063
      %v2611 = vunpack.c.l.b16 %v1064
      %v2612 = vunpack.c.h.b16 %v1064
      %v2613 = vunpack.c.l.b16 %v1065
      %v2614 = vunpack.c.h.b16 %v1065
      %v2615 = vunpack.c.l.b16 %v1066
      %v2616 = vunpack.c.h.b16 %v1066
      %v2617 = vunpack.c.l.b16 %v1067
      %v2618 = vunpack.c.h.b16 %v1067
      %v2619 = vunpack.c.l.b16 %v1068
      %v2620 = vunpack.c.h.b16 %v1068
      %v2621 = vunpack.c.l.b16 %v1069
      %v2622 = vunpack.c.h.b16 %v1069
      %v2623 = vunpack.c.l.b16 %v1070
      %v2624 = vunpack.c.h.b16 %v1070
      %v2625 = vunpack.c.l.b16 %v1071
      %v2626 = vunpack.c.h.b16 %v1071
      %v2627 = vunpack.c.l.b16 %v1072
      %v2628 = vunpack.c.h.b16 %v1072
      %v2629 = vunpack.c.l.b16 %v1073
      %v2630 = vunpack.c.h.b16 %v1073
      %v2631 = vunpack.c.l.b16 %v1074
      %v2632 = vunpack.c.h.b16 %v1074
      %v2633 = vunpack.c.l.b16 %v1075
      %v2634 = vunpack.c.h.b16 %v1075
      %v2635 = vunpack.c.l.b16 %v1076
      %v2636 = vunpack.c.h.b16 %v1076
      %v2637 = vunpack.c.l.b16 %v1077
      %v2638 = vunpack.c.h.b16 %v1077
      %v2639 = vunpack.c.l.b16 %v1078
      %v2640 = vunpack.c.h.b16 %v1078
      %v2641 = vunpack.c.l.b16 %v1079
      %v2642 = vunpack.c.h.b16 %v1079
      %v2643 = vunpack.c.l.b16 %v1080
      %v2644 = vunpack.c.h.b16 %v1080
      %v2645 = vunpack.c.l.b16 %v1081
      %v2646 = vunpack.c.h.b16 %v1081
      %v2647 = vunpack.c.l.b16 %v1082
      %v2648 = vunpack.c.h.b16 %v1082
      %v2649 = vunpack.c.l.b16 %v1083
      %v2650 = vunpack.c.h.b16 %v1083
      %v2651 = vunpack.c.l.b16 %v1084
      %v2652 = vunpack.c.h.b16 %v1084
      %v2653 = vunpack.c.l.b16 %v1085
      %v2654 = vunpack.c.h.b16 %v1085
      %v2655 = vunpack.c.l.b16 %v1086
      %v2656 = vunpack.c.h.b16 %v1086
      %v2657 = vunpack.c.l.b16 %v1087
      %v2658 = vunpack.c.h.b16 %v1087
      %v2659 = vunpack.c.l.b16 %v1088
      %v2660 = vunpack.c.h.b16 %v1088
      %v2661 = vunpack.c.l.b16 %v1089
      %v2662 = vunpack.c.h.b16 %v1089
      %v2663 = vunpack.c.l.b16 %v1090
      %v2664 = vunpack.c.h.b16 %v1090
      %v2665 = vunpack.c.l.b16 %v1091
      %v2666 = vunpack.c.h.b16 %v1091
      %v2667 = vunpack.c.l.b16 %v1092
      %v2668 = vunpack.c.h.b16 %v1092
      %v2669 = vunpack.c.l.b16 %v1093
      %v2670 = vunpack.c.h.b16 %v1093
      %v2671 = vunpack.c.l.b16 %v1094
      %v2672 = vunpack.c.h.b16 %v1094
      %v2673 = vunpack.c.l.b16 %v1095
      %v2674 = vunpack.c.h.b16 %v1095
      %v2675 = vunpack.c.l.b16 %v1096
      %v2676 = vunpack.c.h.b16 %v1096
      %v2677 = vunpack.c.l.b16 %v1097
      %v2678 = vunpack.c.h.b16 %v1097
      %v2679 = vunpack.c.l.b16 %v1098
      %v2680 = vunpack.c.h.b16 %v1098
      %v2681 = vunpack.c.l.b16 %v1099
      %v2682 = vunpack.c.h.b16 %v1099
      %v2683 = vunpack.c.l.b16 %v1100
      %v2684 = vunpack.c.h.b16 %v1100
      %v2685 = vunpack.c.l.b16 %v1101
      %v2686 = vunpack.c.h.b16 %v1101
      %v2687 = vunpack.c.l.b16 %v1102
      %v2688 = vunpack.c.h.b16 %v1102
      %v2689 = vunpack.c.l.b16 %v1103
      %v2690 = vunpack.c.h.b16 %v1103
      %v2691 = vunpack.c.l.b16 %v1104
      %v2692 = vunpack.c.h.b16 %v1104
      %v2693 = vunpack.c.l.b16 %v1105
      %v2694 = vunpack.c.h.b16 %v1105
      %v2695 = vunpack.c.l.b16 %v1106
      %v2696 = vunpack.c.h.b16 %v1106
      %v2697 = vunpack.c.l.b16 %v1107
      %v2698 = vunpack.c.h.b16 %v1107
      %v2699 = vunpack.c.l.b16 %v1108
      %v2700 = vunpack.c.h.b16 %v1108
      %v2701 = vunpack.c.l.b16 %v1109
      %v2702 = vunpack.c.h.b16 %v1109
      %v2703 = vunpack.c.l.b16 %v1110
      %v2704 = vunpack.c.h.b16 %v1110
      %v2705 = vunpack.c.l.b16 %v1111
      %v2706 = vunpack.c.h.b16 %v1111
      %v2707 = vunpack.c.l.b16 %v1112
      %v2708 = vunpack.c.h.b16 %v1112
      %v2709 = vunpack.c.l.b16 %v1113
      %v2710 = vunpack.c.h.b16 %v1113
      %v2711 = vunpack.c.l.b16 %v1114
      %v2712 = vunpack.c.h.b16 %v1114
      %v2713 = vunpack.c.l.b16 %v1115
      %v2714 = vunpack.c.h.b16 %v1115
      %v2715 = vunpack.c.l.b16 %v1116
      %v2716 = vunpack.c.h.b16 %v1116
      %v2717 = vunpack.c.l.b16 %v1117
      %v2718 = vunpack.c.h.b16 %v1117
      %v2719 = vunpack.c.l.b16 %v1118
      %v2720 = vunpack.c.h.b16 %v1118
      %v2721 = vunpack.c.l.b16 %v1119
      %v2722 = vunpack.c.h.b16 %v1119
      %v2723 = vunpack.c.l.b16 %v1120
      %v2724 = vunpack.c.h.b16 %v1120
      %v2725 = vunpack.c.l.b16 %v1121
      %v2726 = vunpack.c.h.b16 %v1121
      %v2727 = vunpack.c.l.b16 %v1122
      %v2728 = vunpack.c.h.b16 %v1122
      %v2729 = vunpack.c.l.b16 %v1123
      %v2730 = vunpack.c.h.b16 %v1123
      %v2731 = vunpack.c.l.b16 %v1124
      %v2732 = vunpack.c.h.b16 %v1124
      %v2733 = vunpack.c.l.b16 %v1125
      %v2734 = vunpack.c.h.b16 %v1125
      %v2735 = vunpack.c.l.b16 %v1126
      %v2736 = vunpack.c.h.b16 %v1126
      %v2737 = vunpack.c.l.b16 %v1127
      %v2738 = vunpack.c.h.b16 %v1127
      %v2739 = vunpack.c.l.b16 %v1128
      %v2740 = vunpack.c.h.b16 %v1128
      %v2741 = vunpack.c.l.b16 %v1129
      %v2742 = vunpack.c.h.b16 %v1129
      %v2743 = vunpack.c.l.b16 %v1130
      %v2744 = vunpack.c.h.b16 %v1130
      %v2745 = vunpack.c.l.b16 %v1131
      %v2746 = vunpack.c.h.b16 %v1131
      %v2747 = vunpack.c.l.b16 %v1132
      %v2748 = vunpack.c.h.b16 %v1132
      %v2749 = vunpack.c.l.b16 %v1133
      %v2750 = vunpack.c.h.b16 %v1133
      %v2751 = vunpack.c.l.b16 %v1134
      %v2752 = vunpack.c.h.b16 %v1134
      %v2753 = vunpack.c.l.b16 %v1135
      %v2754 = vunpack.c.h.b16 %v1135
      %v2755 = vunpack.c.l.b16 %v1136
      %v2756 = vunpack.c.h.b16 %v1136
      %v2757 = vunpack.c.l.b16 %v1137
      %v2758 = vunpack.c.h.b16 %v1137
      %v2759 = vunpack.c.l.b16 %v1138
      %v2760 = vunpack.c.h.b16 %v1138
      %v2761 = vunpack.c.l.b16 %v1139
      %v2762 = vunpack.c.h.b16 %v1139
      %v2763 = vunpack.c.l.b16 %v1140
      %v2764 = vunpack.c.h.b16 %v1140
      %v2765 = vunpack.c.l.b16 %v1141
      %v2766 = vunpack.c.h.b16 %v1141
      %v2767 = vunpack.c.l.b16 %v1142
      %v2768 = vunpack.c.h.b16 %v1142
      %v2769 = vunpack.c.l.b16 %v1143
      %v2770 = vunpack.c.h.b16 %v1143
      %v2771 = vunpack.c.l.b16 %v1144
      %v2772 = vunpack.c.h.b16 %v1144
      %v2773 = vunpack.c.l.b16 %v1145
      %v2774 = vunpack.c.h.b16 %v1145
      %v2775 = vunpack.c.l.b16 %v1146
      %v2776 = vunpack.c.h.b16 %v1146
      %v2777 = vunpack.c.l.b16 %v1147
      %v2778 = vunpack.c.h.b16 %v1147
      %v2779 = vunpack.c.l.b16 %v1148
      %v2780 = vunpack.c.h.b16 %v1148
      %v2781 = vunpack.c.l.b16 %v1149
      %v2782 = vunpack.c.h.b16 %v1149
      %v2783 = vunpack.c.l.b16 %v1150
      %v2784 = vunpack.c.h.b16 %v1150
      %v2785 = vunpack.c.l.b16 %v1151
      %v2786 = vunpack.c.h.b16 %v1151
      %v2787 = vunpack.c.l.b16 %v1152
      %v2788 = vunpack.c.h.b16 %v1152
      %v2789 = vunpack.c.l.b16 %v1153
      %v2790 = vunpack.c.h.b16 %v1153
      %v2791 = vunpack.c.l.b16 %v1154
      %v2792 = vunpack.c.h.b16 %v1154
      %v2793 = vunpack.c.l.b16 %v1155
      %v2794 = vunpack.c.h.b16 %v1155
      %v2795 = vunpack.c.l.b16 %v1156
      %v2796 = vunpack.c.h.b16 %v1156
      %v2797 = vunpack.c.l.b16 %v1157
      %v2798 = vunpack.c.h.b16 %v1157
      %v2799 = vunpack.c.l.b16 %v1158
      %v2800 = vunpack.c.h.b16 %v1158
      %v2801 = vunpack.c.l.b16 %v1159
      %v2802 = vunpack.c.h.b16 %v1159
      %v2803 = vunpack.c.l.b16 %v1160
      %v2804 = vunpack.c.h.b16 %v1160
      %v2805 = vunpack.c.l.b16 %v1161
      %v2806 = vunpack.c.h.b16 %v1161
      %v2807 = vunpack.c.l.b16 %v1162
      %v2808 = vunpack.c.h.b16 %v1162
      %v2809 = vunpack.c.l.b16 %v1163
      %v2810 = vunpack.c.h.b16 %v1163
      %v2811 = vunpack.c.l.b16 %v1164
      %v2812 = vunpack.c.h.b16 %v1164
      %v2813 = vunpack.c.l.b16 %v1165
      %v2814 = vunpack.c.h.b16 %v1165
      %v2815 = vunpack.c.l.b16 %v1166
      %v2816 = vunpack.c.h.b16 %v1166
      %v2817 = vunpack.c.l.b16 %v1167
      %v2818 = vunpack.c.h.b16 %v1167
      %v2819 = vunpack.c.l.b16 %v1168
      %v2820 = vunpack.c.h.b16 %v1168
      %v2821 = vunpack.c.l.b16 %v1169
      %v2822 = vunpack.c.h.b16 %v1169
      %v2823 = vunpack.c.l.b16 %v1170
      %v2824 = vunpack.c.h.b16 %v1170
      %v2825 = vunpack.c.l.b16 %v1171
      %v2826 = vunpack.c.h.b16 %v1171
      %v2827 = vunpack.c.l.b16 %v1172
      %v2828 = vunpack.c.h.b16 %v1172
      %v2829 = vunpack.c.l.b16 %v1173
      %v2830 = vunpack.c.h.b16 %v1173
      %v2831 = vunpack.c.l.b16 %v1174
      %v2832 = vunpack.c.h.b16 %v1174
      %v2833 = vunpack.c.l.b16 %v1175
      %v2834 = vunpack.c.h.b16 %v1175
      %v2835 = vunpack.c.l.b16 %v1176
      %v2836 = vunpack.c.h.b16 %v1176
      %v2837 = vunpack.c.l.b16 %v1177
      %v2838 = vunpack.c.h.b16 %v1177
      %v2839 = vunpack.c.l.b16 %v1178
      %v2840 = vunpack.c.h.b16 %v1178
      %v2841 = vunpack.c.l.b16 %v1179
      %v2842 = vunpack.c.h.b16 %v1179
      %v2843 = vunpack.c.l.b16 %v1180
      %v2844 = vunpack.c.h.b16 %v1180
      %v2845 = vunpack.c.l.b16 %v1181
      %v2846 = vunpack.c.h.b16 %v1181
      %v2847 = vunpack.c.l.b16 %v1182
      %v2848 = vunpack.c.h.b16 %v1182
      %v2849 = vunpack.c.l.b16 %v1183
      %v2850 = vunpack.c.h.b16 %v1183
      %v2851 = vunpack.c.l.b16 %v1184
      %v2852 = vunpack.c.h.b16 %v1184
      %v2853 = vunpack.c.l.b16 %v1185
      %v2854 = vunpack.c.h.b16 %v1185
      %v2855 = vunpack.c.l.b16 %v1186
      %v2856 = vunpack.c.h.b16 %v1186
      %v2857 = vunpack.c.l.b16 %v1187
      %v2858 = vunpack.c.h.b16 %v1187
      %v2859 = vunpack.c.l.b16 %v1188
      %v2860 = vunpack.c.h.b16 %v1188
      %v2861 = vunpack.c.l.b16 %v1189
      %v2862 = vunpack.c.h.b16 %v1189
      %v2863 = vunpack.c.l.b16 %v1190
      %v2864 = vunpack.c.h.b16 %v1190
      %v2865 = vunpack.c.l.b16 %v1191
      %v2866 = vunpack.c.h.b16 %v1191
      %v2867 = vunpack.c.l.b16 %v1192
      %v2868 = vunpack.c.h.b16 %v1192
      %v2869 = vunpack.c.l.b16 %v1193
      %v2870 = vunpack.c.h.b16 %v1193
      %v2871 = vunpack.c.l.b16 %v1194
      %v2872 = vunpack.c.h.b16 %v1194
      %v2873 = vunpack.c.l.b16 %v1195
      %v2874 = vunpack.c.h.b16 %v1195
      %v2875 = vunpack.c.l.b16 %v1196
      %v2876 = vunpack.c.h.b16 %v1196
      %v2877 = vunpack.c.l.b16 %v1197
      %v2878 = vunpack.c.h.b16 %v1197
      %v2879 = vunpack.c.l.b16 %v1198
      %v2880 = vunpack.c.h.b16 %v1198
      %v2881 = vunpack.c.l.b16 %v1199
      %v2882 = vunpack.c.h.b16 %v1199
      %v2883 = vunpack.c.l.b16 %v1200
      %v2884 = vunpack.c.h.b16 %v1200
      %v2885 = vunpack.c.l.b16 %v1201
      %v2886 = vunpack.c.h.b16 %v1201
      %v2887 = vunpack.c.l.b16 %v1202
      %v2888 = vunpack.c.h.b16 %v1202
      %v2889 = vunpack.c.l.b16 %v1203
      %v2890 = vunpack.c.h.b16 %v1203
      %v2891 = vunpack.c.l.b16 %v1204
      %v2892 = vunpack.c.h.b16 %v1204
      %v2893 = vunpack.c.l.b16 %v1205
      %v2894 = vunpack.c.h.b16 %v1205
      %v2895 = vunpack.c.l.b16 %v1206
      %v2896 = vunpack.c.h.b16 %v1206
      %v2897 = vunpack.c.l.b16 %v1207
      %v2898 = vunpack.c.h.b16 %v1207
      %v2899 = vunpack.c.l.b16 %v1208
      %v2900 = vunpack.c.h.b16 %v1208
      %v2901 = vunpack.c.l.b16 %v1209
      %v2902 = vunpack.c.h.b16 %v1209
      %v2903 = vunpack.c.l.b16 %v1210
      %v2904 = vunpack.c.h.b16 %v1210
      %v2905 = vunpack.c.l.b16 %v1211
      %v2906 = vunpack.c.h.b16 %v1211
      %v2907 = vunpack.c.l.b16 %v1212
      %v2908 = vunpack.c.h.b16 %v1212
      %v2909 = vunpack.c.l.b16 %v1213
      %v2910 = vunpack.c.h.b16 %v1213
      %v2911 = vunpack.c.l.b16 %v1214
      %v2912 = vunpack.c.h.b16 %v1214
      %v2913 = vunpack.c.l.b16 %v1215
      %v2914 = vunpack.c.h.b16 %v1215
      %v2915 = vunpack.c.l.b16 %v1216
      %v2916 = vunpack.c.h.b16 %v1216
      %v2917 = vunpack.c.l.b16 %v1217
      %v2918 = vunpack.c.h.b16 %v1217
      %v2919 = vunpack.c.l.b16 %v1218
      %v2920 = vunpack.c.h.b16 %v1218
      %v2921 = vunpack.c.l.b16 %v1219
      %v2922 = vunpack.c.h.b16 %v1219
      %v2923 = vunpack.c.l.b16 %v1220
      %v2924 = vunpack.c.h.b16 %v1220
      %v2925 = vunpack.c.l.b16 %v1221
      %v2926 = vunpack.c.h.b16 %v1221
      %v2927 = vunpack.c.l.b16 %v1222
      %v2928 = vunpack.c.h.b16 %v1222
      %v2929 = vunpack.c.l.b16 %v1223
      %v2930 = vunpack.c.h.b16 %v1223
      %v2931 = vunpack.c.l.b16 %v1224
      %v2932 = vunpack.c.h.b16 %v1224
      %v2933 = vunpack.c.l.b16 %v1225
      %v2934 = vunpack.c.h.b16 %v1225
      %v2935 = vunpack.c.l.b16 %v1226
      %v2936 = vunpack.c.h.b16 %v1226
      %v2937 = vunpack.c.l.b16 %v1227
      %v2938 = vunpack.c.h.b16 %v1227
      %v2939 = vunpack.c.l.b16 %v1228
      %v2940 = vunpack.c.h.b16 %v1228
      %v2941 = vunpack.c.l.b16 %v1229
      %v2942 = vunpack.c.h.b16 %v1229
      %v2943 = vunpack.c.l.b16 %v1230
      %v2944 = vunpack.c.h.b16 %v1230
      %v2945 = vunpack.c.l.b16 %v1231
      %v2946 = vunpack.c.h.b16 %v1231
      %v2947 = vunpack.c.l.b16 %v1232
      %v2948 = vunpack.c.h.b16 %v1232
      %v2949 = vunpack.c.l.b16 %v1233
      %v2950 = vunpack.c.h.b16 %v1233
      %v2951 = vunpack.c.l.b16 %v1234
      %v2952 = vunpack.c.h.b16 %v1234
      %v2953 = vunpack.c.l.b16 %v1235
      %v2954 = vunpack.c.h.b16 %v1235
      %v2955 = vunpack.c.l.b16 %v1236
      %v2956 = vunpack.c.h.b16 %v1236
      %v2957 = vunpack.c.l.b16 %v1237
      %v2958 = vunpack.c.h.b16 %v1237
      %v2959 = vunpack.c.l.b16 %v1238
      %v2960 = vunpack.c.h.b16 %v1238
      %v2961 = vunpack.c.l.b16 %v1239
      %v2962 = vunpack.c.h.b16 %v1239
      %v2963 = vunpack.c.l.b16 %v1240
      %v2964 = vunpack.c.h.b16 %v1240
      %v2965 = vunpack.c.l.b16 %v1241
      %v2966 = vunpack.c.h.b16 %v1241
      %v2967 = vunpack.c.l.b16 %v1242
      %v2968 = vunpack.c.h.b16 %v1242
      %v2969 = vunpack.c.l.b16 %v1243
      %v2970 = vunpack.c.h.b16 %v1243
      %v2971 = vunpack.c.l.b16 %v1244
      %v2972 = vunpack.c.h.b16 %v1244
      %v2973 = vunpack.c.l.b16 %v1245
      %v2974 = vunpack.c.h.b16 %v1245
      %v2975 = vunpack.c.l.b16 %v1246
      %v2976 = vunpack.c.h.b16 %v1246
      %v2977 = vunpack.c.l.b16 %v1247
      %v2978 = vunpack.c.h.b16 %v1247
      %v2979 = vunpack.c.l.b16 %v1248
      %v2980 = vunpack.c.h.b16 %v1248
      %v2981 = vunpack.c.l.b16 %v1249
      %v2982 = vunpack.c.h.b16 %v1249
      %v2983 = vunpack.c.l.b16 %v1250
      %v2984 = vunpack.c.h.b16 %v1250
      %v2985 = vunpack.c.l.b16 %v1251
      %v2986 = vunpack.c.h.b16 %v1251
      %v2987 = vunpack.c.l.b16 %v1252
      %v2988 = vunpack.c.h.b16 %v1252
      %v2989 = vunpack.c.l.b16 %v1253
      %v2990 = vunpack.c.h.b16 %v1253
      %v2991 = vunpack.c.l.b16 %v1254
      %v2992 = vunpack.c.h.b16 %v1254
      %v2993 = vunpack.c.l.b16 %v1255
      %v2994 = vunpack.c.h.b16 %v1255
      %v2995 = vunpack.c.l.b16 %v1256
      %v2996 = vunpack.c.h.b16 %v1256
      %v2997 = vunpack.c.l.b16 %v1257
      %v2998 = vunpack.c.h.b16 %v1257
      %v2999 = vunpack.c.l.b16 %v1258
      %v3000 = vunpack.c.h.b16 %v1258
      %v3001 = vunpack.c.l.b16 %v1259
      %v3002 = vunpack.c.h.b16 %v1259
      %v3003 = vunpack.c.l.b16 %v1260
      %v3004 = vunpack.c.h.b16 %v1260
      %v3005 = vunpack.c.l.b16 %v1261
      %v3006 = vunpack.c.h.b16 %v1261
      %v3007 = vunpack.c.l.b16 %v1262
      %v3008 = vunpack.c.h.b16 %v1262
      %v3009 = vunpack.c.l.b16 %v1263
      %v3010 = vunpack.c.h.b16 %v1263
      %v3011 = vunpack.c.l.b16 %v1264
      %v3012 = vunpack.c.h.b16 %v1264
      %v3013 = vunpack.c.l.b16 %v1265
      %v3014 = vunpack.c.h.b16 %v1265
      %v3015 = vunpack.c.l.b16 %v1266
      %v3016 = vunpack.c.h.b16 %v1266
      %v3017 = vunpack.c.l.b16 %v1267
      %v3018 = vunpack.c.h.b16 %v1267
      %v3019 = vunpack.c.l.b16 %v1268
      %v3020 = vunpack.c.h.b16 %v1268
      %v3021 = vunpack.c.l.b16 %v1269
      %v3022 = vunpack.c.h.b16 %v1269
      %v3023 = vunpack.c.l.b16 %v1270
      %v3024 = vunpack.c.h.b16 %v1270
      %v3025 = vunpack.c.l.b16 %v1271
      %v3026 = vunpack.c.h.b16 %v1271
      %v3027 = vunpack.c.l.b16 %v1272
      %v3028 = vunpack.c.h.b16 %v1272
      %v3029 = vunpack.c.l.b16 %v1273
      %v3030 = vunpack.c.h.b16 %v1273
      %v3031 = vunpack.c.l.b16 %v1274
      %v3032 = vunpack.c.h.b16 %v1274
      %v3033 = vunpack.c.l.b16 %v1275
      %v3034 = vunpack.c.h.b16 %v1275
      %v3035 = vunpack.c.l.b16 %v1276
      %v3036 = vunpack.c.h.b16 %v1276
      %v3037 = vunpack.c.l.b16 %v1277
      %v3038 = vunpack.c.h.b16 %v1277
      %v3039 = vunpack.c.l.b16 %v1278
      %v3040 = vunpack.c.h.b16 %v1278
      %v3041 = vunpack.c.l.b16 %v1279
      %v3042 = vunpack.c.h.b16 %v1279
      %v3043 = vunpack.c.l.b16 %v1280
      %v3044 = vunpack.c.h.b16 %v1280
      %v3045 = vpack.c.b16 %v1875, %v1869
      %v3046 = vpack.c.b16 %v1876, %v1870
      %v3047 = vpack.c.b16 %v1877, %v1871
      %v3048 = vpack.c.b16 %v1878, %v1872
      %v3049 = vpack.c.b16 %v1879, %v1873
      %v3050 = vpack.c.b16 %v1880, %v1874
      %v3051 = vpack.c.b16 %v1887, %v1881
      %v3052 = vpack.c.b16 %v1888, %v1882
      %v3053 = vpack.c.b16 %v1889, %v1883
      %v3054 = vpack.c.b16 %v1890, %v1884
      %v3055 = vpack.c.b16 %v1891, %v1885
      %v3056 = vpack.c.b16 %v1892, %v1886
      %v3057 = vpack.c.b16 %v1899, %v1893
      %v3058 = vpack.c.b16 %v1900, %v1894
      %v3059 = vpack.c.b16 %v1901, %v1895
      %v3060 = vpack.c.b16 %v1902, %v1896
      %v3061 = vpack.c.b16 %v1903, %v1897
      %v3062 = vpack.c.b16 %v1904, %v1898
      %v3063 = vpack.c.b16 %v1911, %v1905
      %v3064 = vpack.c.b16 %v1912, %v1906
      %v3065 = vpack.c.b16 %v1913, %v1907
      %v3066 = vpack.c.b16 %v1914, %v1908
      %v3067 = vpack.c.b16 %v1915, %v1909
      %v3068 = vpack.c.b16 %v1916, %v1910
      %v3069 = vpack.c.b16 %v1923, %v1917
      %v3070 = vpack.c.b16 %v1924, %v1918
      %v3071 = vpack.c.b16 %v1925, %v1919
      %v3072 = vpack.c.b16 %v1926, %v1920
      %v3073 = vpack.c.b16 %v1927, %v1921
      %v3074 = vpack.c.b16 %v1928, %v1922
      %v3075 = vpack.c.b16 %v1935, %v1929
      %v3076 = vpack.c.b16 %v1936, %v1930
      %v3077 = vpack.c.b16 %v1937, %v1931
      %v3078 = vpack.c.b16 %v1938, %v1932
      %v3079 = vpack.c.b16 %v1939, %v1933
      %v3080 = vpack.c.b16 %v1940, %v1934
      %v3081 = vpack.c.b16 %v1947, %v1941
      %v3082 = vpack.c.b16 %v1948, %v1942
      %v3083 = vpack.c.b16 %v1949, %v1943
      %v3084 = vpack.c.b16 %v1950, %v1944
      %v3085 = vpack.c.b16 %v1951, %v1945
      %v3086 = vpack.c.b16 %v1952, %v1946
      %v3087 = vpack.c.b16 %v1959, %v1953
      %v3088 = vpack.c.b16 %v1960, %v1954
      %v3089 = vpack.c.b16 %v1961, %v1955
      %v3090 = vpack.c.b16 %v1962, %v1956
      %v3091 = vpack.c.b16 %v1963, %v1957
      %v3092 = vpack.c.b16 %v1964, %v1958
      %v3093 = vpack.c.b16 %v1971, %v1965
      %v3094 = vpack.c.b16 %v1972, %v1966
      %v3095 = vpack.c.b16 %v1973, %v1967
      %v3096 = vpack.c.b16 %v1974, %v1968
      %v3097 = vpack.c.b16 %v1975, %v1969
      %v3098 = vpack.c.b16 %v1976, %v1970
      %v3099 = vpack.c.b16 %v1983, %v1977
      %v3100 = vpack.c.b16 %v1984, %v1978
      %v3101 = vpack.c.b16 %v1985, %v1979
      %v3102 = vpack.c.b16 %v1986, %v1980
      %v3103 = vpack.c.b16 %v1987, %v1981
      %v3104 = vpack.c.b16 %v1988, %v1982
      %v3105 = vpack.c.b16 %v1995, %v1989
      %v3106 = vpack.c.b16 %v1996, %v1990
      %v3107 = vpack.c.b16 %v1997, %v1991
      %v3108 = vpack.c.b16 %v1998, %v1992
      %v3109 = vpack.c.b16 %v1999, %v1993
      %v3110 = vpack.c.b16 %v2000, %v1994
      %v3111 = vpack.c.b16 %v2007, %v2001
      %v3112 = vpack.c.b16 %v2008, %v2002
      %v3113 = vpack.c.b16 %v2009, %v2003
      %v3114 = vpack.c.b16 %v2010, %v2004
      %v3115 = vpack.c.b16 %v2011, %v2005
      %v3116 = vpack.c.b16 %v2012, %v2006
      %v3117 = vpack.c.b16 %v2019, %v2013
      %v3118 = vpack.c.b16 %v2020, %v2014
      %v3119 = vpack.c.b16 %v2021, %v2015
      %v3120 = vpack.c.b16 %v2022, %v2016
      %v3121 = vpack.c.b16 %v2023, %v2017
      %v3122 = vpack.c.b16 %v2024, %v2018
      %v3123 = vpack.c.b16 %v2031, %v2025
      %v3124 = vpack.c.b16 %v2032, %v2026
      %v3125 = vpack.c.b16 %v2033, %v2027
      %v3126 = vpack.c.b16 %v2034, %v2028
      %v3127 = vpack.c.b16 %v2035, %v2029
      %v3128 = vpack.c.b16 %v2036, %v2030
      %v3129 = vpack.c.b16 %v2043, %v2037
      %v3130 = vpack.c.b16 %v2044, %v2038
      %v3131 = vpack.c.b16 %v2045, %v2039
      %v3132 = vpack.c.b16 %v2046, %v2040
      %v3133 = vpack.c.b16 %v2047, %v2041
      %v3134 = vpack.c.b16 %v2048, %v2042
      %v3135 = vpack.c.b16 %v2055, %v2049
      %v3136 = vpack.c.b16 %v2056, %v2050
      %v3137 = vpack.c.b16 %v2057, %v2051
      %v3138 = vpack.c.b16 %v2058, %v2052
      %v3139 = vpack.c.b16 %v2059, %v2053
      %v3140 = vpack.c.b16 %v2060, %v2054
      %v3141 = vpack.c.b16 %v2067, %v2061
      %v3142 = vpack.c.b16 %v2068, %v2062
      %v3143 = vpack.c.b16 %v2069, %v2063
      %v3144 = vpack.c.b16 %v2070, %v2064
      %v3145 = vpack.c.b16 %v2071, %v2065
      %v3146 = vpack.c.b16 %v2072, %v2066
      %v3147 = vpack.c.b16 %v2079, %v2073
      %v3148 = vpack.c.b16 %v2080, %v2074
      %v3149 = vpack.c.b16 %v2081, %v2075
      %v3150 = vpack.c.b16 %v2082, %v2076
      %v3151 = vpack.c.b16 %v2083, %v2077
      %v3152 = vpack.c.b16 %v2084, %v2078
      %v3153 = vpack.c.b16 %v2091, %v2085
      %v3154 = vpack.c.b16 %v2092, %v2086
      %v3155 = vpack.c.b16 %v2093, %v2087
      %v3156 = vpack.c.b16 %v2094, %v2088
      %v3157 = vpack.c.b16 %v2095, %v2089
      %v3158 = vpack.c.b16 %v2096, %v2090
      %v3159 = vpack.c.b16 %v2103, %v2097
      %v3160 = vpack.c.b16 %v2104, %v2098
      %v3161 = vpack.c.b16 %v2105, %v2099
      %v3162 = vpack.c.b16 %v2106, %v2100
      %v3163 = vpack.c.b16 %v2107, %v2101
      %v3164 = vpack.c.b16 %v2108, %v2102
      %v3165 = vpack.c.b16 %v2115, %v2109
      %v3166 = vpack.c.b16 %v2116, %v2110
      %v3167 = vpack.c.b16 %v2117, %v2111
      %v3168 = vpack.c.b16 %v2118, %v2112
      %v3169 = vpack.c.b16 %v2119, %v2113
      %v3170 = vpack.c.b16 %v2120, %v2114
      %v3171 = vpack.c.b16 %v2127, %v2121
      %v3172 = vpack.c.b16 %v2128, %v2122
      %v3173 = vpack.c.b16 %v2129, %v2123
      %v3174 = vpack.c.b16 %v2130, %v2124
      %v3175 = vpack.c.b16 %v2131, %v2125
      %v3176 = vpack.c.b16 %v2132, %v2126
      %v3177 = vpack.c.b16 %v2139, %v2133
      %v3178 = vpack.c.b16 %v2140, %v2134
      %v3179 = vpack.c.b16 %v2141, %v2135
      %v3180 = vpack.c.b16 %v2142, %v2136
      %v3181 = vpack.c.b16 %v2143, %v2137
      %v3182 = vpack.c.b16 %v2144, %v2138
      %v3183 = vpack.c.b16 %v2151, %v2145
      %v3184 = vpack.c.b16 %v2152, %v2146
      %v3185 = vpack.c.b16 %v2153, %v2147
      %v3186 = vpack.c.b16 %v2154, %v2148
      %v3187 = vpack.c.b16 %v2155, %v2149
      %v3188 = vpack.c.b16 %v2156, %v2150
      %v3189 = vpack.c.b16 %v2163, %v2157
      %v3190 = vpack.c.b16 %v2164, %v2158
      %v3191 = vpack.c.b16 %v2165, %v2159
      %v3192 = vpack.c.b16 %v2166, %v2160
      %v3193 = vpack.c.b16 %v2167, %v2161
      %v3194 = vpack.c.b16 %v2168, %v2162
      %v3195 = vpack.c.b16 %v2175, %v2169
      %v3196 = vpack.c.b16 %v2176, %v2170
      %v3197 = vpack.c.b16 %v2177, %v2171
      %v3198 = vpack.c.b16 %v2178, %v2172
      %v3199 = vpack.c.b16 %v2179, %v2173
      %v3200 = vpack.c.b16 %v2180, %v2174
      %v3201 = vpack.c.b16 %v2187, %v2181
      %v3202 = vpack.c.b16 %v2188, %v2182
      %v3203 = vpack.c.b16 %v2189, %v2183
      %v3204 = vpack.c.b16 %v2190, %v2184
      %v3205 = vpack.c.b16 %v2191, %v2185
      %v3206 = vpack.c.b16 %v2192, %v2186
      %v3207 = vpack.c.b16 %v2199, %v2193
      %v3208 = vpack.c.b16 %v2200, %v2194
      %v3209 = vpack.c.b16 %v2201, %v2195
      %v3210 = vpack.c.b16 %v2202, %v2196
      %v3211 = vpack.c.b16 %v2203, %v2197
      %v3212 = vpack.c.b16 %v2204, %v2198
      %v3213 = vpack.c.b16 %v2211, %v2205
      %v3214 = vpack.c.b16 %v2212, %v2206
      %v3215 = vpack.c.b16 %v2213, %v2207
      %v3216 = vpack.c.b16 %v2214, %v2208
      %v3217 = vpack.c.b16 %v2215, %v2209
      %v3218 = vpack.c.b16 %v2216, %v2210
      %v3219 = vpack.c.b16 %v2223, %v2217
      %v3220 = vpack.c.b16 %v2224, %v2218
      %v3221 = vpack.c.b16 %v2225, %v2219
      %v3222 = vpack.c.b16 %v2226, %v2220
      %v3223 = vpack.c.b16 %v2227, %v2221
      %v3224 = vpack.c.b16 %v2228, %v2222
      %v3225 = vpack.c.b16 %v2235, %v2229
      %v3226 = vpack.c.b16 %v2236, %v2230
      %v3227 = vpack.c.b16 %v2237, %v2231
      %v3228 = vpack.c.b16 %v2238, %v2232
      %v3229 = vpack.c.b16 %v2239, %v2233
      %v3230 = vpack.c.b16 %v2240, %v2234
      %v3231 = vpack.c.b16 %v2247, %v2241
      %v3232 = vpack.c.b16 %v2248, %v2242
      %v3233 = vpack.c.b16 %v2249, %v2243
      %v3234 = vpack.c.b16 %v2250, %v2244
      %v3235 = vpack.c.b16 %v2251, %v2245
      %v3236 = vpack.c.b16 %v2252, %v2246
      %v3237 = vpack.c.b16 %v2259, %v2253
      %v3238 = vpack.c.b16 %v2260, %v2254
      %v3239 = vpack.c.b16 %v2261, %v2255
      %v3240 = vpack.c.b16 %v2262, %v2256
      %v3241 = vpack.c.b16 %v2263, %v2257
      %v3242 = vpack.c.b16 %v2264, %v2258
      %v3243 = vpack.c.b16 %v2271, %v2265
      %v3244 = vpack.c.b16 %v2272, %v2266
      %v3245 = vpack.c.b16 %v2273, %v2267
      %v3246 = vpack.c.b16 %v2274, %v2268
      %v3247 = vpack.c.b16 %v2275, %v2269
      %v3248 = vpack.c.b16 %v2276, %v2270
      %v3249 = vpack.c.b16 %v2283, %v2277
      %v3250 = vpack.c.b16 %v2284, %v2278
      %v3251 = vpack.c.b16 %v2285, %v2279
      %v3252 = vpack.c.b16 %v2286, %v2280
      %v3253 = vpack.c.b16 %v2287, %v2281
      %v3254 = vpack.c.b16 %v2288, %v2282
      %v3255 = vpack.c.b16 %v2295, %v2289
      %v3256 = vpack.c.b16 %v2296, %v2290
      %v3257 = vpack.c.b16 %v2297, %v2291
      %v3258 = vpack.c.b16 %v2298, %v2292
      %v3259 = vpack.c.b16 %v2299, %v2293
      %v3260 = vpack.c.b16 %v2300, %v2294
      %v3261 = vpack.c.b16 %v2307, %v2301
      %v3262 = vpack.c.b16 %v2308, %v2302
      %v3263 = vpack.c.b16 %v2309, %v2303
      %v3264 = vpack.c.b16 %v2310, %v2304
      %v3265 = vpack.c.b16 %v2311, %v2305
      %v3266 = vpack.c.b16 %v2312, %v2306
      %v3267 = vpack.c.b16 %v2319, %v2313
      %v3268 = vpack.c.b16 %v2320, %v2314
      %v3269 = vpack.c.b16 %v2321, %v2315
      %v3270 = vpack.c.b16 %v2322, %v2316
      %v3271 = vpack.c.b16 %v2323, %v2317
      %v3272 = vpack.c.b16 %v2324, %v2318
      %v3273 = vpack.c.b16 %v2331, %v2325
      %v3274 = vpack.c.b16 %v2332, %v2326
      %v3275 = vpack.c.b16 %v2333, %v2327
      %v3276 = vpack.c.b16 %v2334, %v2328
      %v3277 = vpack.c.b16 %v2335, %v2329
      %v3278 = vpack.c.b16 %v2336, %v2330
      %v3279 = vpack.c.b16 %v2343, %v2337
      %v3280 = vpack.c.b16 %v2344, %v2338
      %v3281 = vpack.c.b16 %v2345, %v2339
      %v3282 = vpack.c.b16 %v2346, %v2340
      %v3283 = vpack.c.b16 %v2347, %v2341
      %v3284 = vpack.c.b16 %v2348, %v2342
      %v3285 = vpack.c.b16 %v2355, %v2349
      %v3286 = vpack.c.b16 %v2356, %v2350
      %v3287 = vpack.c.b16 %v2357, %v2351
      %v3288 = vpack.c.b16 %v2358, %v2352
      %v3289 = vpack.c.b16 %v2359, %v2353
      %v3290 = vpack.c.b16 %v2360, %v2354
      %v3291 = vpack.c.b16 %v2367, %v2361
      %v3292 = vpack.c.b16 %v2368, %v2362
      %v3293 = vpack.c.b16 %v2369, %v2363
      %v3294 = vpack.c.b16 %v2370, %v2364
      %v3295 = vpack.c.b16 %v2371, %v2365
      %v3296 = vpack.c.b16 %v2372, %v2366
      %v3297 = vpack.c.b16 %v2379, %v2373
      %v3298 = vpack.c.b16 %v2380, %v2374
      %v3299 = vpack.c.b16 %v2381, %v2375
      %v3300 = vpack.c.b16 %v2382, %v2376
      %v3301 = vpack.c.b16 %v2383, %v2377
      %v3302 = vpack.c.b16 %v2384, %v2378
      %v3303 = vpack.c.b16 %v2391, %v2385
      %v3304 = vpack.c.b16 %v2392, %v2386
      %v3305 = vpack.c.b16 %v2393, %v2387
      %v3306 = vpack.c.b16 %v2394, %v2388
      %v3307 = vpack.c.b16 %v2395, %v2389
      %v3308 = vpack.c.b16 %v2396, %v2390
      %v3309 = vpack.c.b16 %v2403, %v2397
      %v3310 = vpack.c.b16 %v2404, %v2398
      %v3311 = vpack.c.b16 %v2405, %v2399
      %v3312 = vpack.c.b16 %v2406, %v2400
      %v3313 = vpack.c.b16 %v2407, %v2401
      %v3314 = vpack.c.b16 %v2408, %v2402
      %v3315 = vpack.c.b16 %v2415, %v2409
      %v3316 = vpack.c.b16 %v2416, %v2410
      %v3317 = vpack.c.b16 %v2417, %v2411
      %v3318 = vpack.c.b16 %v2418, %v2412
      %v3319 = vpack.c.b16 %v2419, %v2413
      %v3320 = vpack.c.b16 %v2420, %v2414
      %v3321 = vpack.c.b16 %v2427, %v2421
      %v3322 = vpack.c.b16 %v2428, %v2422
      %v3323 = vpack.c.b16 %v2429, %v2423
      %v3324 = vpack.c.b16 %v2430, %v2424
      %v3325 = vpack.c.b16 %v2431, %v2425
      %v3326 = vpack.c.b16 %v2432, %v2426
      %v3327 = vpack.c.b16 %v2439, %v2433
      %v3328 = vpack.c.b16 %v2440, %v2434
      %v3329 = vpack.c.b16 %v2441, %v2435
      %v3330 = vpack.c.b16 %v2442, %v2436
      %v3331 = vpack.c.b16 %v2443, %v2437
      %v3332 = vpack.c.b16 %v2444, %v2438
      %v3333 = vpack.c.b16 %v2451, %v2445
      %v3334 = vpack.c.b16 %v2452, %v2446
      %v3335 = vpack.c.b16 %v2453, %v2447
      %v3336 = vpack.c.b16 %v2454, %v2448
      %v3337 = vpack.c.b16 %v2455, %v2449
      %v3338 = vpack.c.b16 %v2456, %v2450
      %v3339 = vpack.c.b16 %v2463, %v2457
      %v3340 = vpack.c.b16 %v2464, %v2458
      %v3341 = vpack.c.b16 %v2465, %v2459
      %v3342 = vpack.c.b16 %v2466, %v2460
      %v3343 = vpack.c.b16 %v2467, %v2461
      %v3344 = vpack.c.b16 %v2468, %v2462
      %v3345 = vpack.c.b16 %v2475, %v2469
      %v3346 = vpack.c.b16 %v2476, %v2470
      %v3347 = vpack.c.b16 %v2477, %v2471
      %v3348 = vpack.c.b16 %v2478, %v2472
      %v3349 = vpack.c.b16 %v2479, %v2473
      %v3350 = vpack.c.b16 %v2480, %v2474
      %v3351 = vpack.c.b16 %v2487, %v2481
      %v3352 = vpack.c.b16 %v2488, %v2482
      %v3353 = vpack.c.b16 %v2489, %v2483
      %v3354 = vpack.c.b16 %v2490, %v2484
      %v3355 = vpack.c.b16 %v2491, %v2485
      %v3356 = vpack.c.b16 %v2492, %v2486
      %v3357 = vpack.c.b16 %v2499, %v2493
      %v3358 = vpack.c.b16 %v2500, %v2494
      %v3359 = vpack.c.b16 %v2501, %v2495
      %v3360 = vpack.c.b16 %v2502, %v2496
      %v3361 = vpack.c.b16 %v2503, %v2497
      %v3362 = vpack.c.b16 %v2504, %v2498
      %v3363 = vpack.c.b16 %v2511, %v2505
      %v3364 = vpack.c.b16 %v2512, %v2506
      %v3365 = vpack.c.b16 %v2513, %v2507
      %v3366 = vpack.c.b16 %v2514, %v2508
      %v3367 = vpack.c.b16 %v2515, %v2509
      %v3368 = vpack.c.b16 %v2516, %v2510
      %v3369 = vpack.c.b16 %v2523, %v2517
      %v3370 = vpack.c.b16 %v2524, %v2518
      %v3371 = vpack.c.b16 %v2525, %v2519
      %v3372 = vpack.c.b16 %v2526, %v2520
      %v3373 = vpack.c.b16 %v2527, %v2521
      %v3374 = vpack.c.b16 %v2528, %v2522
      %v3375 = vpack.c.b16 %v2535, %v2529
      %v3376 = vpack.c.b16 %v2536, %v2530
      %v3377 = vpack.c.b16 %v2537, %v2531
      %v3378 = vpack.c.b16 %v2538, %v2532
      %v3379 = vpack.c.b16 %v2539, %v2533
      %v3380 = vpack.c.b16 %v2540, %v2534
      %v3381 = vpack.c.b16 %v2547, %v2541
      %v3382 = vpack.c.b16 %v2548, %v2542
      %v3383 = vpack.c.b16 %v2549, %v2543
      %v3384 = vpack.c.b16 %v2550, %v2544
      %v3385 = vpack.c.b16 %v2551, %v2545
      %v3386 = vpack.c.b16 %v2552, %v2546
      %v3387 = vpack.c.b16 %v2559, %v2553
      %v3388 = vpack.c.b16 %v2560, %v2554
      %v3389 = vpack.c.b16 %v2561, %v2555
      %v3390 = vpack.c.b16 %v2562, %v2556
      %v3391 = vpack.c.b16 %v2563, %v2557
      %v3392 = vpack.c.b16 %v2564, %v2558
      %v3393 = vpack.c.b16 %v2571, %v2565
      %v3394 = vpack.c.b16 %v2572, %v2566
      %v3395 = vpack.c.b16 %v2573, %v2567
      %v3396 = vpack.c.b16 %v2574, %v2568
      %v3397 = vpack.c.b16 %v2575, %v2569
      %v3398 = vpack.c.b16 %v2576, %v2570
      %v3399 = vpack.c.b16 %v2583, %v2577
      %v3400 = vpack.c.b16 %v2584, %v2578
      %v3401 = vpack.c.b16 %v2585, %v2579
      %v3402 = vpack.c.b16 %v2586, %v2580
      %v3403 = vpack.c.b16 %v2587, %v2581
      %v3404 = vpack.c.b16 %v2588, %v2582
      %v3405 = vpack.c.b16 %v2595, %v2589
      %v3406 = vpack.c.b16 %v2596, %v2590
      %v3407 = vpack.c.b16 %v2597, %v2591
      %v3408 = vpack.c.b16 %v2598, %v2592
      %v3409 = vpack.c.b16 %v2599, %v2593
      %v3410 = vpack.c.b16 %v2600, %v2594
      %v3411 = vpack.c.b16 %v2607, %v2601
      %v3412 = vpack.c.b16 %v2608, %v2602
      %v3413 = vpack.c.b16 %v2609, %v2603
      %v3414 = vpack.c.b16 %v2610, %v2604
      %v3415 = vpack.c.b16 %v2611, %v2605
      %v3416 = vpack.c.b16 %v2612, %v2606
      %v3417 = vpack.c.b16 %v2619, %v2613
      %v3418 = vpack.c.b16 %v2620, %v2614
      %v3419 = vpack.c.b16 %v2621, %v2615
      %v3420 = vpack.c.b16 %v2622, %v2616
      %v3421 = vpack.c.b16 %v2623, %v2617
      %v3422 = vpack.c.b16 %v2624, %v2618
      %v3423 = vpack.c.b16 %v2631, %v2625
      %v3424 = vpack.c.b16 %v2632, %v2626
      %v3425 = vpack.c.b16 %v2633, %v2627
      %v3426 = vpack.c.b16 %v2634, %v2628
      %v3427 = vpack.c.b16 %v2635, %v2629
      %v3428 = vpack.c.b16 %v2636, %v2630
      %v3429 = vpack.c.b16 %v2643, %v2637
      %v3430 = vpack.c.b16 %v2644, %v2638
      %v3431 = vpack.c.b16 %v2645, %v2639
      %v3432 = vpack.c.b16 %v2646, %v2640
      %v3433 = vpack.c.b16 %v2647, %v2641
      %v3434 = vpack.c.b16 %v2648, %v2642
      %v3435 = vpack.c.b16 %v2655, %v2649
      %v3436 = vpack.c.b16 %v2656, %v2650
      %v3437 = vpack.c.b16 %v2657, %v2651
      %v3438 = vpack.c.b16 %v2658, %v2652
      %v3439 = vpack.c.b16 %v2659, %v2653
      %v3440 = vpack.c.b16 %v2660, %v2654
      %v3441 = vpack.c.b16 %v2667, %v2661
      %v3442 = vpack.c.b16 %v2668, %v2662
      %v3443 = vpack.c.b16 %v2669, %v2663
      %v3444 = vpack.c.b16 %v2670, %v2664
      %v3445 = vpack.c.b16 %v2671, %v2665
      %v3446 = vpack.c.b16 %v2672, %v2666
      %v3447 = vpack.c.b16 %v2679, %v2673
      %v3448 = vpack.c.b16 %v2680, %v2674
      %v3449 = vpack.c.b16 %v2681, %v2675
      %v3450 = vpack.c.b16 %v2682, %v2676
      %v3451 = vpack.c.b16 %v2683, %v2677
      %v3452 = vpack.c.b16 %v2684, %v2678
      %v3453 = vpack.c.b16 %v2691, %v2685
      %v3454 = vpack.c.b16 %v2692, %v2686
      %v3455 = vpack.c.b16 %v2693, %v2687
      %v3456 = vpack.c.b16 %v2694, %v2688
      %v3457 = vpack.c.b16 %v2695, %v2689
      %v3458 = vpack.c.b16 %v2696, %v2690
      %v3459 = vpack.c.b16 %v2703, %v2697
      %v3460 = vpack.c.b16 %v2704, %v2698
      %v3461 = vpack.c.b16 %v2705, %v2699
      %v3462 = vpack.c.b16 %v2706, %v2700
      %v3463 = vpack.c.b16 %v2707, %v2701
      %v3464 = vpack.c.b16 %v2708, %v2702
      %v3465 = vpack.c.b16 %v2715, %v2709
      %v3466 = vpack.c.b16 %v2716, %v2710
      %v3467 = vpack.c.b16 %v2717, %v2711
      %v3468 = vpack.c.b16 %v2718, %v2712
      %v3469 = vpack.c.b16 %v2719, %v2713
      %v3470 = vpack.c.b16 %v2720, %v2714
      %v3471 = vpack.c.b16 %v2727, %v2721
      %v3472 = vpack.c.b16 %v2728, %v2722
      %v3473 = vpack.c.b16 %v2729, %v2723
      %v3474 = vpack.c.b16 %v2730, %v2724
      %v3475 = vpack.c.b16 %v2731, %v2725
      %v3476 = vpack.c.b16 %v2732, %v2726
      %v3477 = vpack.c.b16 %v2739, %v2733
      %v3478 = vpack.c.b16 %v2740, %v2734
      %v3479 = vpack.c.b16 %v2741, %v2735
      %v3480 = vpack.c.b16 %v2742, %v2736
      %v3481 = vpack.c.b16 %v2743, %v2737
      %v3482 = vpack.c.b16 %v2744, %v2738
      %v3483 = vpack.c.b16 %v2751, %v2745
      %v3484 = vpack.c.b16 %v2752, %v2746
      %v3485 = vpack.c.b16 %v2753, %v2747
      %v3486 = vpack.c.b16 %v2754, %v2748
      %v3487 = vpack.c.b16 %v2755, %v2749
      %v3488 = vpack.c.b16 %v2756, %v2750
      %v3489 = vpack.c.b16 %v2763, %v2757
      %v3490 = vpack.c.b16 %v2764, %v2758
      %v3491 = vpack.c.b16 %v2765, %v2759
      %v3492 = vpack.c.b16 %v2766, %v2760
      %v3493 = vpack.c.b16 %v2767, %v2761
      %v3494 = vpack.c.b16 %v2768, %v2762
      %v3495 = vpack.c.b16 %v2775, %v2769
      %v3496 = vpack.c.b16 %v2776, %v2770
      %v3497 = vpack.c.b16 %v2777, %v2771
      %v3498 = vpack.c.b16 %v2778, %v2772
      %v3499 = vpack.c.b16 %v2779, %v2773
      %v3500 = vpack.c.b16 %v2780, %v2774
      %v3501 = vpack.c.b16 %v2787, %v2781
      %v3502 = vpack.c.b16 %v2788, %v2782
      %v3503 = vpack.c.b16 %v2789, %v2783
      %v3504 = vpack.c.b16 %v2790, %v2784
      %v3505 = vpack.c.b16 %v2791, %v2785
      %v3506 = vpack.c.b16 %v2792, %v2786
      %v3507 = vpack.c.b16 %v2799, %v2793
      %v3508 = vpack.c.b16 %v2800, %v2794
      %v3509 = vpack.c.b16 %v2801, %v2795
      %v3510 = vpack.c.b16 %v2802, %v2796
      %v3511 = vpack.c.b16 %v2803, %v2797
      %v3512 = vpack.c.b16 %v2804, %v2798
      %v3513 = vpack.c.b16 %v2811, %v2805
      %v3514 = vpack.c.b16 %v2812, %v2806
      %v3515 = vpack.c.b16 %v2813, %v2807
      %v3516 = vpack.c.b16 %v2814, %v2808
      %v3517 = vpack.c.b16 %v2815, %v2809
      %v3518 = vpack.c.b16 %v2816, %v2810
      %v3519 = vpack.c.b16 %v2823, %v2817
      %v3520 = vpack.c.b16 %v2824, %v2818
      %v3521 = vpack.c.b16 %v2825, %v2819
      %v3522 = vpack.c.b16 %v2826, %v2820
      %v3523 = vpack.c.b16 %v2827, %v2821
      %v3524 = vpack.c.b16 %v2828, %v2822
      %v3525 = vpack.c.b16 %v2835, %v2829
      %v3526 = vpack.c.b16 %v2836, %v2830
      %v3527 = vpack.c.b16 %v2837, %v2831
      %v3528 = vpack.c.b16 %v2838, %v2832
      %v3529 = vpack.c.b16 %v2839, %v2833
      %v3530 = vpack.c.b16 %v2840, %v2834
      %v3531 = vpack.c.b16 %v2847, %v2841
      %v3532 = vpack.c.b16 %v2848, %v2842
      %v3533 = vpack.c.b16 %v2849, %v2843
      %v3534 = vpack.c.b16 %v2850, %v2844
      %v3535 = vpack.c.b16 %v2851, %v2845
      %v3536 = vpack.c.b16 %v2852, %v2846
      %v3537 = vpack.c.b16 %v2859, %v2853
      %v3538 = vpack.c.b16 %v2860, %v2854
      %v3539 = vpack.c.b16 %v2861, %v2855
      %v3540 = vpack.c.b16 %v2862, %v2856
      %v3541 = vpack.c.b16 %v2863, %v2857
      %v3542 = vpack.c.b16 %v2864, %v2858
      %v3543 = vpack.c.b16 %v2871, %v2865
      %v3544 = vpack.c.b16 %v2872, %v2866
      %v3545 = vpack.c.b16 %v2873, %v2867
      %v3546 = vpack.c.b16 %v2874, %v2868
      %v3547 = vpack.c.b16 %v2875, %v2869
      %v3548 = vpack.c.b16 %v2876, %v2870
      %v3549 = vpack.c.b16 %v2883, %v2877
      %v3550 = vpack.c.b16 %v2884, %v2878
      %v3551 = vpack.c.b16 %v2885, %v2879
      %v3552 = vpack.c.b16 %v2886, %v2880
      %v3553 = vpack.c.b16 %v2887, %v2881
      %v3554 = vpack.c.b16 %v2888, %v2882
      %v3555 = vpack.c.b16 %v2895, %v2889
      %v3556 = vpack.c.b16 %v2896, %v2890
      %v3557 = vpack.c.b16 %v2897, %v2891
      %v3558 = vpack.c.b16 %v2898, %v2892
      %v3559 = vpack.c.b16 %v2899, %v2893
      %v3560 = vpack.c.b16 %v2900, %v2894
      %v3561 = vpack.c.b16 %v2907, %v2901
      %v3562 = vpack.c.b16 %v2908, %v2902
      %v3563 = vpack.c.b16 %v2909, %v2903
      %v3564 = vpack.c.b16 %v2910, %v2904
      %v3565 = vpack.c.b16 %v2911, %v2905
      %v3566 = vpack.c.b16 %v2912, %v2906
      %v3567 = vpack.c.b16 %v2919, %v2913
      %v3568 = vpack.c.b16 %v2920, %v2914
      %v3569 = vpack.c.b16 %v2921, %v2915
      %v3570 = vpack.c.b16 %v2922, %v2916
      %v3571 = vpack.c.b16 %v2923, %v2917
      %v3572 = vpack.c.b16 %v2924, %v2918
      %v3573 = vpack.c.b16 %v2931, %v2925
      %v3574 = vpack.c.b16 %v2932, %v2926
      %v3575 = vpack.c.b16 %v2933, %v2927
      %v3576 = vpack.c.b16 %v2934, %v2928
      %v3577 = vpack.c.b16 %v2935, %v2929
      %v3578 = vpack.c.b16 %v2936, %v2930
      %v3579 = vpack.c.b16 %v2943, %v2937
      %v3580 = vpack.c.b16 %v2944, %v2938
      %v3581 = vpack.c.b16 %v2945, %v2939
      %v3582 = vpack.c.b16 %v2946, %v2940
      %v3583 = vpack.c.b16 %v2947, %v2941
      %v3584 = vpack.c.b16 %v2948, %v2942
      %v3585 = vpack.c.b16 %v2955, %v2949
      %v3586 = vpack.c.b16 %v2956, %v2950
      %v3587 = vpack.c.b16 %v2957, %v2951
      %v3588 = vpack.c.b16 %v2958, %v2952
      %v3589 = vpack.c.b16 %v2959, %v2953
      %v3590 = vpack.c.b16 %v2960, %v2954
      %v3591 = vpack.c.b16 %v2967, %v2961
      %v3592 = vpack.c.b16 %v2968, %v2962
      %v3593 = vpack.c.b16 %v2969, %v2963
      %v3594 = vpack.c.b16 %v2970, %v2964
      %v3595 = vpack.c.b16 %v2971, %v2965
      %v3596 = vpack.c.b16 %v2972, %v2966
      %v3597 = vpack.c.b16 %v2979, %v2973
      %v3598 = vpack.c.b16 %v2980, %v2974
      %v3599 = vpack.c.b16 %v2981, %v2975
      %v3600 = vpack.c.b16 %v2982, %v2976
      %v3601 = vpack.c.b16 %v2983, %v2977
      %v3602 = vpack.c.b16 %v2984, %v2978
      %v3603 = vpack.c.b16 %v2991, %v2985
      %v3604 = vpack.c.b16 %v2992, %v2986
      %v3605 = vpack.c.b16 %v2993, %v2987
      %v3606 = vpack.c.b16 %v2994, %v2988
      %v3607 = vpack.c.b16 %v2995, %v2989
      %v3608 = vpack.c.b16 %v2996, %v2990
      %v3609 = vpack.c.b16 %v3003, %v2997
      %v3610 = vpack.c.b16 %v3004, %v2998
      %v3611 = vpack.c.b16 %v3005, %v2999
      %v3612 = vpack.c.b16 %v3006, %v3000
      %v3613 = vpack.c.b16 %v3007, %v3001
      %v3614 = vpack.c.b16 %v3008, %v3002
      %v3615 = vpack.c.b16 %v3015, %v3009
      %v3616 = vpack.c.b16 %v3016, %v3010
      %v3617 = vpack.c.b16 %v3017, %v3011
      %v3618 = vpack.c.b16 %v3018, %v3012
      %v3619 = vpack.c.b16 %v3019, %v3013
      %v3620 = vpack.c.b16 %v3020, %v3014
      %v3621 = vpack.c.b16 %v3027, %v3021
      %v3622 = vpack.c.b16 %v3028, %v3022
      %v3623 = vpack.c.b16 %v3029, %v3023
      %v3624 = vpack.c.b16 %v3030, %v3024
      %v3625 = vpack.c.b16 %v3031, %v3025
      %v3626 = vpack.c.b16 %v3032, %v3026
      %v3627 = vpack.c.b16 %v3039, %v3033
      %v3628 = vpack.c.b16 %v3040, %v3034
      %v3629 = vpack.c.b16 %v3041, %v3035
      %v3630 = vpack.c.b16 %v3042, %v3036
      %v3631 = vpack.c.b16 %v3043, %v3037
      %v3632 = vpack.c.b16 %v3044, %v3038
      %vm4221 = vcmask 261120
      %v4223 = vsel %vm4221, %v692, 0
      %4225 = vmatpush.bf16.msra.mxu0 %v3087
      %4226 = vmatpush.bf16.msra.mxu0 %v3081
      %4227 = vmatpush.bf16.msra.mxu0 %v3075
      %4228 = vmatpush.bf16.msra.mxu0 %v3069
      %4229 = vmatpush.bf16.msra.mxu0 %v3063
      %4230 = vmatpush.bf16.msra.mxu0 %v3057
      %4231 = vmatpush.bf16.msra.mxu0 %v3051
      %4232 = vmatpush.bf16.msra.mxu0 %v3045
      %4233 = vmatmul.bf16.gmra.mxu0 %v680
      %v4234 = vpop.f32.mrf.mxu0
      %v4235 = vadd.f32 0.0, %v4234
      %v4236 = vpop.f32.mrf.mxu0
      %4237 = vdwg.mxu0
      %4238 = vmatpush.bf16.msra.mxu0 %v3135
      %4239 = vmatpush.bf16.msra.mxu0 %v3129
      %4240 = vmatpush.bf16.msra.mxu0 %v3123
      %4241 = vmatpush.bf16.msra.mxu0 %v3117
      %4242 = vmatpush.bf16.msra.mxu0 %v3111
      %4243 = vmatpush.bf16.msra.mxu0 %v3105
      %4244 = vmatpush.bf16.msra.mxu0 %v3099
      %4245 = vmatpush.bf16.msra.mxu0 %v3093
      %4246 = vmatmul.bf16.gmra.mxu0 %v681
      %v4247 = vpop.f32.mrf.mxu0
      %v4248 = vadd.f32 %v4235, %v4247
      %v4249 = vpop.f32.mrf.mxu0
      %4250 = vdwg.mxu0
      %4251 = vmatpush.bf16.msra.mxu0 %v3183
      %4252 = vmatpush.bf16.msra.mxu0 %v3177
      %4253 = vmatpush.bf16.msra.mxu0 %v3171
      %4254 = vmatpush.bf16.msra.mxu0 %v3165
      %4255 = vmatpush.bf16.msra.mxu0 %v3159
      %4256 = vmatpush.bf16.msra.mxu0 %v3153
      %4257 = vmatpush.bf16.msra.mxu0 %v3147
      %4258 = vmatpush.bf16.msra.mxu0 %v3141
      %4259 = vmatmul.bf16.gmra.mxu0 %v682
      %v4260 = vpop.f32.mrf.mxu0
      %v4261 = vadd.f32 %v4248, %v4260
      %v4262 = vpop.f32.mrf.mxu0
      %4263 = vdwg.mxu0
      %4264 = vmatpush.bf16.msra.mxu0 %v3231
      %4265 = vmatpush.bf16.msra.mxu0 %v3225
      %4266 = vmatpush.bf16.msra.mxu0 %v3219
      %4267 = vmatpush.bf16.msra.mxu0 %v3213
      %4268 = vmatpush.bf16.msra.mxu0 %v3207
      %4269 = vmatpush.bf16.msra.mxu0 %v3201
      %4270 = vmatpush.bf16.msra.mxu0 %v3195
      %4271 = vmatpush.bf16.msra.mxu0 %v3189
      %4272 = vmatmul.bf16.gmra.mxu0 %v683
      %v4273 = vpop.f32.mrf.mxu0
      %v4274 = vadd.f32 %v4261, %v4273
      %v4275 = vpop.f32.mrf.mxu0
      %4276 = vdwg.mxu0
      %4277 = vmatpush.bf16.msra.mxu0 %v3279
      %4278 = vmatpush.bf16.msra.mxu0 %v3273
      %4279 = vmatpush.bf16.msra.mxu0 %v3267
      %4280 = vmatpush.bf16.msra.mxu0 %v3261
      %4281 = vmatpush.bf16.msra.mxu0 %v3255
      %4282 = vmatpush.bf16.msra.mxu0 %v3249
      %4283 = vmatpush.bf16.msra.mxu0 %v3243
      %4284 = vmatpush.bf16.msra.mxu0 %v3237
      %4285 = vmatmul.bf16.gmra.mxu0 %v684
      %v4286 = vpop.f32.mrf.mxu0
      %v4287 = vadd.f32 %v4274, %v4286
      %v4288 = vpop.f32.mrf.mxu0
      %4289 = vdwg.mxu0
      %4290 = vmatpush.bf16.msra.mxu0 %v3327
      %4291 = vmatpush.bf16.msra.mxu0 %v3321
      %4292 = vmatpush.bf16.msra.mxu0 %v3315
      %4293 = vmatpush.bf16.msra.mxu0 %v3309
      %4294 = vmatpush.bf16.msra.mxu0 %v3303
      %4295 = vmatpush.bf16.msra.mxu0 %v3297
      %4296 = vmatpush.bf16.msra.mxu0 %v3291
      %4297 = vmatpush.bf16.msra.mxu0 %v3285
      %4298 = vmatmul.bf16.gmra.mxu0 %v685
      %v4299 = vpop.f32.mrf.mxu0
      %v4300 = vadd.f32 %v4287, %v4299
      %v4301 = vpop.f32.mrf.mxu0
      %4302 = vdwg.mxu0
      %4303 = vmatpush.bf16.msra.mxu0 %v3375
      %4304 = vmatpush.bf16.msra.mxu0 %v3369
      %4305 = vmatpush.bf16.msra.mxu0 %v3363
      %4306 = vmatpush.bf16.msra.mxu0 %v3357
      %4307 = vmatpush.bf16.msra.mxu0 %v3351
      %4308 = vmatpush.bf16.msra.mxu0 %v3345
      %4309 = vmatpush.bf16.msra.mxu0 %v3339
      %4310 = vmatpush.bf16.msra.mxu0 %v3333
      %4311 = vmatmul.bf16.gmra.mxu0 %v686
      %v4312 = vpop.f32.mrf.mxu0
      %v4313 = vadd.f32 %v4300, %v4312
      %v4314 = vpop.f32.mrf.mxu0
      %4315 = vdwg.mxu0
      %4316 = vmatpush.bf16.msra.mxu0 %v3423
      %4317 = vmatpush.bf16.msra.mxu0 %v3417
      %4318 = vmatpush.bf16.msra.mxu0 %v3411
      %4319 = vmatpush.bf16.msra.mxu0 %v3405
      %4320 = vmatpush.bf16.msra.mxu0 %v3399
      %4321 = vmatpush.bf16.msra.mxu0 %v3393
      %4322 = vmatpush.bf16.msra.mxu0 %v3387
      %4323 = vmatpush.bf16.msra.mxu0 %v3381
      %4324 = vmatmul.bf16.gmra.mxu0 %v687
      %v4325 = vpop.f32.mrf.mxu0
      %v4326 = vadd.f32 %v4313, %v4325
      %v4327 = vpop.f32.mrf.mxu0
      %4328 = vdwg.mxu0
      %4329 = vmatpush.bf16.msra.mxu0 %v3471
      %4330 = vmatpush.bf16.msra.mxu0 %v3465
      %4331 = vmatpush.bf16.msra.mxu0 %v3459
      %4332 = vmatpush.bf16.msra.mxu0 %v3453
      %4333 = vmatpush.bf16.msra.mxu0 %v3447
      %4334 = vmatpush.bf16.msra.mxu0 %v3441
      %4335 = vmatpush.bf16.msra.mxu0 %v3435
      %4336 = vmatpush.bf16.msra.mxu0 %v3429
      %4337 = vmatmul.bf16.gmra.mxu0 %v688
      %v4338 = vpop.f32.mrf.mxu0
      %v4339 = vadd.f32 %v4326, %v4338
      %v4340 = vpop.f32.mrf.mxu0
      %4341 = vdwg.mxu0
      %4342 = vmatpush.bf16.msra.mxu0 %v3519
      %4343 = vmatpush.bf16.msra.mxu0 %v3513
      %4344 = vmatpush.bf16.msra.mxu0 %v3507
      %4345 = vmatpush.bf16.msra.mxu0 %v3501
      %4346 = vmatpush.bf16.msra.mxu0 %v3495
      %4347 = vmatpush.bf16.msra.mxu0 %v3489
      %4348 = vmatpush.bf16.msra.mxu0 %v3483
      %4349 = vmatpush.bf16.msra.mxu0 %v3477
      %4350 = vmatmul.bf16.gmra.mxu0 %v689
      %v4351 = vpop.f32.mrf.mxu0
      %v4352 = vadd.f32 %v4339, %v4351
      %v4353 = vpop.f32.mrf.mxu0
      %4354 = vdwg.mxu0
      %4355 = vmatpush.bf16.msra.mxu0 %v3567
      %4356 = vmatpush.bf16.msra.mxu0 %v3561
      %4357 = vmatpush.bf16.msra.mxu0 %v3555
      %4358 = vmatpush.bf16.msra.mxu0 %v3549
      %4359 = vmatpush.bf16.msra.mxu0 %v3543
      %4360 = vmatpush.bf16.msra.mxu0 %v3537
      %4361 = vmatpush.bf16.msra.mxu0 %v3531
      %4362 = vmatpush.bf16.msra.mxu0 %v3525
      %4363 = vmatmul.bf16.gmra.mxu0 %v690
      %v4364 = vpop.f32.mrf.mxu0
      %v4365 = vadd.f32 %v4352, %v4364
      %v4366 = vpop.f32.mrf.mxu0
      %4367 = vdwg.mxu0
      %4368 = vmatpush.bf16.msra.mxu0 %v3615
      %4369 = vmatpush.bf16.msra.mxu0 %v3609
      %4370 = vmatpush.bf16.msra.mxu0 %v3603
      %4371 = vmatpush.bf16.msra.mxu0 %v3597
      %4372 = vmatpush.bf16.msra.mxu0 %v3591
      %4373 = vmatpush.bf16.msra.mxu0 %v3585
      %4374 = vmatpush.bf16.msra.mxu0 %v3579
      %4375 = vmatpush.bf16.msra.mxu0 %v3573
      %4376 = vmatmul.bf16.gmra.mxu0 %v691
      %v4377 = vpop.f32.mrf.mxu0
      %v4378 = vadd.f32 %v4365, %v4377
      %v4379 = vpop.f32.mrf.mxu0
      %4380 = vdwg.mxu0
      %4381 = vmatpush.bf16.msra.mxu0 0
      %4382 = vmatpush.bf16.msra.mxu0 0
      %4383 = vmatpush.bf16.msra.mxu0 0
      %4384 = vmatpush.bf16.msra.mxu0 0
      %4385 = vmatpush.bf16.msra.mxu0 0
      %4386 = vmatpush.bf16.msra.mxu0 0
      %4387 = vmatpush.bf16.msra.mxu0 %v3627
      %4388 = vmatpush.bf16.msra.mxu0 %v3621
      %4389 = vmatmul.bf16.gmra.mxu0 %v4223
      %v4390 = vpop.f32.mrf.mxu0
      %v4391 = vadd.f32 %v4378, %v4390
      %v4392 = vpop.f32.mrf.mxu0
      %4393 = vdwg.mxu0
      %4394 = vmatpush.bf16.msra.mxu0 %v3088
      %4395 = vmatpush.bf16.msra.mxu0 %v3082
      %4396 = vmatpush.bf16.msra.mxu0 %v3076
      %4397 = vmatpush.bf16.msra.mxu0 %v3070
      %4398 = vmatpush.bf16.msra.mxu0 %v3064
      %4399 = vmatpush.bf16.msra.mxu0 %v3058
      %4400 = vmatpush.bf16.msra.mxu0 %v3052
      %4401 = vmatpush.bf16.msra.mxu0 %v3046
      %4402 = vmatmul.bf16.gmra.mxu0 %v680
      %v4403 = vpop.f32.mrf.mxu0
      %v4404 = vadd.f32 0.0, %v4403
      %v4405 = vpop.f32.mrf.mxu0
      %4406 = vdwg.mxu0
      %4407 = vmatpush.bf16.msra.mxu0 %v3136
      %4408 = vmatpush.bf16.msra.mxu0 %v3130
      %4409 = vmatpush.bf16.msra.mxu0 %v3124
      %4410 = vmatpush.bf16.msra.mxu0 %v3118
      %4411 = vmatpush.bf16.msra.mxu0 %v3112
      %4412 = vmatpush.bf16.msra.mxu0 %v3106
      %4413 = vmatpush.bf16.msra.mxu0 %v3100
      %4414 = vmatpush.bf16.msra.mxu0 %v3094
      %4415 = vmatmul.bf16.gmra.mxu0 %v681
      %v4416 = vpop.f32.mrf.mxu0
      %v4417 = vadd.f32 %v4404, %v4416
      %v4418 = vpop.f32.mrf.mxu0
      %4419 = vdwg.mxu0
      %4420 = vmatpush.bf16.msra.mxu0 %v3184
      %4421 = vmatpush.bf16.msra.mxu0 %v3178
      %4422 = vmatpush.bf16.msra.mxu0 %v3172
      %4423 = vmatpush.bf16.msra.mxu0 %v3166
      %4424 = vmatpush.bf16.msra.mxu0 %v3160
      %4425 = vmatpush.bf16.msra.mxu0 %v3154
      %4426 = vmatpush.bf16.msra.mxu0 %v3148
      %4427 = vmatpush.bf16.msra.mxu0 %v3142
      %4428 = vmatmul.bf16.gmra.mxu0 %v682
      %v4429 = vpop.f32.mrf.mxu0
      %v4430 = vadd.f32 %v4417, %v4429
      %v4431 = vpop.f32.mrf.mxu0
      %4432 = vdwg.mxu0
      %4433 = vmatpush.bf16.msra.mxu0 %v3232
      %4434 = vmatpush.bf16.msra.mxu0 %v3226
      %4435 = vmatpush.bf16.msra.mxu0 %v3220
      %4436 = vmatpush.bf16.msra.mxu0 %v3214
      %4437 = vmatpush.bf16.msra.mxu0 %v3208
      %4438 = vmatpush.bf16.msra.mxu0 %v3202
      %4439 = vmatpush.bf16.msra.mxu0 %v3196
      %4440 = vmatpush.bf16.msra.mxu0 %v3190
      %4441 = vmatmul.bf16.gmra.mxu0 %v683
      %v4442 = vpop.f32.mrf.mxu0
      %v4443 = vadd.f32 %v4430, %v4442
      %v4444 = vpop.f32.mrf.mxu0
      %4445 = vdwg.mxu0
      %4446 = vmatpush.bf16.msra.mxu0 %v3280
      %4447 = vmatpush.bf16.msra.mxu0 %v3274
      %4448 = vmatpush.bf16.msra.mxu0 %v3268
      %4449 = vmatpush.bf16.msra.mxu0 %v3262
      %4450 = vmatpush.bf16.msra.mxu0 %v3256
      %4451 = vmatpush.bf16.msra.mxu0 %v3250
      %4452 = vmatpush.bf16.msra.mxu0 %v3244
      %4453 = vmatpush.bf16.msra.mxu0 %v3238
      %4454 = vmatmul.bf16.gmra.mxu0 %v684
      %v4455 = vpop.f32.mrf.mxu0
      %v4456 = vadd.f32 %v4443, %v4455
      %v4457 = vpop.f32.mrf.mxu0
      %4458 = vdwg.mxu0
      %4459 = vmatpush.bf16.msra.mxu0 %v3328
      %4460 = vmatpush.bf16.msra.mxu0 %v3322
      %4461 = vmatpush.bf16.msra.mxu0 %v3316
      %4462 = vmatpush.bf16.msra.mxu0 %v3310
      %4463 = vmatpush.bf16.msra.mxu0 %v3304
      %4464 = vmatpush.bf16.msra.mxu0 %v3298
      %4465 = vmatpush.bf16.msra.mxu0 %v3292
      %4466 = vmatpush.bf16.msra.mxu0 %v3286
      %4467 = vmatmul.bf16.gmra.mxu0 %v685
      %v4468 = vpop.f32.mrf.mxu0
      %v4469 = vadd.f32 %v4456, %v4468
      %v4470 = vpop.f32.mrf.mxu0
      %4471 = vdwg.mxu0
      %4472 = vmatpush.bf16.msra.mxu0 %v3376
      %4473 = vmatpush.bf16.msra.mxu0 %v3370
      %4474 = vmatpush.bf16.msra.mxu0 %v3364
      %4475 = vmatpush.bf16.msra.mxu0 %v3358
      %4476 = vmatpush.bf16.msra.mxu0 %v3352
      %4477 = vmatpush.bf16.msra.mxu0 %v3346
      %4478 = vmatpush.bf16.msra.mxu0 %v3340
      %4479 = vmatpush.bf16.msra.mxu0 %v3334
      %4480 = vmatmul.bf16.gmra.mxu0 %v686
      %v4481 = vpop.f32.mrf.mxu0
      %v4482 = vadd.f32 %v4469, %v4481
      %v4483 = vpop.f32.mrf.mxu0
      %4484 = vdwg.mxu0
      %4485 = vmatpush.bf16.msra.mxu0 %v3424
      %4486 = vmatpush.bf16.msra.mxu0 %v3418
      %4487 = vmatpush.bf16.msra.mxu0 %v3412
      %4488 = vmatpush.bf16.msra.mxu0 %v3406
      %4489 = vmatpush.bf16.msra.mxu0 %v3400
      %4490 = vmatpush.bf16.msra.mxu0 %v3394
      %4491 = vmatpush.bf16.msra.mxu0 %v3388
      %4492 = vmatpush.bf16.msra.mxu0 %v3382
      %4493 = vmatmul.bf16.gmra.mxu0 %v687
      %v4494 = vpop.f32.mrf.mxu0
      %v4495 = vadd.f32 %v4482, %v4494
      %v4496 = vpop.f32.mrf.mxu0
      %4497 = vdwg.mxu0
      %4498 = vmatpush.bf16.msra.mxu0 %v3472
      %4499 = vmatpush.bf16.msra.mxu0 %v3466
      %4500 = vmatpush.bf16.msra.mxu0 %v3460
      %4501 = vmatpush.bf16.msra.mxu0 %v3454
      %4502 = vmatpush.bf16.msra.mxu0 %v3448
      %4503 = vmatpush.bf16.msra.mxu0 %v3442
      %4504 = vmatpush.bf16.msra.mxu0 %v3436
      %4505 = vmatpush.bf16.msra.mxu0 %v3430
      %4506 = vmatmul.bf16.gmra.mxu0 %v688
      %v4507 = vpop.f32.mrf.mxu0
      %v4508 = vadd.f32 %v4495, %v4507
      %v4509 = vpop.f32.mrf.mxu0
      %4510 = vdwg.mxu0
      %4511 = vmatpush.bf16.msra.mxu0 %v3520
      %4512 = vmatpush.bf16.msra.mxu0 %v3514
      %4513 = vmatpush.bf16.msra.mxu0 %v3508
      %4514 = vmatpush.bf16.msra.mxu0 %v3502
      %4515 = vmatpush.bf16.msra.mxu0 %v3496
      %4516 = vmatpush.bf16.msra.mxu0 %v3490
      %4517 = vmatpush.bf16.msra.mxu0 %v3484
      %4518 = vmatpush.bf16.msra.mxu0 %v3478
      %4519 = vmatmul.bf16.gmra.mxu0 %v689
      %v4520 = vpop.f32.mrf.mxu0
      %v4521 = vadd.f32 %v4508, %v4520
      %v4522 = vpop.f32.mrf.mxu0
      %4523 = vdwg.mxu0
      %4524 = vmatpush.bf16.msra.mxu0 %v3568
      %4525 = vmatpush.bf16.msra.mxu0 %v3562
      %4526 = vmatpush.bf16.msra.mxu0 %v3556
      %4527 = vmatpush.bf16.msra.mxu0 %v3550
      %4528 = vmatpush.bf16.msra.mxu0 %v3544
      %4529 = vmatpush.bf16.msra.mxu0 %v3538
      %4530 = vmatpush.bf16.msra.mxu0 %v3532
      %4531 = vmatpush.bf16.msra.mxu0 %v3526
      %4532 = vmatmul.bf16.gmra.mxu0 %v690
      %v4533 = vpop.f32.mrf.mxu0
      %v4534 = vadd.f32 %v4521, %v4533
      %v4535 = vpop.f32.mrf.mxu0
      %4536 = vdwg.mxu0
      %4537 = vmatpush.bf16.msra.mxu0 %v3616
      %4538 = vmatpush.bf16.msra.mxu0 %v3610
      %4539 = vmatpush.bf16.msra.mxu0 %v3604
      %4540 = vmatpush.bf16.msra.mxu0 %v3598
      %4541 = vmatpush.bf16.msra.mxu0 %v3592
      %4542 = vmatpush.bf16.msra.mxu0 %v3586
      %4543 = vmatpush.bf16.msra.mxu0 %v3580
      %4544 = vmatpush.bf16.msra.mxu0 %v3574
      %4545 = vmatmul.bf16.gmra.mxu0 %v691
      %v4546 = vpop.f32.mrf.mxu0
      %v4547 = vadd.f32 %v4534, %v4546
      %v4548 = vpop.f32.mrf.mxu0
      %4549 = vdwg.mxu0
      %4550 = vmatpush.bf16.msra.mxu0 0
      %4551 = vmatpush.bf16.msra.mxu0 0
      %4552 = vmatpush.bf16.msra.mxu0 0
      %4553 = vmatpush.bf16.msra.mxu0 0
      %4554 = vmatpush.bf16.msra.mxu0 0
      %4555 = vmatpush.bf16.msra.mxu0 0
      %4556 = vmatpush.bf16.msra.mxu0 %v3628
      %4557 = vmatpush.bf16.msra.mxu0 %v3622
      %4558 = vmatmul.bf16.gmra.mxu0 %v4223
      %v4559 = vpop.f32.mrf.mxu0
      %v4560 = vadd.f32 %v4547, %v4559
      %v4561 = vpop.f32.mrf.mxu0
      %4562 = vdwg.mxu0
      %4563 = vmatpush.bf16.msra.mxu0 %v3089
      %4564 = vmatpush.bf16.msra.mxu0 %v3083
      %4565 = vmatpush.bf16.msra.mxu0 %v3077
      %4566 = vmatpush.bf16.msra.mxu0 %v3071
      %4567 = vmatpush.bf16.msra.mxu0 %v3065
      %4568 = vmatpush.bf16.msra.mxu0 %v3059
      %4569 = vmatpush.bf16.msra.mxu0 %v3053
      %4570 = vmatpush.bf16.msra.mxu0 %v3047
      %4571 = vmatmul.bf16.gmra.mxu0 %v680
      %v4572 = vpop.f32.mrf.mxu0
      %v4573 = vadd.f32 0.0, %v4572
      %v4574 = vpop.f32.mrf.mxu0
      %4575 = vdwg.mxu0
      %4576 = vmatpush.bf16.msra.mxu0 %v3137
      %4577 = vmatpush.bf16.msra.mxu0 %v3131
      %4578 = vmatpush.bf16.msra.mxu0 %v3125
      %4579 = vmatpush.bf16.msra.mxu0 %v3119
      %4580 = vmatpush.bf16.msra.mxu0 %v3113
      %4581 = vmatpush.bf16.msra.mxu0 %v3107
      %4582 = vmatpush.bf16.msra.mxu0 %v3101
      %4583 = vmatpush.bf16.msra.mxu0 %v3095
      %4584 = vmatmul.bf16.gmra.mxu0 %v681
      %v4585 = vpop.f32.mrf.mxu0
      %v4586 = vadd.f32 %v4573, %v4585
      %v4587 = vpop.f32.mrf.mxu0
      %4588 = vdwg.mxu0
      %4589 = vmatpush.bf16.msra.mxu0 %v3185
      %4590 = vmatpush.bf16.msra.mxu0 %v3179
      %4591 = vmatpush.bf16.msra.mxu0 %v3173
      %4592 = vmatpush.bf16.msra.mxu0 %v3167
      %4593 = vmatpush.bf16.msra.mxu0 %v3161
      %4594 = vmatpush.bf16.msra.mxu0 %v3155
      %4595 = vmatpush.bf16.msra.mxu0 %v3149
      %4596 = vmatpush.bf16.msra.mxu0 %v3143
      %4597 = vmatmul.bf16.gmra.mxu0 %v682
      %v4598 = vpop.f32.mrf.mxu0
      %v4599 = vadd.f32 %v4586, %v4598
      %v4600 = vpop.f32.mrf.mxu0
      %4601 = vdwg.mxu0
      %4602 = vmatpush.bf16.msra.mxu0 %v3233
      %4603 = vmatpush.bf16.msra.mxu0 %v3227
      %4604 = vmatpush.bf16.msra.mxu0 %v3221
      %4605 = vmatpush.bf16.msra.mxu0 %v3215
      %4606 = vmatpush.bf16.msra.mxu0 %v3209
      %4607 = vmatpush.bf16.msra.mxu0 %v3203
      %4608 = vmatpush.bf16.msra.mxu0 %v3197
      %4609 = vmatpush.bf16.msra.mxu0 %v3191
      %4610 = vmatmul.bf16.gmra.mxu0 %v683
      %v4611 = vpop.f32.mrf.mxu0
      %v4612 = vadd.f32 %v4599, %v4611
      %v4613 = vpop.f32.mrf.mxu0
      %4614 = vdwg.mxu0
      %4615 = vmatpush.bf16.msra.mxu0 %v3281
      %4616 = vmatpush.bf16.msra.mxu0 %v3275
      %4617 = vmatpush.bf16.msra.mxu0 %v3269
      %4618 = vmatpush.bf16.msra.mxu0 %v3263
      %4619 = vmatpush.bf16.msra.mxu0 %v3257
      %4620 = vmatpush.bf16.msra.mxu0 %v3251
      %4621 = vmatpush.bf16.msra.mxu0 %v3245
      %4622 = vmatpush.bf16.msra.mxu0 %v3239
      %4623 = vmatmul.bf16.gmra.mxu0 %v684
      %v4624 = vpop.f32.mrf.mxu0
      %v4625 = vadd.f32 %v4612, %v4624
      %v4626 = vpop.f32.mrf.mxu0
      %4627 = vdwg.mxu0
      %4628 = vmatpush.bf16.msra.mxu0 %v3329
      %4629 = vmatpush.bf16.msra.mxu0 %v3323
      %4630 = vmatpush.bf16.msra.mxu0 %v3317
      %4631 = vmatpush.bf16.msra.mxu0 %v3311
      %4632 = vmatpush.bf16.msra.mxu0 %v3305
      %4633 = vmatpush.bf16.msra.mxu0 %v3299
      %4634 = vmatpush.bf16.msra.mxu0 %v3293
      %4635 = vmatpush.bf16.msra.mxu0 %v3287
      %4636 = vmatmul.bf16.gmra.mxu0 %v685
      %v4637 = vpop.f32.mrf.mxu0
      %v4638 = vadd.f32 %v4625, %v4637
      %v4639 = vpop.f32.mrf.mxu0
      %4640 = vdwg.mxu0
      %4641 = vmatpush.bf16.msra.mxu0 %v3377
      %4642 = vmatpush.bf16.msra.mxu0 %v3371
      %4643 = vmatpush.bf16.msra.mxu0 %v3365
      %4644 = vmatpush.bf16.msra.mxu0 %v3359
      %4645 = vmatpush.bf16.msra.mxu0 %v3353
      %4646 = vmatpush.bf16.msra.mxu0 %v3347
      %4647 = vmatpush.bf16.msra.mxu0 %v3341
      %4648 = vmatpush.bf16.msra.mxu0 %v3335
      %4649 = vmatmul.bf16.gmra.mxu0 %v686
      %v4650 = vpop.f32.mrf.mxu0
      %v4651 = vadd.f32 %v4638, %v4650
      %v4652 = vpop.f32.mrf.mxu0
      %4653 = vdwg.mxu0
      %4654 = vmatpush.bf16.msra.mxu0 %v3425
      %4655 = vmatpush.bf16.msra.mxu0 %v3419
      %4656 = vmatpush.bf16.msra.mxu0 %v3413
      %4657 = vmatpush.bf16.msra.mxu0 %v3407
      %4658 = vmatpush.bf16.msra.mxu0 %v3401
      %4659 = vmatpush.bf16.msra.mxu0 %v3395
      %4660 = vmatpush.bf16.msra.mxu0 %v3389
      %4661 = vmatpush.bf16.msra.mxu0 %v3383
      %4662 = vmatmul.bf16.gmra.mxu0 %v687
      %v4663 = vpop.f32.mrf.mxu0
      %v4664 = vadd.f32 %v4651, %v4663
      %v4665 = vpop.f32.mrf.mxu0
      %4666 = vdwg.mxu0
      %4667 = vmatpush.bf16.msra.mxu0 %v3473
      %4668 = vmatpush.bf16.msra.mxu0 %v3467
      %4669 = vmatpush.bf16.msra.mxu0 %v3461
      %4670 = vmatpush.bf16.msra.mxu0 %v3455
      %4671 = vmatpush.bf16.msra.mxu0 %v3449
      %4672 = vmatpush.bf16.msra.mxu0 %v3443
      %4673 = vmatpush.bf16.msra.mxu0 %v3437
      %4674 = vmatpush.bf16.msra.mxu0 %v3431
      %4675 = vmatmul.bf16.gmra.mxu0 %v688
      %v4676 = vpop.f32.mrf.mxu0
      %v4677 = vadd.f32 %v4664, %v4676
      %v4678 = vpop.f32.mrf.mxu0
      %4679 = vdwg.mxu0
      %4680 = vmatpush.bf16.msra.mxu0 %v3521
      %4681 = vmatpush.bf16.msra.mxu0 %v3515
      %4682 = vmatpush.bf16.msra.mxu0 %v3509
      %4683 = vmatpush.bf16.msra.mxu0 %v3503
      %4684 = vmatpush.bf16.msra.mxu0 %v3497
      %4685 = vmatpush.bf16.msra.mxu0 %v3491
      %4686 = vmatpush.bf16.msra.mxu0 %v3485
      %4687 = vmatpush.bf16.msra.mxu0 %v3479
      %4688 = vmatmul.bf16.gmra.mxu0 %v689
      %v4689 = vpop.f32.mrf.mxu0
      %v4690 = vadd.f32 %v4677, %v4689
      %v4691 = vpop.f32.mrf.mxu0
      %4692 = vdwg.mxu0
      %4693 = vmatpush.bf16.msra.mxu0 %v3569
      %4694 = vmatpush.bf16.msra.mxu0 %v3563
      %4695 = vmatpush.bf16.msra.mxu0 %v3557
      %4696 = vmatpush.bf16.msra.mxu0 %v3551
      %4697 = vmatpush.bf16.msra.mxu0 %v3545
      %4698 = vmatpush.bf16.msra.mxu0 %v3539
      %4699 = vmatpush.bf16.msra.mxu0 %v3533
      %4700 = vmatpush.bf16.msra.mxu0 %v3527
      %4701 = vmatmul.bf16.gmra.mxu0 %v690
      %v4702 = vpop.f32.mrf.mxu0
      %v4703 = vadd.f32 %v4690, %v4702
      %v4704 = vpop.f32.mrf.mxu0
      %4705 = vdwg.mxu0
      %4706 = vmatpush.bf16.msra.mxu0 %v3617
      %4707 = vmatpush.bf16.msra.mxu0 %v3611
      %4708 = vmatpush.bf16.msra.mxu0 %v3605
      %4709 = vmatpush.bf16.msra.mxu0 %v3599
      %4710 = vmatpush.bf16.msra.mxu0 %v3593
      %4711 = vmatpush.bf16.msra.mxu0 %v3587
      %4712 = vmatpush.bf16.msra.mxu0 %v3581
      %4713 = vmatpush.bf16.msra.mxu0 %v3575
      %4714 = vmatmul.bf16.gmra.mxu0 %v691
      %v4715 = vpop.f32.mrf.mxu0
      %v4716 = vadd.f32 %v4703, %v4715
      %v4717 = vpop.f32.mrf.mxu0
      %4718 = vdwg.mxu0
      %4719 = vmatpush.bf16.msra.mxu0 0
      %4720 = vmatpush.bf16.msra.mxu0 0
      %4721 = vmatpush.bf16.msra.mxu0 0
      %4722 = vmatpush.bf16.msra.mxu0 0
      %4723 = vmatpush.bf16.msra.mxu0 0
      %4724 = vmatpush.bf16.msra.mxu0 0
      %4725 = vmatpush.bf16.msra.mxu0 %v3629
      %4726 = vmatpush.bf16.msra.mxu0 %v3623
      %4727 = vmatmul.bf16.gmra.mxu0 %v4223
      %v4728 = vpop.f32.mrf.mxu0
      %v4729 = vadd.f32 %v4716, %v4728
      %v4730 = vpop.f32.mrf.mxu0
      %4731 = vdwg.mxu0
      %4732 = vmatpush.bf16.msra.mxu0 %v3090
      %4733 = vmatpush.bf16.msra.mxu0 %v3084
      %4734 = vmatpush.bf16.msra.mxu0 %v3078
      %4735 = vmatpush.bf16.msra.mxu0 %v3072
      %4736 = vmatpush.bf16.msra.mxu0 %v3066
      %4737 = vmatpush.bf16.msra.mxu0 %v3060
      %4738 = vmatpush.bf16.msra.mxu0 %v3054
      %4739 = vmatpush.bf16.msra.mxu0 %v3048
      %4740 = vmatmul.bf16.gmra.mxu0 %v680
      %v4741 = vpop.f32.mrf.mxu0
      %v4742 = vadd.f32 0.0, %v4741
      %v4743 = vpop.f32.mrf.mxu0
      %4744 = vdwg.mxu0
      %4745 = vmatpush.bf16.msra.mxu0 %v3138
      %4746 = vmatpush.bf16.msra.mxu0 %v3132
      %4747 = vmatpush.bf16.msra.mxu0 %v3126
      %4748 = vmatpush.bf16.msra.mxu0 %v3120
      %4749 = vmatpush.bf16.msra.mxu0 %v3114
      %4750 = vmatpush.bf16.msra.mxu0 %v3108
      %4751 = vmatpush.bf16.msra.mxu0 %v3102
      %4752 = vmatpush.bf16.msra.mxu0 %v3096
      %4753 = vmatmul.bf16.gmra.mxu0 %v681
      %v4754 = vpop.f32.mrf.mxu0
      %v4755 = vadd.f32 %v4742, %v4754
      %v4756 = vpop.f32.mrf.mxu0
      %4757 = vdwg.mxu0
      %4758 = vmatpush.bf16.msra.mxu0 %v3186
      %4759 = vmatpush.bf16.msra.mxu0 %v3180
      %4760 = vmatpush.bf16.msra.mxu0 %v3174
      %4761 = vmatpush.bf16.msra.mxu0 %v3168
      %4762 = vmatpush.bf16.msra.mxu0 %v3162
      %4763 = vmatpush.bf16.msra.mxu0 %v3156
      %4764 = vmatpush.bf16.msra.mxu0 %v3150
      %4765 = vmatpush.bf16.msra.mxu0 %v3144
      %4766 = vmatmul.bf16.gmra.mxu0 %v682
      %v4767 = vpop.f32.mrf.mxu0
      %v4768 = vadd.f32 %v4755, %v4767
      %v4769 = vpop.f32.mrf.mxu0
      %4770 = vdwg.mxu0
      %4771 = vmatpush.bf16.msra.mxu0 %v3234
      %4772 = vmatpush.bf16.msra.mxu0 %v3228
      %4773 = vmatpush.bf16.msra.mxu0 %v3222
      %4774 = vmatpush.bf16.msra.mxu0 %v3216
      %4775 = vmatpush.bf16.msra.mxu0 %v3210
      %4776 = vmatpush.bf16.msra.mxu0 %v3204
      %4777 = vmatpush.bf16.msra.mxu0 %v3198
      %4778 = vmatpush.bf16.msra.mxu0 %v3192
      %4779 = vmatmul.bf16.gmra.mxu0 %v683
      %v4780 = vpop.f32.mrf.mxu0
      %v4781 = vadd.f32 %v4768, %v4780
      %v4782 = vpop.f32.mrf.mxu0
      %4783 = vdwg.mxu0
      %4784 = vmatpush.bf16.msra.mxu0 %v3282
      %4785 = vmatpush.bf16.msra.mxu0 %v3276
      %4786 = vmatpush.bf16.msra.mxu0 %v3270
      %4787 = vmatpush.bf16.msra.mxu0 %v3264
      %4788 = vmatpush.bf16.msra.mxu0 %v3258
      %4789 = vmatpush.bf16.msra.mxu0 %v3252
      %4790 = vmatpush.bf16.msra.mxu0 %v3246
      %4791 = vmatpush.bf16.msra.mxu0 %v3240
      %4792 = vmatmul.bf16.gmra.mxu0 %v684
      %v4793 = vpop.f32.mrf.mxu0
      %v4794 = vadd.f32 %v4781, %v4793
      %v4795 = vpop.f32.mrf.mxu0
      %4796 = vdwg.mxu0
      %4797 = vmatpush.bf16.msra.mxu0 %v3330
      %4798 = vmatpush.bf16.msra.mxu0 %v3324
      %4799 = vmatpush.bf16.msra.mxu0 %v3318
      %4800 = vmatpush.bf16.msra.mxu0 %v3312
      %4801 = vmatpush.bf16.msra.mxu0 %v3306
      %4802 = vmatpush.bf16.msra.mxu0 %v3300
      %4803 = vmatpush.bf16.msra.mxu0 %v3294
      %4804 = vmatpush.bf16.msra.mxu0 %v3288
      %4805 = vmatmul.bf16.gmra.mxu0 %v685
      %v4806 = vpop.f32.mrf.mxu0
      %v4807 = vadd.f32 %v4794, %v4806
      %v4808 = vpop.f32.mrf.mxu0
      %4809 = vdwg.mxu0
      %4810 = vmatpush.bf16.msra.mxu0 %v3378
      %4811 = vmatpush.bf16.msra.mxu0 %v3372
      %4812 = vmatpush.bf16.msra.mxu0 %v3366
      %4813 = vmatpush.bf16.msra.mxu0 %v3360
      %4814 = vmatpush.bf16.msra.mxu0 %v3354
      %4815 = vmatpush.bf16.msra.mxu0 %v3348
      %4816 = vmatpush.bf16.msra.mxu0 %v3342
      %4817 = vmatpush.bf16.msra.mxu0 %v3336
      %4818 = vmatmul.bf16.gmra.mxu0 %v686
      %v4819 = vpop.f32.mrf.mxu0
      %v4820 = vadd.f32 %v4807, %v4819
      %v4821 = vpop.f32.mrf.mxu0
      %4822 = vdwg.mxu0
      %4823 = vmatpush.bf16.msra.mxu0 %v3426
      %4824 = vmatpush.bf16.msra.mxu0 %v3420
      %4825 = vmatpush.bf16.msra.mxu0 %v3414
      %4826 = vmatpush.bf16.msra.mxu0 %v3408
      %4827 = vmatpush.bf16.msra.mxu0 %v3402
      %4828 = vmatpush.bf16.msra.mxu0 %v3396
      %4829 = vmatpush.bf16.msra.mxu0 %v3390
      %4830 = vmatpush.bf16.msra.mxu0 %v3384
      %4831 = vmatmul.bf16.gmra.mxu0 %v687
      %v4832 = vpop.f32.mrf.mxu0
      %v4833 = vadd.f32 %v4820, %v4832
      %v4834 = vpop.f32.mrf.mxu0
      %4835 = vdwg.mxu0
      %4836 = vmatpush.bf16.msra.mxu0 %v3474
      %4837 = vmatpush.bf16.msra.mxu0 %v3468
      %4838 = vmatpush.bf16.msra.mxu0 %v3462
      %4839 = vmatpush.bf16.msra.mxu0 %v3456
      %4840 = vmatpush.bf16.msra.mxu0 %v3450
      %4841 = vmatpush.bf16.msra.mxu0 %v3444
      %4842 = vmatpush.bf16.msra.mxu0 %v3438
      %4843 = vmatpush.bf16.msra.mxu0 %v3432
      %4844 = vmatmul.bf16.gmra.mxu0 %v688
      %v4845 = vpop.f32.mrf.mxu0
      %v4846 = vadd.f32 %v4833, %v4845
      %v4847 = vpop.f32.mrf.mxu0
      %4848 = vdwg.mxu0
      %4849 = vmatpush.bf16.msra.mxu0 %v3522
      %4850 = vmatpush.bf16.msra.mxu0 %v3516
      %4851 = vmatpush.bf16.msra.mxu0 %v3510
      %4852 = vmatpush.bf16.msra.mxu0 %v3504
      %4853 = vmatpush.bf16.msra.mxu0 %v3498
      %4854 = vmatpush.bf16.msra.mxu0 %v3492
      %4855 = vmatpush.bf16.msra.mxu0 %v3486
      %4856 = vmatpush.bf16.msra.mxu0 %v3480
      %4857 = vmatmul.bf16.gmra.mxu0 %v689
      %v4858 = vpop.f32.mrf.mxu0
      %v4859 = vadd.f32 %v4846, %v4858
      %v4860 = vpop.f32.mrf.mxu0
      %4861 = vdwg.mxu0
      %4862 = vmatpush.bf16.msra.mxu0 %v3570
      %4863 = vmatpush.bf16.msra.mxu0 %v3564
      %4864 = vmatpush.bf16.msra.mxu0 %v3558
      %4865 = vmatpush.bf16.msra.mxu0 %v3552
      %4866 = vmatpush.bf16.msra.mxu0 %v3546
      %4867 = vmatpush.bf16.msra.mxu0 %v3540
      %4868 = vmatpush.bf16.msra.mxu0 %v3534
      %4869 = vmatpush.bf16.msra.mxu0 %v3528
      %4870 = vmatmul.bf16.gmra.mxu0 %v690
      %v4871 = vpop.f32.mrf.mxu0
      %v4872 = vadd.f32 %v4859, %v4871
      %v4873 = vpop.f32.mrf.mxu0
      %4874 = vdwg.mxu0
      %4875 = vmatpush.bf16.msra.mxu0 %v3618
      %4876 = vmatpush.bf16.msra.mxu0 %v3612
      %4877 = vmatpush.bf16.msra.mxu0 %v3606
      %4878 = vmatpush.bf16.msra.mxu0 %v3600
      %4879 = vmatpush.bf16.msra.mxu0 %v3594
      %4880 = vmatpush.bf16.msra.mxu0 %v3588
      %4881 = vmatpush.bf16.msra.mxu0 %v3582
      %4882 = vmatpush.bf16.msra.mxu0 %v3576
      %4883 = vmatmul.bf16.gmra.mxu0 %v691
      %v4884 = vpop.f32.mrf.mxu0
      %v4885 = vadd.f32 %v4872, %v4884
      %v4886 = vpop.f32.mrf.mxu0
      %4887 = vdwg.mxu0
      %4888 = vmatpush.bf16.msra.mxu0 0
      %4889 = vmatpush.bf16.msra.mxu0 0
      %4890 = vmatpush.bf16.msra.mxu0 0
      %4891 = vmatpush.bf16.msra.mxu0 0
      %4892 = vmatpush.bf16.msra.mxu0 0
      %4893 = vmatpush.bf16.msra.mxu0 0
      %4894 = vmatpush.bf16.msra.mxu0 %v3630
      %4895 = vmatpush.bf16.msra.mxu0 %v3624
      %4896 = vmatmul.bf16.gmra.mxu0 %v4223
      %v4897 = vpop.f32.mrf.mxu0
      %v4898 = vadd.f32 %v4885, %v4897
      %v4899 = vpop.f32.mrf.mxu0
      %4900 = vdwg.mxu0
      %4901 = vmatpush.bf16.msra.mxu0 %v3091
      %4902 = vmatpush.bf16.msra.mxu0 %v3085
      %4903 = vmatpush.bf16.msra.mxu0 %v3079
      %4904 = vmatpush.bf16.msra.mxu0 %v3073
      %4905 = vmatpush.bf16.msra.mxu0 %v3067
      %4906 = vmatpush.bf16.msra.mxu0 %v3061
      %4907 = vmatpush.bf16.msra.mxu0 %v3055
      %4908 = vmatpush.bf16.msra.mxu0 %v3049
      %4909 = vmatmul.bf16.gmra.mxu0 %v680
      %v4910 = vpop.f32.mrf.mxu0
      %v4911 = vadd.f32 0.0, %v4910
      %v4912 = vpop.f32.mrf.mxu0
      %4913 = vdwg.mxu0
      %4914 = vmatpush.bf16.msra.mxu0 %v3139
      %4915 = vmatpush.bf16.msra.mxu0 %v3133
      %4916 = vmatpush.bf16.msra.mxu0 %v3127
      %4917 = vmatpush.bf16.msra.mxu0 %v3121
      %4918 = vmatpush.bf16.msra.mxu0 %v3115
      %4919 = vmatpush.bf16.msra.mxu0 %v3109
      %4920 = vmatpush.bf16.msra.mxu0 %v3103
      %4921 = vmatpush.bf16.msra.mxu0 %v3097
      %4922 = vmatmul.bf16.gmra.mxu0 %v681
      %v4923 = vpop.f32.mrf.mxu0
      %v4924 = vadd.f32 %v4911, %v4923
      %v4925 = vpop.f32.mrf.mxu0
      %4926 = vdwg.mxu0
      %4927 = vmatpush.bf16.msra.mxu0 %v3187
      %4928 = vmatpush.bf16.msra.mxu0 %v3181
      %4929 = vmatpush.bf16.msra.mxu0 %v3175
      %4930 = vmatpush.bf16.msra.mxu0 %v3169
      %4931 = vmatpush.bf16.msra.mxu0 %v3163
      %4932 = vmatpush.bf16.msra.mxu0 %v3157
      %4933 = vmatpush.bf16.msra.mxu0 %v3151
      %4934 = vmatpush.bf16.msra.mxu0 %v3145
      %4935 = vmatmul.bf16.gmra.mxu0 %v682
      %v4936 = vpop.f32.mrf.mxu0
      %v4937 = vadd.f32 %v4924, %v4936
      %v4938 = vpop.f32.mrf.mxu0
      %4939 = vdwg.mxu0
      %4940 = vmatpush.bf16.msra.mxu0 %v3235
      %4941 = vmatpush.bf16.msra.mxu0 %v3229
      %4942 = vmatpush.bf16.msra.mxu0 %v3223
      %4943 = vmatpush.bf16.msra.mxu0 %v3217
      %4944 = vmatpush.bf16.msra.mxu0 %v3211
      %4945 = vmatpush.bf16.msra.mxu0 %v3205
      %4946 = vmatpush.bf16.msra.mxu0 %v3199
      %4947 = vmatpush.bf16.msra.mxu0 %v3193
      %4948 = vmatmul.bf16.gmra.mxu0 %v683
      %v4949 = vpop.f32.mrf.mxu0
      %v4950 = vadd.f32 %v4937, %v4949
      %v4951 = vpop.f32.mrf.mxu0
      %4952 = vdwg.mxu0
      %4953 = vmatpush.bf16.msra.mxu0 %v3283
      %4954 = vmatpush.bf16.msra.mxu0 %v3277
      %4955 = vmatpush.bf16.msra.mxu0 %v3271
      %4956 = vmatpush.bf16.msra.mxu0 %v3265
      %4957 = vmatpush.bf16.msra.mxu0 %v3259
      %4958 = vmatpush.bf16.msra.mxu0 %v3253
      %4959 = vmatpush.bf16.msra.mxu0 %v3247
      %4960 = vmatpush.bf16.msra.mxu0 %v3241
      %4961 = vmatmul.bf16.gmra.mxu0 %v684
      %v4962 = vpop.f32.mrf.mxu0
      %v4963 = vadd.f32 %v4950, %v4962
      %v4964 = vpop.f32.mrf.mxu0
      %4965 = vdwg.mxu0
      %4966 = vmatpush.bf16.msra.mxu0 %v3331
      %4967 = vmatpush.bf16.msra.mxu0 %v3325
      %4968 = vmatpush.bf16.msra.mxu0 %v3319
      %4969 = vmatpush.bf16.msra.mxu0 %v3313
      %4970 = vmatpush.bf16.msra.mxu0 %v3307
      %4971 = vmatpush.bf16.msra.mxu0 %v3301
      %4972 = vmatpush.bf16.msra.mxu0 %v3295
      %4973 = vmatpush.bf16.msra.mxu0 %v3289
      %4974 = vmatmul.bf16.gmra.mxu0 %v685
      %v4975 = vpop.f32.mrf.mxu0
      %v4976 = vadd.f32 %v4963, %v4975
      %v4977 = vpop.f32.mrf.mxu0
      %4978 = vdwg.mxu0
      %4979 = vmatpush.bf16.msra.mxu0 %v3379
      %4980 = vmatpush.bf16.msra.mxu0 %v3373
      %4981 = vmatpush.bf16.msra.mxu0 %v3367
      %4982 = vmatpush.bf16.msra.mxu0 %v3361
      %4983 = vmatpush.bf16.msra.mxu0 %v3355
      %4984 = vmatpush.bf16.msra.mxu0 %v3349
      %4985 = vmatpush.bf16.msra.mxu0 %v3343
      %4986 = vmatpush.bf16.msra.mxu0 %v3337
      %4987 = vmatmul.bf16.gmra.mxu0 %v686
      %v4988 = vpop.f32.mrf.mxu0
      %v4989 = vadd.f32 %v4976, %v4988
      %v4990 = vpop.f32.mrf.mxu0
      %4991 = vdwg.mxu0
      %4992 = vmatpush.bf16.msra.mxu0 %v3427
      %4993 = vmatpush.bf16.msra.mxu0 %v3421
      %4994 = vmatpush.bf16.msra.mxu0 %v3415
      %4995 = vmatpush.bf16.msra.mxu0 %v3409
      %4996 = vmatpush.bf16.msra.mxu0 %v3403
      %4997 = vmatpush.bf16.msra.mxu0 %v3397
      %4998 = vmatpush.bf16.msra.mxu0 %v3391
      %4999 = vmatpush.bf16.msra.mxu0 %v3385
      %5000 = vmatmul.bf16.gmra.mxu0 %v687
      %v5001 = vpop.f32.mrf.mxu0
      %v5002 = vadd.f32 %v4989, %v5001
      %v5003 = vpop.f32.mrf.mxu0
      %5004 = vdwg.mxu0
      %5005 = vmatpush.bf16.msra.mxu0 %v3475
      %5006 = vmatpush.bf16.msra.mxu0 %v3469
      %5007 = vmatpush.bf16.msra.mxu0 %v3463
      %5008 = vmatpush.bf16.msra.mxu0 %v3457
      %5009 = vmatpush.bf16.msra.mxu0 %v3451
      %5010 = vmatpush.bf16.msra.mxu0 %v3445
      %5011 = vmatpush.bf16.msra.mxu0 %v3439
      %5012 = vmatpush.bf16.msra.mxu0 %v3433
      %5013 = vmatmul.bf16.gmra.mxu0 %v688
      %v5014 = vpop.f32.mrf.mxu0
      %v5015 = vadd.f32 %v5002, %v5014
      %v5016 = vpop.f32.mrf.mxu0
      %5017 = vdwg.mxu0
      %5018 = vmatpush.bf16.msra.mxu0 %v3523
      %5019 = vmatpush.bf16.msra.mxu0 %v3517
      %5020 = vmatpush.bf16.msra.mxu0 %v3511
      %5021 = vmatpush.bf16.msra.mxu0 %v3505
      %5022 = vmatpush.bf16.msra.mxu0 %v3499
      %5023 = vmatpush.bf16.msra.mxu0 %v3493
      %5024 = vmatpush.bf16.msra.mxu0 %v3487
      %5025 = vmatpush.bf16.msra.mxu0 %v3481
      %5026 = vmatmul.bf16.gmra.mxu0 %v689
      %v5027 = vpop.f32.mrf.mxu0
      %v5028 = vadd.f32 %v5015, %v5027
      %v5029 = vpop.f32.mrf.mxu0
      %5030 = vdwg.mxu0
      %5031 = vmatpush.bf16.msra.mxu0 %v3571
      %5032 = vmatpush.bf16.msra.mxu0 %v3565
      %5033 = vmatpush.bf16.msra.mxu0 %v3559
      %5034 = vmatpush.bf16.msra.mxu0 %v3553
      %5035 = vmatpush.bf16.msra.mxu0 %v3547
      %5036 = vmatpush.bf16.msra.mxu0 %v3541
      %5037 = vmatpush.bf16.msra.mxu0 %v3535
      %5038 = vmatpush.bf16.msra.mxu0 %v3529
      %5039 = vmatmul.bf16.gmra.mxu0 %v690
      %v5040 = vpop.f32.mrf.mxu0
      %v5041 = vadd.f32 %v5028, %v5040
      %v5042 = vpop.f32.mrf.mxu0
      %5043 = vdwg.mxu0
      %5044 = vmatpush.bf16.msra.mxu0 %v3619
      %5045 = vmatpush.bf16.msra.mxu0 %v3613
      %5046 = vmatpush.bf16.msra.mxu0 %v3607
      %5047 = vmatpush.bf16.msra.mxu0 %v3601
      %5048 = vmatpush.bf16.msra.mxu0 %v3595
      %5049 = vmatpush.bf16.msra.mxu0 %v3589
      %5050 = vmatpush.bf16.msra.mxu0 %v3583
      %5051 = vmatpush.bf16.msra.mxu0 %v3577
      %5052 = vmatmul.bf16.gmra.mxu0 %v691
      %v5053 = vpop.f32.mrf.mxu0
      %v5054 = vadd.f32 %v5041, %v5053
      %v5055 = vpop.f32.mrf.mxu0
      %5056 = vdwg.mxu0
      %5057 = vmatpush.bf16.msra.mxu0 0
      %5058 = vmatpush.bf16.msra.mxu0 0
      %5059 = vmatpush.bf16.msra.mxu0 0
      %5060 = vmatpush.bf16.msra.mxu0 0
      %5061 = vmatpush.bf16.msra.mxu0 0
      %5062 = vmatpush.bf16.msra.mxu0 0
      %5063 = vmatpush.bf16.msra.mxu0 %v3631
      %5064 = vmatpush.bf16.msra.mxu0 %v3625
      %5065 = vmatmul.bf16.gmra.mxu0 %v4223
      %v5066 = vpop.f32.mrf.mxu0
      %v5067 = vadd.f32 %v5054, %v5066
      %v5068 = vpop.f32.mrf.mxu0
      %5069 = vdwg.mxu0
      %5070 = vmatpush.bf16.msra.mxu0 %v3092
      %5071 = vmatpush.bf16.msra.mxu0 %v3086
      %5072 = vmatpush.bf16.msra.mxu0 %v3080
      %5073 = vmatpush.bf16.msra.mxu0 %v3074
      %5074 = vmatpush.bf16.msra.mxu0 %v3068
      %5075 = vmatpush.bf16.msra.mxu0 %v3062
      %5076 = vmatpush.bf16.msra.mxu0 %v3056
      %5077 = vmatpush.bf16.msra.mxu0 %v3050
      %5078 = vmatmul.bf16.gmra.mxu0 %v680
      %v5079 = vpop.f32.mrf.mxu0
      %v5080 = vadd.f32 0.0, %v5079
      %v5081 = vpop.f32.mrf.mxu0
      %5082 = vdwg.mxu0
      %5083 = vmatpush.bf16.msra.mxu0 %v3140
      %5084 = vmatpush.bf16.msra.mxu0 %v3134
      %5085 = vmatpush.bf16.msra.mxu0 %v3128
      %5086 = vmatpush.bf16.msra.mxu0 %v3122
      %5087 = vmatpush.bf16.msra.mxu0 %v3116
      %5088 = vmatpush.bf16.msra.mxu0 %v3110
      %5089 = vmatpush.bf16.msra.mxu0 %v3104
      %5090 = vmatpush.bf16.msra.mxu0 %v3098
      %5091 = vmatmul.bf16.gmra.mxu0 %v681
      %v5092 = vpop.f32.mrf.mxu0
      %v5093 = vadd.f32 %v5080, %v5092
      %v5094 = vpop.f32.mrf.mxu0
      %5095 = vdwg.mxu0
      %5096 = vmatpush.bf16.msra.mxu0 %v3188
      %5097 = vmatpush.bf16.msra.mxu0 %v3182
      %5098 = vmatpush.bf16.msra.mxu0 %v3176
      %5099 = vmatpush.bf16.msra.mxu0 %v3170
      %5100 = vmatpush.bf16.msra.mxu0 %v3164
      %5101 = vmatpush.bf16.msra.mxu0 %v3158
      %5102 = vmatpush.bf16.msra.mxu0 %v3152
      %5103 = vmatpush.bf16.msra.mxu0 %v3146
      %5104 = vmatmul.bf16.gmra.mxu0 %v682
      %v5105 = vpop.f32.mrf.mxu0
      %v5106 = vadd.f32 %v5093, %v5105
      %v5107 = vpop.f32.mrf.mxu0
      %5108 = vdwg.mxu0
      %5109 = vmatpush.bf16.msra.mxu0 %v3236
      %5110 = vmatpush.bf16.msra.mxu0 %v3230
      %5111 = vmatpush.bf16.msra.mxu0 %v3224
      %5112 = vmatpush.bf16.msra.mxu0 %v3218
      %5113 = vmatpush.bf16.msra.mxu0 %v3212
      %5114 = vmatpush.bf16.msra.mxu0 %v3206
      %5115 = vmatpush.bf16.msra.mxu0 %v3200
      %5116 = vmatpush.bf16.msra.mxu0 %v3194
      %5117 = vmatmul.bf16.gmra.mxu0 %v683
      %v5118 = vpop.f32.mrf.mxu0
      %v5119 = vadd.f32 %v5106, %v5118
      %v5120 = vpop.f32.mrf.mxu0
      %5121 = vdwg.mxu0
      %5122 = vmatpush.bf16.msra.mxu0 %v3284
      %5123 = vmatpush.bf16.msra.mxu0 %v3278
      %5124 = vmatpush.bf16.msra.mxu0 %v3272
      %5125 = vmatpush.bf16.msra.mxu0 %v3266
      %5126 = vmatpush.bf16.msra.mxu0 %v3260
      %5127 = vmatpush.bf16.msra.mxu0 %v3254
      %5128 = vmatpush.bf16.msra.mxu0 %v3248
      %5129 = vmatpush.bf16.msra.mxu0 %v3242
      %5130 = vmatmul.bf16.gmra.mxu0 %v684
      %v5131 = vpop.f32.mrf.mxu0
      %v5132 = vadd.f32 %v5119, %v5131
      %v5133 = vpop.f32.mrf.mxu0
      %5134 = vdwg.mxu0
      %5135 = vmatpush.bf16.msra.mxu0 %v3332
      %5136 = vmatpush.bf16.msra.mxu0 %v3326
      %5137 = vmatpush.bf16.msra.mxu0 %v3320
      %5138 = vmatpush.bf16.msra.mxu0 %v3314
      %5139 = vmatpush.bf16.msra.mxu0 %v3308
      %5140 = vmatpush.bf16.msra.mxu0 %v3302
      %5141 = vmatpush.bf16.msra.mxu0 %v3296
      %5142 = vmatpush.bf16.msra.mxu0 %v3290
      %5143 = vmatmul.bf16.gmra.mxu0 %v685
      %v5144 = vpop.f32.mrf.mxu0
      %v5145 = vadd.f32 %v5132, %v5144
      %v5146 = vpop.f32.mrf.mxu0
      %5147 = vdwg.mxu0
      %5148 = vmatpush.bf16.msra.mxu0 %v3380
      %5149 = vmatpush.bf16.msra.mxu0 %v3374
      %5150 = vmatpush.bf16.msra.mxu0 %v3368
      %5151 = vmatpush.bf16.msra.mxu0 %v3362
      %5152 = vmatpush.bf16.msra.mxu0 %v3356
      %5153 = vmatpush.bf16.msra.mxu0 %v3350
      %5154 = vmatpush.bf16.msra.mxu0 %v3344
      %5155 = vmatpush.bf16.msra.mxu0 %v3338
      %5156 = vmatmul.bf16.gmra.mxu0 %v686
      %v5157 = vpop.f32.mrf.mxu0
      %v5158 = vadd.f32 %v5145, %v5157
      %v5159 = vpop.f32.mrf.mxu0
      %5160 = vdwg.mxu0
      %5161 = vmatpush.bf16.msra.mxu0 %v3428
      %5162 = vmatpush.bf16.msra.mxu0 %v3422
      %5163 = vmatpush.bf16.msra.mxu0 %v3416
      %5164 = vmatpush.bf16.msra.mxu0 %v3410
      %5165 = vmatpush.bf16.msra.mxu0 %v3404
      %5166 = vmatpush.bf16.msra.mxu0 %v3398
      %5167 = vmatpush.bf16.msra.mxu0 %v3392
      %5168 = vmatpush.bf16.msra.mxu0 %v3386
      %5169 = vmatmul.bf16.gmra.mxu0 %v687
      %v5170 = vpop.f32.mrf.mxu0
      %v5171 = vadd.f32 %v5158, %v5170
      %v5172 = vpop.f32.mrf.mxu0
      %5173 = vdwg.mxu0
      %5174 = vmatpush.bf16.msra.mxu0 %v3476
      %5175 = vmatpush.bf16.msra.mxu0 %v3470
      %5176 = vmatpush.bf16.msra.mxu0 %v3464
      %5177 = vmatpush.bf16.msra.mxu0 %v3458
      %5178 = vmatpush.bf16.msra.mxu0 %v3452
      %5179 = vmatpush.bf16.msra.mxu0 %v3446
      %5180 = vmatpush.bf16.msra.mxu0 %v3440
      %5181 = vmatpush.bf16.msra.mxu0 %v3434
      %5182 = vmatmul.bf16.gmra.mxu0 %v688
      %v5183 = vpop.f32.mrf.mxu0
      %v5184 = vadd.f32 %v5171, %v5183
      %v5185 = vpop.f32.mrf.mxu0
      %5186 = vdwg.mxu0
      %5187 = vmatpush.bf16.msra.mxu0 %v3524
      %5188 = vmatpush.bf16.msra.mxu0 %v3518
      %5189 = vmatpush.bf16.msra.mxu0 %v3512
      %5190 = vmatpush.bf16.msra.mxu0 %v3506
      %5191 = vmatpush.bf16.msra.mxu0 %v3500
      %5192 = vmatpush.bf16.msra.mxu0 %v3494
      %5193 = vmatpush.bf16.msra.mxu0 %v3488
      %5194 = vmatpush.bf16.msra.mxu0 %v3482
      %5195 = vmatmul.bf16.gmra.mxu0 %v689
      %v5196 = vpop.f32.mrf.mxu0
      %v5197 = vadd.f32 %v5184, %v5196
      %v5198 = vpop.f32.mrf.mxu0
      %5199 = vdwg.mxu0
      %5200 = vmatpush.bf16.msra.mxu0 %v3572
      %5201 = vmatpush.bf16.msra.mxu0 %v3566
      %5202 = vmatpush.bf16.msra.mxu0 %v3560
      %5203 = vmatpush.bf16.msra.mxu0 %v3554
      %5204 = vmatpush.bf16.msra.mxu0 %v3548
      %5205 = vmatpush.bf16.msra.mxu0 %v3542
      %5206 = vmatpush.bf16.msra.mxu0 %v3536
      %5207 = vmatpush.bf16.msra.mxu0 %v3530
      %5208 = vmatmul.bf16.gmra.mxu0 %v690
      %v5209 = vpop.f32.mrf.mxu0
      %v5210 = vadd.f32 %v5197, %v5209
      %v5211 = vpop.f32.mrf.mxu0
      %5212 = vdwg.mxu0
      %5213 = vmatpush.bf16.msra.mxu0 %v3620
      %5214 = vmatpush.bf16.msra.mxu0 %v3614
      %5215 = vmatpush.bf16.msra.mxu0 %v3608
      %5216 = vmatpush.bf16.msra.mxu0 %v3602
      %5217 = vmatpush.bf16.msra.mxu0 %v3596
      %5218 = vmatpush.bf16.msra.mxu0 %v3590
      %5219 = vmatpush.bf16.msra.mxu0 %v3584
      %5220 = vmatpush.bf16.msra.mxu0 %v3578
      %5221 = vmatmul.bf16.gmra.mxu0 %v691
      %v5222 = vpop.f32.mrf.mxu0
      %v5223 = vadd.f32 %v5210, %v5222
      %v5224 = vpop.f32.mrf.mxu0
      %5225 = vdwg.mxu0
      %5226 = vmatpush.bf16.msra.mxu0 0
      %5227 = vmatpush.bf16.msra.mxu0 0
      %5228 = vmatpush.bf16.msra.mxu0 0
      %5229 = vmatpush.bf16.msra.mxu0 0
      %5230 = vmatpush.bf16.msra.mxu0 0
      %5231 = vmatpush.bf16.msra.mxu0 0
      %5232 = vmatpush.bf16.msra.mxu0 %v3632
      %5233 = vmatpush.bf16.msra.mxu0 %v3626
      %5234 = vmatmul.bf16.gmra.mxu0 %v4223
      %v5235 = vpop.f32.mrf.mxu0
      %v5236 = vadd.f32 %v5223, %v5235
      %v5237 = vpop.f32.mrf.mxu0
      %5238 = vdwg.mxu0
      %v5239 = vpack.c.bf16 %v4560, %v4391
      %v5240 = vpack.c.bf16 %v4898, %v4729
      %v5241 = vpack.c.bf16 %v5236, %v5067
      %v5242 = vld [vmem:[%s3] sm:$0xf]
      %v5243 = vld [vmem:[%s3 + $0x4] sm:$0xf]
      %s5244 = scalar_lea.vmem %s3, 8
      %v5245 = vld [vmem:[%s5244] sm:$0xf]
      %v5246 = vld [vmem:[%s5244 + $0x4] sm:$0xf]
      %v5249 = vunpack.c.l.b16 %v5245
      %v5250 = vunpack.c.l.b16 %v5246
      %v5251 = vpack.c.b16 %v5250, %v5249
      %v5253 = vunpack.c.l.b16 %v5239
      %v5254 = vunpack.c.h.b16 %v5239
      %v5255 = vpack.c.b16 %v5253, %v5253
      %v5256 = vpack.c.b16 %v5254, %v5254
      %5257 = vrot.lane.b32.xlu0 %v5255, 56
      %v5258 = vpop.permute.xlu0 %5257
      %5259 = vrot.lane.b32.xlu0 %v5256, 56
      %v5260 = vpop.permute.xlu0 %5259
      %vm5261 = vcmask 457728
      %v5262 = vsel %vm5261, %v5258, %v5260
      %vm5263 = vcmask 64512
      %v5265 = vsel %vm5263, %v5251, 0
      %vm5267 = vcmask 1043456
      %v5269 = vsel %vm5267, %v5262, 0
      %5271 = vmatpush.bf16.msra.mxu0 0
      %5272 = vmatpush.bf16.msra.mxu0 0
      %5273 = vmatpush.bf16.msra.mxu0 0
      %5274 = vmatpush.bf16.msra.mxu0 0
      %5275 = vmatpush.bf16.msra.mxu0 0
      %5276 = vmatpush.bf16.msra.mxu0 0
      %5277 = vmatpush.bf16.msra.mxu0 0
      %5278 = vmatpush.bf16.msra.mxu0 %v5269
      %5279 = vmatmul.bf16.gmra.mxu0 %v5265
      %v5280 = vpop.f32.mrf.mxu0
      %v5281 = vadd.f32 0.0, %v5280
      %v5282 = vpop.f32.mrf.mxu0
      %v5283 = vadd.f32 0.0, %v5282
      %5284 = vdwg.mxu0
      %s5285 = scalar_lea.vmem %s3, 16
      %v5286 = vld [vmem:[%s5285] sm:$0xf]
      %v5287 = vld [vmem:[%s5285 + $0x4] sm:$0xf]
      %s5288 = scalar_lea.vmem %s3, 24
      %v5289 = vld [vmem:[%s5288] sm:$0xf]
      %v5290 = vld [vmem:[%s5288 + $0x4] sm:$0xf]
      %v5293 = vunpack.c.l.b16 %v5289
      %v5294 = vunpack.c.l.b16 %v5290
      %v5295 = vpack.c.b16 %v5294, %v5293
      %v5297 = vunpack.c.l.b16 %v5240
      %v5298 = vpack.c.b16 %v5297, %v5297
      %5299 = vrot.lane.b32.xlu0 %v5256, 40
      %v5300 = vpop.permute.xlu0 %5299
      %5301 = vrot.lane.b32.xlu0 %v5298, 40
      %v5302 = vpop.permute.xlu0 %5301
      %vm5303 = vcmask 326656
      %v5304 = vsel %vm5303, %v5300, %v5302
      %v5306 = vsel %vm5263, %v5295, 0
      %v5309 = vsel %vm5267, %v5304, 0
      %5311 = vmatpush.bf16.msra.mxu0 0
      %5312 = vmatpush.bf16.msra.mxu0 0
      %5313 = vmatpush.bf16.msra.mxu0 0
      %5314 = vmatpush.bf16.msra.mxu0 0
      %5315 = vmatpush.bf16.msra.mxu0 0
      %5316 = vmatpush.bf16.msra.mxu0 0
      %5317 = vmatpush.bf16.msra.mxu0 0
      %5318 = vmatpush.bf16.msra.mxu0 %v5309
      %5319 = vmatmul.bf16.gmra.mxu0 %v5306
      %v5320 = vpop.f32.mrf.mxu0
      %v5321 = vadd.f32 0.0, %v5320
      %v5322 = vpop.f32.mrf.mxu0
      %v5323 = vadd.f32 0.0, %v5322
      %5324 = vdwg.mxu0
      %s5325 = scalar_lea.vmem %s3, 32
      %v5326 = vld [vmem:[%s5325] sm:$0xf]
      %v5327 = vld [vmem:[%s5325 + $0x4] sm:$0xf]
      %s5328 = scalar_lea.vmem %s3, 40
      %v5329 = vld [vmem:[%s5328] sm:$0xf]
      %v5330 = vld [vmem:[%s5328 + $0x4] sm:$0xf]
      %v5333 = vunpack.c.l.b16 %v5329
      %v5334 = vunpack.c.l.b16 %v5330
      %v5335 = vpack.c.b16 %v5334, %v5333
      %v5336 = vunpack.c.h.b16 %v5240
      %v5337 = vpack.c.b16 %v5336, %v5336
      %5338 = vrot.lane.b32.xlu0 %v5298, 24
      %v5339 = vpop.permute.xlu0 %5338
      %5340 = vrot.lane.b32.xlu0 %v5337, 24
      %v5341 = vpop.permute.xlu0 %5340
      %vm5342 = vcmask 195584
      %v5343 = vsel %vm5342, %v5339, %v5341
      %v5345 = vsel %vm5263, %v5335, 0
      %v5348 = vsel %vm5267, %v5343, 0
      %5350 = vmatpush.bf16.msra.mxu0 0
      %5351 = vmatpush.bf16.msra.mxu0 0
      %5352 = vmatpush.bf16.msra.mxu0 0
      %5353 = vmatpush.bf16.msra.mxu0 0
      %5354 = vmatpush.bf16.msra.mxu0 0
      %5355 = vmatpush.bf16.msra.mxu0 0
      %5356 = vmatpush.bf16.msra.mxu0 0
      %5357 = vmatpush.bf16.msra.mxu0 %v5348
      %5358 = vmatmul.bf16.gmra.mxu0 %v5345
      %v5359 = vpop.f32.mrf.mxu0
      %v5360 = vadd.f32 0.0, %v5359
      %v5361 = vpop.f32.mrf.mxu0
      %v5362 = vadd.f32 0.0, %v5361
      %5363 = vdwg.mxu0
      %s5364 = scalar_lea.vmem %s3, 48
      %v5365 = vld [vmem:[%s5364] sm:$0xf]
      %v5366 = vld [vmem:[%s5364 + $0x4] sm:$0xf]
      %s5367 = scalar_lea.vmem %s3, 56
      %v5368 = vld [vmem:[%s5367] sm:$0xf]
      %v5369 = vld [vmem:[%s5367 + $0x4] sm:$0xf]
      %v5372 = vunpack.c.l.b16 %v5368
      %v5373 = vunpack.c.l.b16 %v5369
      %v5374 = vpack.c.b16 %v5373, %v5372
      %v5376 = vunpack.c.l.b16 %v5241
      %v5377 = vpack.c.b16 %v5376, %v5376
      %5378 = vrot.lane.b32.xlu0 %v5337, 8
      %v5379 = vpop.permute.xlu0 %5378
      %5380 = vrot.lane.b32.xlu0 %v5377, 8
      %v5381 = vpop.permute.xlu0 %5380
      %vm5382 = vcmask 64512
      %v5383 = vsel %vm5382, %v5379, %v5381
      %v5385 = vsel %vm5263, %v5374, 0
      %v5388 = vsel %vm5267, %v5383, 0
      %5390 = vmatpush.bf16.msra.mxu0 0
      %5391 = vmatpush.bf16.msra.mxu0 0
      %5392 = vmatpush.bf16.msra.mxu0 0
      %5393 = vmatpush.bf16.msra.mxu0 0
      %5394 = vmatpush.bf16.msra.mxu0 0
      %5395 = vmatpush.bf16.msra.mxu0 0
      %5396 = vmatpush.bf16.msra.mxu0 0
      %5397 = vmatpush.bf16.msra.mxu0 %v5388
      %5398 = vmatmul.bf16.gmra.mxu0 %v5385
      %v5399 = vpop.f32.mrf.mxu0
      %v5400 = vadd.f32 0.0, %v5399
      %v5401 = vpop.f32.mrf.mxu0
      %v5402 = vadd.f32 0.0, %v5401
      %5403 = vdwg.mxu0
      %s5404 = scalar_lea.vmem %s3, 64
      %v5405 = vld [vmem:[%s5404] sm:$0xf]
      %v5406 = vld [vmem:[%s5404 + $0x4] sm:$0xf]
      %v5409 = vunpack.c.l.b16 %v5405
      %v5410 = vunpack.c.l.b16 %v5406
      %v5411 = vpack.c.b16 %v5410, %v5409
      %v5412 = vunpack.c.h.b16 %v5241
      %v5413 = vpack.c.b16 %v5412, %v5412
      %5414 = vrot.lane.b32.xlu0 %v5377, 64
      %v5415 = vpop.permute.xlu0 %5414
      %5416 = vrot.lane.b32.xlu0 %v5413, 64
      %v5417 = vpop.permute.xlu0 %5416
      %vm5418 = vcmask 523264
      %v5419 = vsel %vm5418, %v5415, %v5417
      %v5421 = vsel %vm5263, %v5411, 0
      %v5424 = vsel %vm5267, %v5419, 0
      %5426 = vmatpush.bf16.msra.mxu0 0
      %5427 = vmatpush.bf16.msra.mxu0 0
      %5428 = vmatpush.bf16.msra.mxu0 0
      %5429 = vmatpush.bf16.msra.mxu0 0
      %5430 = vmatpush.bf16.msra.mxu0 0
      %5431 = vmatpush.bf16.msra.mxu0 0
      %5432 = vmatpush.bf16.msra.mxu0 0
      %5433 = vmatpush.bf16.msra.mxu0 %v5424
      %5434 = vmatmul.bf16.gmra.mxu0 %v5421
      %v5435 = vpop.f32.mrf.mxu0
      %v5436 = vadd.f32 0.0, %v5435
      %v5437 = vpop.f32.mrf.mxu0
      %v5438 = vadd.f32 0.0, %v5437
      %5439 = vdwg.mxu0
      %v5442 = vunpack.c.l.b16 %v5242
      %v5443 = vunpack.c.l.b16 %v5243
      %v5444 = vpack.c.b16 %v5443, %v5442
      %v5446 = vsel %vm5263, %v5444, 0
      %v5449 = vsel %vm5267, %v5239, 0
      %5451 = vmatpush.bf16.msra.mxu0 0
      %5452 = vmatpush.bf16.msra.mxu0 0
      %5453 = vmatpush.bf16.msra.mxu0 0
      %5454 = vmatpush.bf16.msra.mxu0 0
      %5455 = vmatpush.bf16.msra.mxu0 0
      %5456 = vmatpush.bf16.msra.mxu0 0
      %5457 = vmatpush.bf16.msra.mxu0 0
      %5458 = vmatpush.bf16.msra.mxu0 %v5449
      %5459 = vmatmul.bf16.gmra.mxu0 %v5446
      %v5460 = vpop.f32.mrf.mxu0
      %v5461 = vadd.f32 %v5281, %v5460
      %v5462 = vpop.f32.mrf.mxu0
      %v5463 = vadd.f32 %v5283, %v5462
      %5464 = vdwg.mxu0
      %v5467 = vunpack.c.l.b16 %v5286
      %v5468 = vunpack.c.l.b16 %v5287
      %v5469 = vpack.c.b16 %v5468, %v5467
      %5470 = vrot.lane.b32.xlu0 %v5256, 112
      %v5471 = vpop.permute.xlu0 %5470
      %v5473 = vsel %vm5263, %v5469, 0
      %v5476 = vsel %vm5267, %v5471, 0
      %5478 = vmatpush.bf16.msra.mxu0 0
      %5479 = vmatpush.bf16.msra.mxu0 0
      %5480 = vmatpush.bf16.msra.mxu0 0
      %5481 = vmatpush.bf16.msra.mxu0 0
      %5482 = vmatpush.bf16.msra.mxu0 0
      %5483 = vmatpush.bf16.msra.mxu0 0
      %5484 = vmatpush.bf16.msra.mxu0 0
      %5485 = vmatpush.bf16.msra.mxu0 %v5476
      %5486 = vmatmul.bf16.gmra.mxu0 %v5473
      %v5487 = vpop.f32.mrf.mxu0
      %v5488 = vadd.f32 %v5321, %v5487
      %v5489 = vpop.f32.mrf.mxu0
      %v5490 = vadd.f32 %v5323, %v5489
      %5491 = vdwg.mxu0
      %v5494 = vunpack.c.l.b16 %v5326
      %v5495 = vunpack.c.l.b16 %v5327
      %v5496 = vpack.c.b16 %v5495, %v5494
      %5497 = vrot.lane.b32.xlu0 %v5298, 96
      %v5498 = vpop.permute.xlu0 %5497
      %v5500 = vsel %vm5263, %v5496, 0
      %v5503 = vsel %vm5267, %v5498, 0
      %5505 = vmatpush.bf16.msra.mxu0 0
      %5506 = vmatpush.bf16.msra.mxu0 0
      %5507 = vmatpush.bf16.msra.mxu0 0
      %5508 = vmatpush.bf16.msra.mxu0 0
      %5509 = vmatpush.bf16.msra.mxu0 0
      %5510 = vmatpush.bf16.msra.mxu0 0
      %5511 = vmatpush.bf16.msra.mxu0 0
      %5512 = vmatpush.bf16.msra.mxu0 %v5503
      %5513 = vmatmul.bf16.gmra.mxu0 %v5500
      %v5514 = vpop.f32.mrf.mxu0
      %v5515 = vadd.f32 %v5360, %v5514
      %v5516 = vpop.f32.mrf.mxu0
      %v5517 = vadd.f32 %v5362, %v5516
      %5518 = vdwg.mxu0
      %v5521 = vunpack.c.l.b16 %v5365
      %v5522 = vunpack.c.l.b16 %v5366
      %v5523 = vpack.c.b16 %v5522, %v5521
      %5524 = vrot.lane.b32.xlu0 %v5337, 80
      %v5525 = vpop.permute.xlu0 %5524
      %v5527 = vsel %vm5263, %v5523, 0
      %v5530 = vsel %vm5267, %v5525, 0
      %5532 = vmatpush.bf16.msra.mxu0 0
      %5533 = vmatpush.bf16.msra.mxu0 0
      %5534 = vmatpush.bf16.msra.mxu0 0
      %5535 = vmatpush.bf16.msra.mxu0 0
      %5536 = vmatpush.bf16.msra.mxu0 0
      %5537 = vmatpush.bf16.msra.mxu0 0
      %5538 = vmatpush.bf16.msra.mxu0 0
      %5539 = vmatpush.bf16.msra.mxu0 %v5530
      %5540 = vmatmul.bf16.gmra.mxu0 %v5527
      %v5541 = vpop.f32.mrf.mxu0
      %v5542 = vadd.f32 %v5400, %v5541
      %v5543 = vpop.f32.mrf.mxu0
      %v5544 = vadd.f32 %v5402, %v5543
      %5545 = vdwg.mxu0
      %v5546 = vadd.f32 %v5461, %v5488
      %v5547 = vadd.f32 %v5463, %v5490
      %v5548 = vadd.f32 %v5515, %v5542
      %v5549 = vadd.f32 %v5517, %v5544
      %v5550 = vadd.f32 %v5546, %v5548
      %v5551 = vadd.f32 %v5547, %v5549
      %v5552 = vadd.f32 %v5550, %v5436
      %v5553 = vadd.f32 %v5551, %v5438
      %v5554 = vmax.f32 %v5552, 0.0
      %v5555 = vmax.f32 %v5553, 0.0
      %v5556 = vpack.c.bf16 %v5554, %v5554
      %v5557 = vpack.c.bf16 %v5555, %v5555
      %v5558 = vld [vmem:[%s4] sm:$0xf]
      %v5559 = vld [vmem:[%s4 + $0x4] sm:$0x1]
      %s5560 = scalar_lea.vmem %s4, 8
      %v5561 = vld [vmem:[%s5560] sm:$0xf]
      %v5562 = vld [vmem:[%s5560 + $0x4] sm:$0x1]
      %v5565 = vunpack.c.l.b16 %v5561
      %v5566 = vunpack.c.l.b16 %v5562
      %v5567 = vpack.c.b16 %v5566, %v5565
      %v5570 = vunpack.c.l.b16 %v5556
      %v5571 = vunpack.c.l.b16 %v5557
      %v5572 = vpack.c.b16 %v5571, %v5570
      %5573 = vrot.lane.b32.xlu0 %v5572, 120
      %v5574 = vpop.permute.xlu0 %5573
      %vm5576 = vcmask 130048
      %v5578 = vsel %vm5576, %v5567, 0
      %5580 = vmatpush.bf16.msra.mxu0 0
      %5581 = vmatpush.bf16.msra.mxu0 0
      %5582 = vmatpush.bf16.msra.mxu0 0
      %5583 = vmatpush.bf16.msra.mxu0 0
      %5584 = vmatpush.bf16.msra.mxu0 0
      %5585 = vmatpush.bf16.msra.mxu0 0
      %5586 = vmatpush.bf16.msra.mxu0 0
      %5587 = vmatpush.bf16.msra.mxu0 %v5574
      %5588 = vmatmul.bf16.gmra.mxu0 %v5578
      %v5589 = vpop.f32.mrf.mxu0
      %v5590 = vadd.f32 0.0, %v5589
      %v5591 = vpop.f32.mrf.mxu0
      %v5592 = vadd.f32 0.0, %v5591
      %5593 = vdwg.mxu0
      %s5594 = scalar_lea.vmem %s4, 16
      %v5595 = vld [vmem:[%s5594] sm:$0xf]
      %v5596 = vld [vmem:[%s5594 + $0x4] sm:$0x1]
      %s5597 = scalar_lea.vmem %s4, 24
      %v5598 = vld [vmem:[%s5597] sm:$0xf]
      %v5599 = vld [vmem:[%s5597 + $0x4] sm:$0x1]
      %v5602 = vunpack.c.l.b16 %v5598
      %v5603 = vunpack.c.l.b16 %v5599
      %v5604 = vpack.c.b16 %v5603, %v5602
      %5605 = vrot.lane.b32.xlu0 %v5572, 104
      %v5606 = vpop.permute.xlu0 %5605
      %v5609 = vsel %vm5576, %v5604, 0
      %5611 = vmatpush.bf16.msra.mxu0 0
      %5612 = vmatpush.bf16.msra.mxu0 0
      %5613 = vmatpush.bf16.msra.mxu0 0
      %5614 = vmatpush.bf16.msra.mxu0 0
      %5615 = vmatpush.bf16.msra.mxu0 0
      %5616 = vmatpush.bf16.msra.mxu0 0
      %5617 = vmatpush.bf16.msra.mxu0 0
      %5618 = vmatpush.bf16.msra.mxu0 %v5606
      %5619 = vmatmul.bf16.gmra.mxu0 %v5609
      %v5620 = vpop.f32.mrf.mxu0
      %v5621 = vadd.f32 0.0, %v5620
      %v5622 = vpop.f32.mrf.mxu0
      %v5623 = vadd.f32 0.0, %v5622
      %5624 = vdwg.mxu0
      %s5625 = scalar_lea.vmem %s4, 32
      %v5626 = vld [vmem:[%s5625] sm:$0xf]
      %v5627 = vld [vmem:[%s5625 + $0x4] sm:$0x1]
      %s5628 = scalar_lea.vmem %s4, 40
      %v5629 = vld [vmem:[%s5628] sm:$0xf]
      %v5630 = vld [vmem:[%s5628 + $0x4] sm:$0x1]
      %v5633 = vunpack.c.l.b16 %v5629
      %v5634 = vunpack.c.l.b16 %v5630
      %v5635 = vpack.c.b16 %v5634, %v5633
      %5636 = vrot.lane.b32.xlu0 %v5572, 88
      %v5637 = vpop.permute.xlu0 %5636
      %v5640 = vsel %vm5576, %v5635, 0
      %5642 = vmatpush.bf16.msra.mxu0 0
      %5643 = vmatpush.bf16.msra.mxu0 0
      %5644 = vmatpush.bf16.msra.mxu0 0
      %5645 = vmatpush.bf16.msra.mxu0 0
      %5646 = vmatpush.bf16.msra.mxu0 0
      %5647 = vmatpush.bf16.msra.mxu0 0
      %5648 = vmatpush.bf16.msra.mxu0 0
      %5649 = vmatpush.bf16.msra.mxu0 %v5637
      %5650 = vmatmul.bf16.gmra.mxu0 %v5640
      %v5651 = vpop.f32.mrf.mxu0
      %v5652 = vadd.f32 0.0, %v5651
      %v5653 = vpop.f32.mrf.mxu0
      %v5654 = vadd.f32 0.0, %v5653
      %5655 = vdwg.mxu0
      %s5656 = scalar_lea.vmem %s4, 48
      %v5657 = vld [vmem:[%s5656] sm:$0xf]
      %v5658 = vld [vmem:[%s5656 + $0x4] sm:$0x1]
      %s5659 = scalar_lea.vmem %s4, 56
      %v5660 = vld [vmem:[%s5659] sm:$0xf]
      %v5661 = vld [vmem:[%s5659 + $0x4] sm:$0x1]
      %v5664 = vunpack.c.l.b16 %v5660
      %v5665 = vunpack.c.l.b16 %v5661
      %v5666 = vpack.c.b16 %v5665, %v5664
      %5667 = vrot.lane.b32.xlu0 %v5572, 72
      %v5668 = vpop.permute.xlu0 %5667
      %v5671 = vsel %vm5576, %v5666, 0
      %5673 = vmatpush.bf16.msra.mxu0 0
      %5674 = vmatpush.bf16.msra.mxu0 0
      %5675 = vmatpush.bf16.msra.mxu0 0
      %5676 = vmatpush.bf16.msra.mxu0 0
      %5677 = vmatpush.bf16.msra.mxu0 0
      %5678 = vmatpush.bf16.msra.mxu0 0
      %5679 = vmatpush.bf16.msra.mxu0 0
      %5680 = vmatpush.bf16.msra.mxu0 %v5668
      %5681 = vmatmul.bf16.gmra.mxu0 %v5671
      %v5682 = vpop.f32.mrf.mxu0
      %v5683 = vadd.f32 0.0, %v5682
      %v5684 = vpop.f32.mrf.mxu0
      %v5685 = vadd.f32 0.0, %v5684
      %5686 = vdwg.mxu0
      %s5687 = scalar_lea.vmem %s4, 64
      %v5688 = vld [vmem:[%s5687] sm:$0xf]
      %v5689 = vld [vmem:[%s5687 + $0x4] sm:$0x1]
      %v5692 = vunpack.c.l.b16 %v5688
      %v5693 = vunpack.c.l.b16 %v5689
      %v5694 = vpack.c.b16 %v5693, %v5692
      %5695 = vrot.lane.b32.xlu0 %v5572, 64
      %v5696 = vpop.permute.xlu0 %5695
      %v5699 = vsel %vm5576, %v5694, 0
      %5701 = vmatpush.bf16.msra.mxu0 0
      %5702 = vmatpush.bf16.msra.mxu0 0
      %5703 = vmatpush.bf16.msra.mxu0 0
      %5704 = vmatpush.bf16.msra.mxu0 0
      %5705 = vmatpush.bf16.msra.mxu0 0
      %5706 = vmatpush.bf16.msra.mxu0 0
      %5707 = vmatpush.bf16.msra.mxu0 0
      %5708 = vmatpush.bf16.msra.mxu0 %v5696
      %5709 = vmatmul.bf16.gmra.mxu0 %v5699
      %v5710 = vpop.f32.mrf.mxu0
      %v5711 = vadd.f32 0.0, %v5710
      %v5712 = vpop.f32.mrf.mxu0
      %v5713 = vadd.f32 0.0, %v5712
      %5714 = vdwg.mxu0
      %v5715 = vld [vmem:[%s5] sm:$0xff]
      %v5716 = vld [vmem:[%s5 + $0x8] sm:$0x3]
      %v5719 = vunpack.c.l.b16 %v5558
      %v5720 = vunpack.c.l.b16 %v5559
      %v5721 = vpack.c.b16 %v5720, %v5719
      %v5724 = vsel %vm5576, %v5721, 0
      %5726 = vmatpush.bf16.msra.mxu0 0
      %5727 = vmatpush.bf16.msra.mxu0 0
      %5728 = vmatpush.bf16.msra.mxu0 0
      %5729 = vmatpush.bf16.msra.mxu0 0
      %5730 = vmatpush.bf16.msra.mxu0 0
      %5731 = vmatpush.bf16.msra.mxu0 0
      %5732 = vmatpush.bf16.msra.mxu0 0
      %5733 = vmatpush.bf16.msra.mxu0 %v5572
      %5734 = vmatmul.bf16.gmra.mxu0 %v5724
      %v5735 = vpop.f32.mrf.mxu0
      %v5736 = vadd.f32 %v5590, %v5735
      %v5737 = vpop.f32.mrf.mxu0
      %v5738 = vadd.f32 %v5592, %v5737
      %5739 = vdwg.mxu0
      %v5742 = vunpack.c.l.b16 %v5595
      %v5743 = vunpack.c.l.b16 %v5596
      %v5744 = vpack.c.b16 %v5743, %v5742
      %5745 = vrot.lane.b32.xlu0 %v5572, 112
      %v5746 = vpop.permute.xlu0 %5745
      %v5749 = vsel %vm5576, %v5744, 0
      %5751 = vmatpush.bf16.msra.mxu0 0
      %5752 = vmatpush.bf16.msra.mxu0 0
      %5753 = vmatpush.bf16.msra.mxu0 0
      %5754 = vmatpush.bf16.msra.mxu0 0
      %5755 = vmatpush.bf16.msra.mxu0 0
      %5756 = vmatpush.bf16.msra.mxu0 0
      %5757 = vmatpush.bf16.msra.mxu0 0
      %5758 = vmatpush.bf16.msra.mxu0 %v5746
      %5759 = vmatmul.bf16.gmra.mxu0 %v5749
      %v5760 = vpop.f32.mrf.mxu0
      %v5761 = vadd.f32 %v5621, %v5760
      %v5762 = vpop.f32.mrf.mxu0
      %v5763 = vadd.f32 %v5623, %v5762
      %5764 = vdwg.mxu0
      %v5767 = vunpack.c.l.b16 %v5626
      %v5768 = vunpack.c.l.b16 %v5627
      %v5769 = vpack.c.b16 %v5768, %v5767
      %5770 = vrot.lane.b32.xlu0 %v5572, 96
      %v5771 = vpop.permute.xlu0 %5770
      %v5774 = vsel %vm5576, %v5769, 0
      %5776 = vmatpush.bf16.msra.mxu0 0
      %5777 = vmatpush.bf16.msra.mxu0 0
      %5778 = vmatpush.bf16.msra.mxu0 0
      %5779 = vmatpush.bf16.msra.mxu0 0
      %5780 = vmatpush.bf16.msra.mxu0 0
      %5781 = vmatpush.bf16.msra.mxu0 0
      %5782 = vmatpush.bf16.msra.mxu0 0
      %5783 = vmatpush.bf16.msra.mxu0 %v5771
      %5784 = vmatmul.bf16.gmra.mxu0 %v5774
      %v5785 = vpop.f32.mrf.mxu0
      %v5786 = vadd.f32 %v5652, %v5785
      %v5787 = vpop.f32.mrf.mxu0
      %v5788 = vadd.f32 %v5654, %v5787
      %5789 = vdwg.mxu0
      %v5792 = vunpack.c.l.b16 %v5657
      %v5793 = vunpack.c.l.b16 %v5658
      %v5794 = vpack.c.b16 %v5793, %v5792
      %5795 = vrot.lane.b32.xlu0 %v5572, 80
      %v5796 = vpop.permute.xlu0 %5795
      %v5799 = vsel %vm5576, %v5794, 0
      %5801 = vmatpush.bf16.msra.mxu0 0
      %5802 = vmatpush.bf16.msra.mxu0 0
      %5803 = vmatpush.bf16.msra.mxu0 0
      %5804 = vmatpush.bf16.msra.mxu0 0
      %5805 = vmatpush.bf16.msra.mxu0 0
      %5806 = vmatpush.bf16.msra.mxu0 0
      %5807 = vmatpush.bf16.msra.mxu0 0
      %5808 = vmatpush.bf16.msra.mxu0 %v5796
      %5809 = vmatmul.bf16.gmra.mxu0 %v5799
      %v5810 = vpop.f32.mrf.mxu0
      %v5811 = vadd.f32 %v5683, %v5810
      %v5812 = vpop.f32.mrf.mxu0
      %v5813 = vadd.f32 %v5685, %v5812
      %5814 = vdwg.mxu0
      %v5815 = vadd.f32 %v5736, %v5761
      %v5816 = vadd.f32 %v5738, %v5763
      %v5817 = vadd.f32 %v5786, %v5811
      %v5818 = vadd.f32 %v5788, %v5813
      %v5819 = vadd.f32 %v5815, %v5817
      %v5820 = vadd.f32 %v5816, %v5818
      %v5821 = vadd.f32 %v5819, %v5711
      %v5822 = vadd.f32 %v5820, %v5713
      %5824 = vset.pattern.permute.xlu0 0
      %5825 = vperm.xlu0 %5824, %v5715
      %v5826 = vpop.permute.xlu0 %5825
      %5829 = vset.pattern.permute.xlu0 0
      %5830 = vperm.xlu0 %5829, %v5716
      %v5831 = vpop.permute.xlu0 %5830
      %v5833 = vadd.f32 %v5826, %v5821
      %v5834 = vadd.f32 %v5831, %v5822
      %5835 = vst.msk [vmem:[%s251] sm:$0xff] %vm5263, %v5833
      %vm5836 = vcmask 58368
      %5837 = vst.msk [vmem:[%s251 + $0x8] sm:$0x3] %vm5836, %v5834
      %p5838 = scmp.lt.s32.totalorder %s17, 3
      %s5839 = scalar_select %p5838, %s17, 3
      %s5840 = smul.addr %s5839, 2
      %s5841 = smul.addr %s5840, 8
      %s5842 = scalar_lea.vmem %s6, %s5841
      // Predicated region
      $region45: #{tpu_custom_call.1} parent=43 // pred_check
        %p5843 = pneg %p166
      $region46: #{tpu_custom_call.1} parent=43 // pred_check_branch
        %5845 = sbr.rel (%p5843) target = $region48
      $region47: #{tpu_custom_call.1} parent=43 // pred_region
        _
      $region48: #{tpu_custom_call.1} parent=43 // pred_fallthru
        _
    $region44: #{tpu_custom_call.1} parent=5 // pred_fallthru
      _
    %p5846 = scmp.le.s32.totalorder 2, %s12
    // Predicated region
    $region49: #{tpu_custom_call.1} parent=5 // pred_check
      %p5847 = pneg %p5846
    $region50: #{tpu_custom_call.1} parent=5 // pred_check_branch
      %5849 = sbr.rel (%p5847) target = $region52
    $region51: #{tpu_custom_call.1} parent=5 // pred_region
      %s5850 = ssub.s32 %s12, 2
      // Predicated region
      $region53: #{tpu_custom_call.1} parent=51 // pred_check
        %p5851 = pneg %p172
      $region54: #{tpu_custom_call.1} parent=51 // pred_check_branch
        %5853 = sbr.rel (%p5851) target = $region56
      $region55: #{tpu_custom_call.1} parent=51 // pred_region
        %p5854 = scmp.lt.s32.totalorder %s18, 3
        %s5855 = scalar_select %p5854, %s18, 3
        %s5856 = smul.addr %s5855, 2
        %s5857 = smul.addr %s5856, 8
        %s5858 = scalar_lea.vmem %s6, %s5857
      $region56: #{tpu_custom_call.1} parent=51 // pred_fallthru
        _
    $region52: #{tpu_custom_call.1} parent=5 // pred_fallthru
      _
  $region6: #{tpu_custom_call.1} parent=0 // loop_footer
    %s16 = sadd.s32 1, %s12
  $region7: #{tpu_custom_call.1} parent=0 // loop_footer_branch
    %11 = sbr.rel target = $region3
  $region8: #{tpu_custom_call.1} parent=0 // loop_exit
    _

</llo_original>
